<compile_context>
chip_gen: v7x
topology: tpu7x:2x2x1
jax: 0.10.0
libtpu: 0.0.40
codegen_flags: <defaults>
</compile_context>

<pallas_src>
import functools
import math

import jax
import jax.numpy as jnp
from jax.experimental import pallas as pl
from jax.experimental.pallas import tpu as pltpu


# ---------------------------------------------------------------------------
# helpers
# ---------------------------------------------------------------------------

def _row_block(n, target=512):
    """Largest row tile <= target that divides n (prefer multiples of 8)."""
    if n <= target:
        return n
    for bn in range(target, 7, -1):
        if n % bn == 0 and bn % 8 == 0:
            return bn
    for bn in range(target, 0, -1):
        if n % bn == 0:
            return bn
    return n


_PARALLEL_1D = pltpu.CompilerParams(dimension_semantics=("parallel",))


# ---------------------------------------------------------------------------
# Pallas kernels
# ---------------------------------------------------------------------------

def linear_kernel(x_ref, w_ref, b_ref, o_ref):
    # o = x @ W + b     x:(bn,In)  W:(In,Out)  b:(1,Out)
    o_ref[...] = (
        jnp.dot(x_ref[...], w_ref[...], preferred_element_type=jnp.float32)
        + b_ref[...]
    ).astype(o_ref.dtype)


def linear(x2d, w, b, row_block=512):
    # Row-tiled projection; used for the fused QKV / Q / KV projections.
    n, k = x2d.shape
    out = w.shape[1]
    bn = _row_block(n, row_block)
    return pl.pallas_call(
        linear_kernel,
        out_shape=jax.ShapeDtypeStruct((n, out), jnp.float32),
        grid=(n // bn,),
        in_specs=[
            pl.BlockSpec((bn, k), lambda i: (i, 0)),
            pl.BlockSpec((k, out), lambda i: (0, 0)),
            pl.BlockSpec((1, out), lambda i: (0, 0)),
        ],
        out_specs=pl.BlockSpec((bn, out), lambda i: (i, 0)),
        compiler_params=_PARALLEL_1D,
    )(x2d, w, b)


def _attend(q, k, v, mask, n_heads, inv_scale, attn_out=None):
    """Per-batch multi-head attention on VMEM-resident tiles.

    q: (Lq, H)   k, v: (Lk, H)   mask: (mq, Lk) float 0/1 (mq in {1, Lq}).
    Returns ctx (Lq, H); optionally writes per-head attn weights to attn_out.
    """
    _, H = q.shape
    hd = H // n_heads
    neg = jnp.float32(-1e10)
    ctx_parts = []
    for h in range(n_heads):                      # static, small head count
        qh = q[:, h * hd:(h + 1) * hd]
        kh = k[:, h * hd:(h + 1) * hd]
        vh = v[:, h * hd:(h + 1) * hd]
        # contract last dims of q and k directly (no materialized transpose)
        e = jax.lax.dot_general(
            qh, kh, (((1,), (1,)), ((), ())),
            preferred_element_type=jnp.float32,
        ) * inv_scale
        e = jnp.where(mask == 0.0, neg, e)
        e = e - jnp.max(e, axis=-1, keepdims=True)
        p = jnp.exp(e)
        attn = p * pl.reciprocal(jnp.sum(p, axis=-1, keepdims=True), approx=True)
        if attn_out is not None:
            attn_out[0, h] = attn.astype(attn_out.dtype)
        ctx_parts.append(jnp.dot(attn, vh, preferred_element_type=jnp.float32))
    return jnp.concatenate(ctx_parts, axis=-1)


def self_attn_kernel(qkv_ref, m_ref, ctx_ref, *, n_heads, hid, inv_scale):
    # qkv: (1, L, 3H) fused projection; no attn-weights output (discarded).
    qkv = qkv_ref[0]
    q = qkv[:, :hid]
    k = qkv[:, hid:2 * hid]
    v = qkv[:, 2 * hid:]
    mask = m_ref[0, 0]
    ctx = _attend(q, k, v, mask, n_heads, inv_scale)
    ctx_ref[0] = ctx.astype(ctx_ref.dtype)


def cross_attn_kernel(q_ref, kv_ref, m_ref, ctx_ref, attn_ref, *,
                      n_heads, hid, inv_scale):
    # q: (1, Lq, H)   kv: (1, Lk, 2H) fused K|V projection.
    q = q_ref[0]
    kv = kv_ref[0]
    k = kv[:, :hid]
    v = kv[:, hid:]
    mask = m_ref[0, 0]
    ctx = _attend(q, k, v, mask, n_heads, inv_scale, attn_out=attn_ref)
    ctx_ref[0] = ctx.astype(ctx_ref.dtype)


def proj_add_ln_kernel(ctx_ref, w_ref, b_ref, res_ref, g_ref, beta_ref, o_ref):
    # o = LayerNorm(residual + ctx @ Wo + bo) * gamma + beta   (eps = 1e-5)
    y = (jnp.dot(ctx_ref[...], w_ref[...], preferred_element_type=jnp.float32)
         + b_ref[...])
    s = res_ref[...] + y
    mean = jnp.mean(s, axis=-1, keepdims=True)
    var = jnp.mean((s - mean) ** 2, axis=-1, keepdims=True)
    yn = (s - mean) * jax.lax.rsqrt(var + 1e-5)
    o_ref[...] = (yn * g_ref[...] + beta_ref[...]).astype(o_ref.dtype)


def proj_add_ln(ctx2d, w, b, res2d, gamma, beta, row_block=512):
    n, h = ctx2d.shape
    out = w.shape[1]
    bn = _row_block(n, row_block)
    return pl.pallas_call(
        proj_add_ln_kernel,
        out_shape=jax.ShapeDtypeStruct((n, out), jnp.float32),
        grid=(n // bn,),
        in_specs=[
            pl.BlockSpec((bn, h), lambda i: (i, 0)),
            pl.BlockSpec((h, out), lambda i: (0, 0)),
            pl.BlockSpec((1, out), lambda i: (0, 0)),
            pl.BlockSpec((bn, out), lambda i: (i, 0)),
            pl.BlockSpec((1, out), lambda i: (0, 0)),
            pl.BlockSpec((1, out), lambda i: (0, 0)),
        ],
        out_specs=pl.BlockSpec((bn, out), lambda i: (i, 0)),
        compiler_params=_PARALLEL_1D,
    )(ctx2d, w, b, res2d, gamma, beta)


def ffn_add_ln_kernel(x_ref, w1_ref, b1_ref, w2_ref, b2_ref, g_ref, beta_ref,
                      o_ref):
    # o = LayerNorm(x + relu(x @ W1 + b1) @ W2 + b2) * gamma + beta
    x = x_ref[...]
    h = jnp.maximum(
        jnp.dot(x, w1_ref[...], preferred_element_type=jnp.float32) + b1_ref[...],
        0.0)
    y = jnp.dot(h, w2_ref[...], preferred_element_type=jnp.float32) + b2_ref[...]
    s = x + y
    mean = jnp.mean(s, axis=-1, keepdims=True)
    var = jnp.mean((s - mean) ** 2, axis=-1, keepdims=True)
    yn = (s - mean) * jax.lax.rsqrt(var + 1e-5)
    o_ref[...] = (yn * g_ref[...] + beta_ref[...]).astype(o_ref.dtype)


def ffn_add_ln(x2d, w1, b1, w2, b2, gamma, beta, row_block=256):
    # Row-tiled; weights kept whole in VMEM (fine at these sizes).  For large
    # pf_dim, additionally tile pf as a trailing 'arbitrary' reduction axis
    # with a VMEM accumulator so the block fits v7x's 64 MiB VMEM.
    n, h = x2d.shape
    pf = w1.shape[1]
    bn = _row_block(n, row_block)
    return pl.pallas_call(
        ffn_add_ln_kernel,
        out_shape=jax.ShapeDtypeStruct((n, h), jnp.float32),
        grid=(n // bn,),
        in_specs=[
            pl.BlockSpec((bn, h), lambda i: (i, 0)),
            pl.BlockSpec((h, pf), lambda i: (0, 0)),
            pl.BlockSpec((1, pf), lambda i: (0, 0)),
            pl.BlockSpec((pf, h), lambda i: (0, 0)),
            pl.BlockSpec((1, h), lambda i: (0, 0)),
            pl.BlockSpec((1, h), lambda i: (0, 0)),
            pl.BlockSpec((1, h), lambda i: (0, 0)),
        ],
        out_specs=pl.BlockSpec((bn, h), lambda i: (i, 0)),
        compiler_params=_PARALLEL_1D,
    )(x2d, w1, b1, w2, b2, gamma, beta)


# ---------------------------------------------------------------------------
# Attention wrappers (glue in plain JAX: reshapes only, no transposes)
# ---------------------------------------------------------------------------

def self_attention(x, w_qkv, b_qkv, mask, n_heads):
    # x: (B, L, H)   mask: (B, 1, L or 1, L)
    B, L, H = x.shape
    inv_scale = 1.0 / math.sqrt(H // n_heads)
    qkv = linear(x.reshape(B * L, H), w_qkv, b_qkv).reshape(B, L, 3 * H)
    mq, Lk = mask.shape[2], mask.shape[3]
    kernel = functools.partial(
        self_attn_kernel, n_heads=n_heads, hid=H, inv_scale=inv_scale)
    ctx = pl.pallas_call(
        kernel,
        out_shape=jax.ShapeDtypeStruct((B, L, H), jnp.float32),
        grid=(B,),
        in_specs=[
            pl.BlockSpec((1, L, 3 * H), lambda b: (b, 0, 0)),
            pl.BlockSpec((1, 1, mq, Lk), lambda b: (b, 0, 0, 0)),
        ],
        out_specs=pl.BlockSpec((1, L, H), lambda b: (b, 0, 0)),
        compiler_params=_PARALLEL_1D,
    )(qkv, mask)
    return ctx


def cross_attention(x_q, memory, wq, bq, w_kv, b_kv, mask, n_heads):
    # x_q: (B, Lq, H)   memory: (B, Lk, H)   mask: (B, 1, Lq or 1, Lk)
    B, Lq, H = x_q.shape
    Lk = memory.shape[1]
    inv_scale = 1.0 / math.sqrt(H // n_heads)
    q = linear(x_q.reshape(B * Lq, H), wq, bq).reshape(B, Lq, H)
    kv = linear(memory.reshape(B * Lk, H), w_kv, b_kv).reshape(B, Lk, 2 * H)
    mq = mask.shape[2]
    kernel = functools.partial(
        cross_attn_kernel, n_heads=n_heads, hid=H, inv_scale=inv_scale)
    ctx, attn = pl.pallas_call(
        kernel,
        out_shape=(
            jax.ShapeDtypeStruct((B, Lq, H), jnp.float32),
            jax.ShapeDtypeStruct((B, n_heads, Lq, Lk), jnp.float32),
        ),
        grid=(B,),
        in_specs=[
            pl.BlockSpec((1, Lq, H), lambda b: (b, 0, 0)),
            pl.BlockSpec((1, Lk, 2 * H), lambda b: (b, 0, 0)),
            pl.BlockSpec((1, 1, mq, Lk), lambda b: (b, 0, 0, 0)),
        ],
        out_specs=[
            pl.BlockSpec((1, Lq, H), lambda b: (b, 0, 0)),
            pl.BlockSpec((1, n_heads, Lq, Lk), lambda b: (b, 0, 0, 0)),
        ],
        compiler_params=_PARALLEL_1D,
    )(q, kv, mask)
    return ctx, attn


# ---------------------------------------------------------------------------
# DecoderLayer forward
# ---------------------------------------------------------------------------

def decoder_layer(x, memory, tgt_mask, src_mask, params, n_heads):
    B, Lt, H = x.shape
    N = B * Lt

    # --- self attention -> (out-proj + add + LN) fused ---  (dropout = id)
    p_sa = params["self_attn"]
    ctx = self_attention(x, p_sa["w_qkv"], p_sa["b_qkv"], tgt_mask, n_heads)
    x2 = proj_add_ln(
        ctx.reshape(N, H), p_sa["wo"], p_sa["bo"],
        x.reshape(N, H), params["ln1_g"], params["ln1_b"],
    ).reshape(B, Lt, H)

    # --- encoder (cross) attention -> (out-proj + add + LN) fused ---
    p_ca = params["enc_attn"]
    ctx, attn = cross_attention(
        x2, memory, p_ca["wq"], p_ca["bq"], p_ca["w_kv"], p_ca["b_kv"],
        src_mask, n_heads)
    x3 = proj_add_ln(
        ctx.reshape(N, H), p_ca["wo"], p_ca["bo"],
        x2.reshape(N, H), params["ln2_g"], params["ln2_b"],
    ).reshape(B, Lt, H)

    # --- position-wise FFN + add + LN fused ---
    x4 = ffn_add_ln(
        x3.reshape(N, H),
        params["ffn_w1"], params["ffn_b1"], params["ffn_w2"], params["ffn_b2"],
        params["ln3_g"], params["ln3_b"],
    ).reshape(B, Lt, H)

    return x4, attn


# ---------------------------------------------------------------------------
# Pure-JAX reference (semantics check)
# ---------------------------------------------------------------------------

def _ref_mha(x_q, x_kv, mask, p, n_heads):
    B, Lq, H = x_q.shape
    Lk = x_kv.shape[1]
    hd = H // n_heads
    scale = jnp.sqrt(jnp.float32(hd))
    q = (x_q @ p["wq"] + p["bq"]).reshape(B, Lq, n_heads, hd).transpose(0, 2, 1, 3)
    k = (x_kv @ p["wk"] + p["bk"]).reshape(B, Lk, n_heads, hd).transpose(0, 2, 1, 3)
    v = (x_kv @ p["wv"] + p["bv"]).reshape(B, Lk, n_heads, hd).transpose(0, 2, 1, 3)
    energy = jnp.einsum("bhqd,bhkd->bhqk", q, k) / scale
    energy = jnp.where(mask == 0, -1e10, energy)
    attn = jax.nn.softmax(energy, axis=-1)
    ctx = jnp.einsum("bhqk,bhkd->bhqd", attn, v)
    ctx = ctx.transpose(0, 2, 1, 3).reshape(B, Lq, H)
    return ctx @ p["wo"] + p["bo"], attn


def _ref_ln(s, g, b):
    m = jnp.mean(s, axis=-1, keepdims=True)
    v = jnp.mean((s - m) ** 2, axis=-1, keepdims=True)
    return (s - m) / jnp.sqrt(v + 1e-5) * g + b


def _ref_decoder(x, memory, tgt_mask, src_mask, params, n_heads):
    sa, _ = _ref_mha(x, x, tgt_mask, params["self_attn"], n_heads)
    x = _ref_ln(x + sa, params["ln1_g"], params["ln1_b"])
    ca, attn = _ref_mha(x, memory, src_mask, params["enc_attn"], n_heads)
    x = _ref_ln(x + ca, params["ln2_g"], params["ln2_b"])
    ff = jnp.maximum(x @ params["ffn_w1"] + params["ffn_b1"], 0.0) @ params["ffn_w2"] \
        + params["ffn_b2"]
    x = _ref_ln(x + ff, params["ln3_g"], params["ln3_b"])
    return x, attn


# ---------------------------------------------------------------------------
# Parameter construction & main
# ---------------------------------------------------------------------------

def _mha_params(key, hid):
    ks = jax.random.split(key, 8)
    std = 0.02
    return {
        "wq": jax.random.normal(ks[0], (hid, hid), jnp.float32) * std,
        "bq": jax.random.normal(ks[1], (1, hid), jnp.float32) * std,
        "wk": jax.random.normal(ks[2], (hid, hid), jnp.float32) * std,
        "bk": jax.random.normal(ks[3], (1, hid), jnp.float32) * std,
        "wv": jax.random.normal(ks[4], (hid, hid), jnp.float32) * std,
        "bv": jax.random.normal(ks[5], (1, hid), jnp.float32) * std,
        "wo": jax.random.normal(ks[6], (hid, hid), jnp.float32) * std,
        "bo": jax.random.normal(ks[7], (1, hid), jnp.float32) * std,
    }


def fuse_attention_params(p):
    """Precompute fused QKV / KV weight blocks (done once, outside kernels)."""
    return {
        "w_qkv": jnp.concatenate([p["wq"], p["wk"], p["wv"]], axis=1),
        "b_qkv": jnp.concatenate([p["bq"], p["bk"], p["bv"]], axis=1),
        "wq": p["wq"], "bq": p["bq"],
        "w_kv": jnp.concatenate([p["wk"], p["wv"]], axis=1),
        "b_kv": jnp.concatenate([p["bk"], p["bv"]], axis=1),
        "wo": p["wo"], "bo": p["bo"],
    }


def make_params(key, hid, pf):
    k1, k2, k3, k4, k5, k6 = jax.random.split(key, 6)
    std = 0.02
    return {
        "self_attn": _mha_params(k1, hid),
        "enc_attn": _mha_params(k2, hid),
        "ffn_w1": jax.random.normal(k3, (hid, pf), jnp.float32) * std,
        "ffn_b1": jax.random.normal(k4, (1, pf), jnp.float32) * std,
        "ffn_w2": jax.random.normal(k5, (pf, hid), jnp.float32) * std,
        "ffn_b2": jax.random.normal(k6, (1, hid), jnp.float32) * std,
        "ln1_g": jnp.ones((1, hid), jnp.float32),
        "ln1_b": jnp.zeros((1, hid), jnp.float32),
        "ln2_g": jnp.ones((1, hid), jnp.float32),
        "ln2_b": jnp.zeros((1, hid), jnp.float32),
        "ln3_g": jnp.ones((1, hid), jnp.float32),
        "ln3_b": jnp.zeros((1, hid), jnp.float32),
    }


if __name__ == "__main__":
    B, Lt, Ls = 2, 8, 8
    hid_dim, n_heads, pf_dim = 32, 4, 64

    key = jax.random.PRNGKey(0)
    kx, km, kp = jax.random.split(key, 3)

    x = jax.random.normal(kx, (B, Lt, hid_dim), jnp.float32)
    memory = jax.random.normal(km, (B, Ls, hid_dim), jnp.float32)
    params = make_params(kp, hid_dim, pf_dim)

    # fused-projection parameters for the Pallas path
    fused_params = dict(params)
    fused_params["self_attn"] = fuse_attention_params(params["self_attn"])
    fused_params["enc_attn"] = fuse_attention_params(params["enc_attn"])

    # causal target mask (B, 1, Lt, Lt), full source mask (B, 1, 1, Ls)
    tgt_mask = jnp.broadcast_to(
        jnp.tril(jnp.ones((Lt, Lt), jnp.float32))[None, None], (B, 1, Lt, Lt)
    )
    src_mask = jnp.ones((B, 1, 1, Ls), jnp.float32)

    decoder_fn = jax.jit(functools.partial(decoder_layer, n_heads=n_heads))
    out, attn = decoder_fn(x, memory, tgt_mask, src_mask, fused_params)
    out = jax.block_until_ready(out)
    attn = jax.block_until_ready(attn)

    # sanity check against a pure-JAX reference (approx-reciprocal softmax
    # introduces ~1e-4 relative error, hence the 1e-3 tolerance)
    out_ref, attn_ref = _ref_decoder(x, memory, tgt_mask, src_mask, params, n_heads)
    assert out.shape == (B, Lt, hid_dim)
    assert attn.shape == (B, n_heads, Lt, Ls)
    assert jnp.allclose(out, out_ref, rtol=1e-3, atol=1e-3)
    assert jnp.allclose(attn, attn_ref, rtol=1e-3, atol=1e-3)

    print("KERNEL_OK")
</pallas_src>

<mosaic_0001>
module attributes {stable_mosaic.version = 11 : i64} {
  func.func @linear_kernel(%arg0: i32, %arg1: memref<16x32xf32, #tpu.memory_space<vmem>>, %arg2: memref<32x32xf32, #tpu.memory_space<vmem>>, %arg3: memref<1x32xf32, #tpu.memory_space<vmem>>, %arg4: memref<16x32xf32, #tpu.memory_space<vmem>>) attributes {dimension_semantics = [#tpu.dimension_semantics<parallel>], iteration_bounds = array<i64: 1>, scalar_prefetch = 0 : i64, scratch_operands = 0 : i64, tpu.core_type = #tpu.core_type<tc>, window_params = [{transform_indices = @transform_0, window_bounds = array<i64: 16, 32>}, {pipeline_mode = #tpu.pipeline_mode<synchronous>, transform_indices = @transform_1, window_bounds = array<i64: 32, 32>}, {pipeline_mode = #tpu.pipeline_mode<synchronous>, transform_indices = @transform_2, window_bounds = array<i64: 1, 32>}, {transform_indices = @transform_3, window_bounds = array<i64: 16, 32>}]} {
    %c0 = arith.constant 0 : index
    %c0_0 = arith.constant 0 : index
    %0 = vector.load %arg1[%c0, %c0_0] : memref<16x32xf32, #tpu.memory_space<vmem>>, vector<16x32xf32>
    %c0_1 = arith.constant 0 : index
    %c0_2 = arith.constant 0 : index
    %1 = vector.load %arg2[%c0_1, %c0_2] : memref<32x32xf32, #tpu.memory_space<vmem>>, vector<32x32xf32>
    %cst = arith.constant dense<0.000000e+00> : vector<16x32xf32>
    %2 = tpu.matmul %0, %1, %cst {dimension_numbers = #tpu.dot_dimension_numbers<[1], [0], [0], [1], [0, 0, 1, 1], [], []>} : vector<16x32xf32>, vector<32x32xf32>, vector<16x32xf32> -> vector<16x32xf32>
    %c0_3 = arith.constant 0 : index
    %c0_4 = arith.constant 0 : index
    %3 = vector.load %arg3[%c0_3, %c0_4] : memref<1x32xf32, #tpu.memory_space<vmem>>, vector<1x32xf32>
    %4 = vector.broadcast %3 : vector<1x32xf32> to vector<16x32xf32>
    %5 = arith.addf %2, %4 : vector<16x32xf32>
    %c0_5 = arith.constant 0 : index
    %c0_6 = arith.constant 0 : index
    %6 = vector.load %arg4[%c0_5, %c0_6] : memref<16x32xf32, #tpu.memory_space<vmem>>, vector<16x32xf32>
    tpu.vector_store %arg4[%c0_5, %c0_6], %5 {strides = array<i32>} : memref<16x32xf32, #tpu.memory_space<vmem>>, vector<16x32xf32>,
    return
  }
  func.func @transform_0(%arg0: i32) -> (i32, i32) {
    %c0_i32 = arith.constant 0 : i32
    %c0_i32_0 = arith.constant 0 : i32
    return %arg0, %c0_i32 : i32, i32
  }
  func.func @transform_1(%arg0: i32) -> (i32, i32) {
    %c0_i32 = arith.constant 0 : i32
    %c0_i32_0 = arith.constant 0 : i32
    %c0_i32_1 = arith.constant 0 : i32
    return %c0_i32, %c0_i32_0 : i32, i32
  }
  func.func @transform_2(%arg0: i32) -> (i32, i32) {
    %c0_i32 = arith.constant 0 : i32
    %c0_i32_0 = arith.constant 0 : i32
    %c0_i32_1 = arith.constant 0 : i32
    return %c0_i32, %c0_i32_0 : i32, i32
  }
  func.func @transform_3(%arg0: i32) -> (i32, i32) {
    %c0_i32 = arith.constant 0 : i32
    %c0_i32_0 = arith.constant 0 : i32
    return %arg0, %c0_i32 : i32, i32
  }
}

module attributes {stable_mosaic.version = 11 : i64} {
  func.func @linear_kernel(%arg0: i32, %arg1: memref<16x32xf32, #tpu.memory_space<vmem>>, %arg2: memref<32x96xf32, #tpu.memory_space<vmem>>, %arg3: memref<1x96xf32, #tpu.memory_space<vmem>>, %arg4: memref<16x96xf32, #tpu.memory_space<vmem>>) attributes {dimension_semantics = [#tpu.dimension_semantics<parallel>], iteration_bounds = array<i64: 1>, scalar_prefetch = 0 : i64, scratch_operands = 0 : i64, tpu.core_type = #tpu.core_type<tc>, window_params = [{transform_indices = @transform_0, window_bounds = array<i64: 16, 32>}, {pipeline_mode = #tpu.pipeline_mode<synchronous>, transform_indices = @transform_1, window_bounds = array<i64: 32, 96>}, {pipeline_mode = #tpu.pipeline_mode<synchronous>, transform_indices = @transform_2, window_bounds = array<i64: 1, 96>}, {transform_indices = @transform_3, window_bounds = array<i64: 16, 96>}]} {
    %c0 = arith.constant 0 : index
    %c0_0 = arith.constant 0 : index
    %0 = vector.load %arg1[%c0, %c0_0] : memref<16x32xf32, #tpu.memory_space<vmem>>, vector<16x32xf32>
    %c0_1 = arith.constant 0 : index
    %c0_2 = arith.constant 0 : index
    %1 = vector.load %arg2[%c0_1, %c0_2] : memref<32x96xf32, #tpu.memory_space<vmem>>, vector<32x96xf32>
    %cst = arith.constant dense<0.000000e+00> : vector<16x96xf32>
    %2 = tpu.matmul %0, %1, %cst {dimension_numbers = #tpu.dot_dimension_numbers<[1], [0], [0], [1], [0, 0, 1, 1], [], []>} : vector<16x32xf32>, vector<32x96xf32>, vector<16x96xf32> -> vector<16x96xf32>
    %c0_3 = arith.constant 0 : index
    %c0_4 = arith.constant 0 : index
    %3 = vector.load %arg3[%c0_3, %c0_4] : memref<1x96xf32, #tpu.memory_space<vmem>>, vector<1x96xf32>
    %4 = vector.broadcast %3 : vector<1x96xf32> to vector<16x96xf32>
    %5 = arith.addf %2, %4 : vector<16x96xf32>
    %c0_5 = arith.constant 0 : index
    %c0_6 = arith.constant 0 : index
    %6 = vector.load %arg4[%c0_5, %c0_6] : memref<16x96xf32, #tpu.memory_space<vmem>>, vector<16x96xf32>
    tpu.vector_store %arg4[%c0_5, %c0_6], %5 {strides = array<i32>} : memref<16x96xf32, #tpu.memory_space<vmem>>, vector<16x96xf32>,
    return
  }
  func.func @transform_0(%arg0: i32) -> (i32, i32) {
    %c0_i32 = arith.constant 0 : i32
    %c0_i32_0 = arith.constant 0 : i32
    return %arg0, %c0_i32 : i32, i32
  }
  func.func @transform_1(%arg0: i32) -> (i32, i32) {
    %c0_i32 = arith.constant 0 : i32
    %c0_i32_0 = arith.constant 0 : i32
    %c0_i32_1 = arith.constant 0 : i32
    return %c0_i32, %c0_i32_0 : i32, i32
  }
  func.func @transform_2(%arg0: i32) -> (i32, i32) {
    %c0_i32 = arith.constant 0 : i32
    %c0_i32_0 = arith.constant 0 : i32
    %c0_i32_1 = arith.constant 0 : i32
    return %c0_i32, %c0_i32_0 : i32, i32
  }
  func.func @transform_3(%arg0: i32) -> (i32, i32) {
    %c0_i32 = arith.constant 0 : i32
    %c0_i32_0 = arith.constant 0 : i32
    return %arg0, %c0_i32 : i32, i32
  }
}

module attributes {stable_mosaic.version = 11 : i64} {
  func.func @self_attn_kernel(%arg0: i32, %arg1: memref<1x8x96xf32, #tpu.memory_space<vmem>>, %arg2: memref<1x1x8x8xf32, #tpu.memory_space<vmem>>, %arg3: memref<1x8x32xf32, #tpu.memory_space<vmem>>) attributes {dimension_semantics = [#tpu.dimension_semantics<parallel>], iteration_bounds = array<i64: 2>, scalar_prefetch = 0 : i64, scratch_operands = 0 : i64, tpu.core_type = #tpu.core_type<tc>, window_params = [{transform_indices = @transform_0, window_bounds = array<i64: 1, 8, 96>}, {transform_indices = @transform_1, window_bounds = array<i64: 1, 1, 8, 8>}, {transform_indices = @transform_2, window_bounds = array<i64: 1, 8, 32>}]} {
    %c0 = arith.constant 0 : index
    %c0_0 = arith.constant 0 : index
    %c0_1 = arith.constant 0 : index
    %0 = vector.load %arg1[%c0, %c0_0, %c0_1] : memref<1x8x96xf32, #tpu.memory_space<vmem>>, vector<1x8x96xf32>
    %1 = vector.shape_cast %0 : vector<1x8x96xf32> to vector<8x96xf32>
    %2 = vector.extract_strided_slice %1 {offsets = [0, 0], sizes = [8, 32], strides = [1, 1]} : vector<8x96xf32> to vector<8x32xf32>
    %3 = vector.extract_strided_slice %1 {offsets = [0, 32], sizes = [8, 32], strides = [1, 1]} : vector<8x96xf32> to vector<8x32xf32>
    %4 = vector.extract_strided_slice %1 {offsets = [0, 64], sizes = [8, 32], strides = [1, 1]} : vector<8x96xf32> to vector<8x32xf32>
    %c0_2 = arith.constant 0 : index
    %c0_3 = arith.constant 0 : index
    %c0_4 = arith.constant 0 : index
    %c0_5 = arith.constant 0 : index
    %5 = vector.load %arg2[%c0_2, %c0_3, %c0_4, %c0_5] : memref<1x1x8x8xf32, #tpu.memory_space<vmem>>, vector<1x1x8x8xf32>
    %6 = vector.shape_cast %5 : vector<1x1x8x8xf32> to vector<8x8xf32>
    %7 = vector.extract_strided_slice %2 {offsets = [0, 0], sizes = [8, 8], strides = [1, 1]} : vector<8x32xf32> to vector<8x8xf32>
    %8 = vector.extract_strided_slice %3 {offsets = [0, 0], sizes = [8, 8], strides = [1, 1]} : vector<8x32xf32> to vector<8x8xf32>
    %9 = vector.extract_strided_slice %4 {offsets = [0, 0], sizes = [8, 8], strides = [1, 1]} : vector<8x32xf32> to vector<8x8xf32>
    %cst = arith.constant dense<0.000000e+00> : vector<8x8xf32>
    %10 = tpu.matmul %7, %8, %cst {dimension_numbers = #tpu.dot_dimension_numbers<[1], [1], [0], [0], [0, 0, 1, 0], [], []>} : vector<8x8xf32>, vector<8x8xf32>, vector<8x8xf32> -> vector<8x8xf32>
    %cst_6 = arith.constant 0.353553385 : f32
    %11 = vector.broadcast %cst_6 : f32 to vector<8x8xf32>
    %12 = arith.mulf %10, %11 : vector<8x8xf32>
    %cst_7 = arith.constant 0.000000e+00 : f32
    %13 = vector.broadcast %cst_7 : f32 to vector<8x8xf32>
    %14 = arith.cmpf oeq, %6, %13 : vector<8x8xf32>
    %cst_8 = arith.constant -1.000000e+10 : f32
    %15 = vector.broadcast %cst_8 : f32 to vector<8x8xf32>
    %16 = arith.select %14, %15, %12 : vector<8x8xi1>, vector<8x8xf32>
    %cst_9 = arith.constant dense<0xFF800000> : vector<8xf32>
    %17 = vector.multi_reduction <maximumf>, %16, %cst_9 [1] : vector<8x8xf32> to vector<8xf32>
    %18 = vector.shape_cast %17 : vector<8xf32> to vector<8x1xf32>
    %19 = vector.broadcast %18 : vector<8x1xf32> to vector<8x8xf32>
    %20 = arith.subf %16, %19 : vector<8x8xf32>
    %21 = math.exp %20 : vector<8x8xf32>
    %cst_10 = arith.constant dense<0.000000e+00> : vector<8xf32>
    %22 = vector.multi_reduction <add>, %21, %cst_10 [1] : vector<8x8xf32> to vector<8xf32>
    %23 = vector.shape_cast %22 : vector<8xf32> to vector<8x1xf32>
    %24 = tpu.reciprocal %23 {approx = true} : vector<8x1xf32> -> vector<8x1xf32>
    %25 = vector.broadcast %24 : vector<8x1xf32> to vector<8x8xf32>
    %26 = arith.mulf %21, %25 : vector<8x8xf32>
    %cst_11 = arith.constant dense<0.000000e+00> : vector<8x8xf32>
    %27 = tpu.matmul %26, %9, %cst_11 {dimension_numbers = #tpu.dot_dimension_numbers<[1], [0], [0], [1], [0, 0, 1, 1], [], []>} : vector<8x8xf32>, vector<8x8xf32>, vector<8x8xf32> -> vector<8x8xf32>
    %28 = vector.extract_strided_slice %2 {offsets = [0, 8], sizes = [8, 8], strides = [1, 1]} : vector<8x32xf32> to vector<8x8xf32>
    %29 = vector.extract_strided_slice %3 {offsets = [0, 8], sizes = [8, 8], strides = [1, 1]} : vector<8x32xf32> to vector<8x8xf32>
    %30 = vector.extract_strided_slice %4 {offsets = [0, 8], sizes = [8, 8], strides = [1, 1]} : vector<8x32xf32> to vector<8x8xf32>
    %cst_12 = arith.constant dense<0.000000e+00> : vector<8x8xf32>
    %31 = tpu.matmul %28, %29, %cst_12 {dimension_numbers = #tpu.dot_dimension_numbers<[1], [1], [0], [0], [0, 0, 1, 0], [], []>} : vector<8x8xf32>, vector<8x8xf32>, vector<8x8xf32> -> vector<8x8xf32>
    %cst_13 = arith.constant 0.353553385 : f32
    %32 = vector.broadcast %cst_13 : f32 to vector<8x8xf32>
    %33 = arith.mulf %31, %32 : vector<8x8xf32>
    %cst_14 = arith.constant 0.000000e+00 : f32
    %34 = vector.broadcast %cst_14 : f32 to vector<8x8xf32>
    %35 = arith.cmpf oeq, %6, %34 : vector<8x8xf32>
    %cst_15 = arith.constant -1.000000e+10 : f32
    %36 = vector.broadcast %cst_15 : f32 to vector<8x8xf32>
    %37 = arith.select %35, %36, %33 : vector<8x8xi1>, vector<8x8xf32>
    %cst_16 = arith.constant dense<0xFF800000> : vector<8xf32>
    %38 = vector.multi_reduction <maximumf>, %37, %cst_16 [1] : vector<8x8xf32> to vector<8xf32>
    %39 = vector.shape_cast %38 : vector<8xf32> to vector<8x1xf32>
    %40 = vector.broadcast %39 : vector<8x1xf32> to vector<8x8xf32>
    %41 = arith.subf %37, %40 : vector<8x8xf32>
    %42 = math.exp %41 : vector<8x8xf32>
    %cst_17 = arith.constant dense<0.000000e+00> : vector<8xf32>
    %43 = vector.multi_reduction <add>, %42, %cst_17 [1] : vector<8x8xf32> to vector<8xf32>
    %44 = vector.shape_cast %43 : vector<8xf32> to vector<8x1xf32>
    %45 = tpu.reciprocal %44 {approx = true} : vector<8x1xf32> -> vector<8x1xf32>
    %46 = vector.broadcast %45 : vector<8x1xf32> to vector<8x8xf32>
    %47 = arith.mulf %42, %46 : vector<8x8xf32>
    %cst_18 = arith.constant dense<0.000000e+00> : vector<8x8xf32>
    %48 = tpu.matmul %47, %30, %cst_18 {dimension_numbers = #tpu.dot_dimension_numbers<[1], [0], [0], [1], [0, 0, 1, 1], [], []>} : vector<8x8xf32>, vector<8x8xf32>, vector<8x8xf32> -> vector<8x8xf32>
    %49 = vector.extract_strided_slice %2 {offsets = [0, 16], sizes = [8, 8], strides = [1, 1]} : vector<8x32xf32> to vector<8x8xf32>
    %50 = vector.extract_strided_slice %3 {offsets = [0, 16], sizes = [8, 8], strides = [1, 1]} : vector<8x32xf32> to vector<8x8xf32>
    %51 = vector.extract_strided_slice %4 {offsets = [0, 16], sizes = [8, 8], strides = [1, 1]} : vector<8x32xf32> to vector<8x8xf32>
    %cst_19 = arith.constant dense<0.000000e+00> : vector<8x8xf32>
    %52 = tpu.matmul %49, %50, %cst_19 {dimension_numbers = #tpu.dot_dimension_numbers<[1], [1], [0], [0], [0, 0, 1, 0], [], []>} : vector<8x8xf32>, vector<8x8xf32>, vector<8x8xf32> -> vector<8x8xf32>
    %cst_20 = arith.constant 0.353553385 : f32
    %53 = vector.broadcast %cst_20 : f32 to vector<8x8xf32>
    %54 = arith.mulf %52, %53 : vector<8x8xf32>
    %cst_21 = arith.constant 0.000000e+00 : f32
    %55 = vector.broadcast %cst_21 : f32 to vector<8x8xf32>
    %56 = arith.cmpf oeq, %6, %55 : vector<8x8xf32>
    %cst_22 = arith.constant -1.000000e+10 : f32
    %57 = vector.broadcast %cst_22 : f32 to vector<8x8xf32>
    %58 = arith.select %56, %57, %54 : vector<8x8xi1>, vector<8x8xf32>
    %cst_23 = arith.constant dense<0xFF800000> : vector<8xf32>
    %59 = vector.multi_reduction <maximumf>, %58, %cst_23 [1] : vector<8x8xf32> to vector<8xf32>
    %60 = vector.shape_cast %59 : vector<8xf32> to vector<8x1xf32>
    %61 = vector.broadcast %60 : vector<8x1xf32> to vector<8x8xf32>
    %62 = arith.subf %58, %61 : vector<8x8xf32>
    %63 = math.exp %62 : vector<8x8xf32>
    %cst_24 = arith.constant dense<0.000000e+00> : vector<8xf32>
    %64 = vector.multi_reduction <add>, %63, %cst_24 [1] : vector<8x8xf32> to vector<8xf32>
    %65 = vector.shape_cast %64 : vector<8xf32> to vector<8x1xf32>
    %66 = tpu.reciprocal %65 {approx = true} : vector<8x1xf32> -> vector<8x1xf32>
    %67 = vector.broadcast %66 : vector<8x1xf32> to vector<8x8xf32>
    %68 = arith.mulf %63, %67 : vector<8x8xf32>
    %cst_25 = arith.constant dense<0.000000e+00> : vector<8x8xf32>
    %69 = tpu.matmul %68, %51, %cst_25 {dimension_numbers = #tpu.dot_dimension_numbers<[1], [0], [0], [1], [0, 0, 1, 1], [], []>} : vector<8x8xf32>, vector<8x8xf32>, vector<8x8xf32> -> vector<8x8xf32>
    %70 = vector.extract_strided_slice %2 {offsets = [0, 24], sizes = [8, 8], strides = [1, 1]} : vector<8x32xf32> to vector<8x8xf32>
    %71 = vector.extract_strided_slice %3 {offsets = [0, 24], sizes = [8, 8], strides = [1, 1]} : vector<8x32xf32> to vector<8x8xf32>
    %72 = vector.extract_strided_slice %4 {offsets = [0, 24], sizes = [8, 8], strides = [1, 1]} : vector<8x32xf32> to vector<8x8xf32>
    %cst_26 = arith.constant dense<0.000000e+00> : vector<8x8xf32>
    %73 = tpu.matmul %70, %71, %cst_26 {dimension_numbers = #tpu.dot_dimension_numbers<[1], [1], [0], [0], [0, 0, 1, 0], [], []>} : vector<8x8xf32>, vector<8x8xf32>, vector<8x8xf32> -> vector<8x8xf32>
    %cst_27 = arith.constant 0.353553385 : f32
    %74 = vector.broadcast %cst_27 : f32 to vector<8x8xf32>
    %75 = arith.mulf %73, %74 : vector<8x8xf32>
    %cst_28 = arith.constant 0.000000e+00 : f32
    %76 = vector.broadcast %cst_28 : f32 to vector<8x8xf32>
    %77 = arith.cmpf oeq, %6, %76 : vector<8x8xf32>
    %cst_29 = arith.constant -1.000000e+10 : f32
    %78 = vector.broadcast %cst_29 : f32 to vector<8x8xf32>
    %79 = arith.select %77, %78, %75 : vector<8x8xi1>, vector<8x8xf32>
    %cst_30 = arith.constant dense<0xFF800000> : vector<8xf32>
    %80 = vector.multi_reduction <maximumf>, %79, %cst_30 [1] : vector<8x8xf32> to vector<8xf32>
    %81 = vector.shape_cast %80 : vector<8xf32> to vector<8x1xf32>
    %82 = vector.broadcast %81 : vector<8x1xf32> to vector<8x8xf32>
    %83 = arith.subf %79, %82 : vector<8x8xf32>
    %84 = math.exp %83 : vector<8x8xf32>
    %cst_31 = arith.constant dense<0.000000e+00> : vector<8xf32>
    %85 = vector.multi_reduction <add>, %84, %cst_31 [1] : vector<8x8xf32> to vector<8xf32>
    %86 = vector.shape_cast %85 : vector<8xf32> to vector<8x1xf32>
    %87 = tpu.reciprocal %86 {approx = true} : vector<8x1xf32> -> vector<8x1xf32>
    %88 = vector.broadcast %87 : vector<8x1xf32> to vector<8x8xf32>
    %89 = arith.mulf %84, %88 : vector<8x8xf32>
    %cst_32 = arith.constant dense<0.000000e+00> : vector<8x8xf32>
    %90 = tpu.matmul %89, %72, %cst_32 {dimension_numbers = #tpu.dot_dimension_numbers<[1], [0], [0], [1], [0, 0, 1, 1], [], []>} : vector<8x8xf32>, vector<8x8xf32>, vector<8x8xf32> -> vector<8x8xf32>
    %91 = tpu.concatenate %27, %48, %69, %90 in 1 : vector<8x8xf32>, vector<8x8xf32>, vector<8x8xf32>, vector<8x8xf32> -> vector<8x32xf32>
    %c0_33 = arith.constant 0 : index
    %c0_34 = arith.constant 0 : index
    %c0_35 = arith.constant 0 : index
    %92 = vector.load %arg3[%c0_33, %c0_34, %c0_35] : memref<1x8x32xf32, #tpu.memory_space<vmem>>, vector<1x8x32xf32>
    %93 = vector.shape_cast %92 : vector<1x8x32xf32> to vector<8x32xf32>
    %94 = vector.shape_cast %91 : vector<8x32xf32> to vector<1x8x32xf32>
    tpu.vector_store %arg3[%c0_33, %c0_34, %c0_35], %94 {strides = array<i32>} : memref<1x8x32xf32, #tpu.memory_space<vmem>>, vector<1x8x32xf32>,
    return
  }
  func.func @transform_0(%arg0: i32) -> (i32, i32, i32) {
    %c0_i32 = arith.constant 0 : i32
    %c0_i32_0 = arith.constant 0 : i32
    %c0_i32_1 = arith.constant 0 : i32
    return %arg0, %c0_i32, %c0_i32_0 : i32, i32, i32
  }
  func.func @transform_1(%arg0: i32) -> (i32, i32, i32, i32) {
    %c0_i32 = arith.constant 0 : i32
    %c0_i32_0 = arith.constant 0 : i32
    %c0_i32_1 = arith.constant 0 : i32
    %c0_i32_2 = arith.constant 0 : i32
    return %arg0, %c0_i32, %c0_i32_0, %c0_i32_1 : i32, i32, i32, i32
  }
  func.func @transform_2(%arg0: i32) -> (i32, i32, i32) {
    %c0_i32 = arith.constant 0 : i32
    %c0_i32_0 = arith.constant 0 : i32
    %c0_i32_1 = arith.constant 0 : i32
    return %arg0, %c0_i32, %c0_i32_0 : i32, i32, i32
  }
}

module attributes {stable_mosaic.version = 11 : i64} {
  func.func @proj_add_ln_kernel(%arg0: i32, %arg1: memref<16x32xf32, #tpu.memory_space<vmem>>, %arg2: memref<32x32xf32, #tpu.memory_space<vmem>>, %arg3: memref<1x32xf32, #tpu.memory_space<vmem>>, %arg4: memref<16x32xf32, #tpu.memory_space<vmem>>, %arg5: memref<1x32xf32, #tpu.memory_space<vmem>>, %arg6: memref<1x32xf32, #tpu.memory_space<vmem>>, %arg7: memref<16x32xf32, #tpu.memory_space<vmem>>) attributes {dimension_semantics = [#tpu.dimension_semantics<parallel>], iteration_bounds = array<i64: 1>, scalar_prefetch = 0 : i64, scratch_operands = 0 : i64, tpu.core_type = #tpu.core_type<tc>, window_params = [{transform_indices = @transform_0, window_bounds = array<i64: 16, 32>}, {pipeline_mode = #tpu.pipeline_mode<synchronous>, transform_indices = @transform_1, window_bounds = array<i64: 32, 32>}, {pipeline_mode = #tpu.pipeline_mode<synchronous>, transform_indices = @transform_2, window_bounds = array<i64: 1, 32>}, {transform_indices = @transform_3, window_bounds = array<i64: 16, 32>}, {pipeline_mode = #tpu.pipeline_mode<synchronous>, transform_indices = @transform_4, window_bounds = array<i64: 1, 32>}, {pipeline_mode = #tpu.pipeline_mode<synchronous>, transform_indices = @transform_5, window_bounds = array<i64: 1, 32>}, {transform_indices = @transform_6, window_bounds = array<i64: 16, 32>}]} {
    %c0 = arith.constant 0 : index
    %c0_0 = arith.constant 0 : index
    %0 = vector.load %arg1[%c0, %c0_0] : memref<16x32xf32, #tpu.memory_space<vmem>>, vector<16x32xf32>
    %c0_1 = arith.constant 0 : index
    %c0_2 = arith.constant 0 : index
    %1 = vector.load %arg2[%c0_1, %c0_2] : memref<32x32xf32, #tpu.memory_space<vmem>>, vector<32x32xf32>
    %cst = arith.constant dense<0.000000e+00> : vector<16x32xf32>
    %2 = tpu.matmul %0, %1, %cst {dimension_numbers = #tpu.dot_dimension_numbers<[1], [0], [0], [1], [0, 0, 1, 1], [], []>} : vector<16x32xf32>, vector<32x32xf32>, vector<16x32xf32> -> vector<16x32xf32>
    %c0_3 = arith.constant 0 : index
    %c0_4 = arith.constant 0 : index
    %3 = vector.load %arg3[%c0_3, %c0_4] : memref<1x32xf32, #tpu.memory_space<vmem>>, vector<1x32xf32>
    %4 = vector.broadcast %3 : vector<1x32xf32> to vector<16x32xf32>
    %5 = arith.addf %2, %4 : vector<16x32xf32>
    %c0_5 = arith.constant 0 : index
    %c0_6 = arith.constant 0 : index
    %6 = vector.load %arg4[%c0_5, %c0_6] : memref<16x32xf32, #tpu.memory_space<vmem>>, vector<16x32xf32>
    %7 = arith.addf %6, %5 : vector<16x32xf32>
    %cst_7 = arith.constant dense<0.000000e+00> : vector<16xf32>
    %8 = vector.multi_reduction <add>, %7, %cst_7 [1] : vector<16x32xf32> to vector<16xf32>
    %9 = vector.shape_cast %8 : vector<16xf32> to vector<16x1xf32>
    %cst_8 = arith.constant 3.200000e+01 : f32
    %10 = vector.broadcast %cst_8 : f32 to vector<16x1xf32>
    %11 = arith.divf %9, %10 : vector<16x1xf32>
    %12 = vector.broadcast %11 : vector<16x1xf32> to vector<16x32xf32>
    %13 = arith.subf %7, %12 : vector<16x32xf32>
    %14 = arith.mulf %13, %13 : vector<16x32xf32>
    %cst_9 = arith.constant dense<0.000000e+00> : vector<16xf32>
    %15 = vector.multi_reduction <add>, %14, %cst_9 [1] : vector<16x32xf32> to vector<16xf32>
    %16 = vector.shape_cast %15 : vector<16xf32> to vector<16x1xf32>
    %cst_10 = arith.constant 3.200000e+01 : f32
    %17 = vector.broadcast %cst_10 : f32 to vector<16x1xf32>
    %18 = arith.divf %16, %17 : vector<16x1xf32>
    %19 = vector.broadcast %11 : vector<16x1xf32> to vector<16x32xf32>
    %20 = arith.subf %7, %19 : vector<16x32xf32>
    %cst_11 = arith.constant 9.99999974E-6 : f32
    %21 = vector.broadcast %cst_11 : f32 to vector<16x1xf32>
    %22 = arith.addf %18, %21 : vector<16x1xf32>
    %23 = math.rsqrt %22 : vector<16x1xf32>
    %24 = vector.broadcast %23 : vector<16x1xf32> to vector<16x32xf32>
    %25 = arith.mulf %20, %24 : vector<16x32xf32>
    %c0_12 = arith.constant 0 : index
    %c0_13 = arith.constant 0 : index
    %26 = vector.load %arg5[%c0_12, %c0_13] : memref<1x32xf32, #tpu.memory_space<vmem>>, vector<1x32xf32>
    %27 = vector.broadcast %26 : vector<1x32xf32> to vector<16x32xf32>
    %28 = arith.mulf %25, %27 : vector<16x32xf32>
    %c0_14 = arith.constant 0 : index
    %c0_15 = arith.constant 0 : index
    %29 = vector.load %arg6[%c0_14, %c0_15] : memref<1x32xf32, #tpu.memory_space<vmem>>, vector<1x32xf32>
    %30 = vector.broadcast %29 : vector<1x32xf32> to vector<16x32xf32>
    %31 = arith.addf %28, %30 : vector<16x32xf32>
    %c0_16 = arith.constant 0 : index
    %c0_17 = arith.constant 0 : index
    %32 = vector.load %arg7[%c0_16, %c0_17] : memref<16x32xf32, #tpu.memory_space<vmem>>, vector<16x32xf32>
    tpu.vector_store %arg7[%c0_16, %c0_17], %31 {strides = array<i32>} : memref<16x32xf32, #tpu.memory_space<vmem>>, vector<16x32xf32>,
    return
  }
  func.func @transform_0(%arg0: i32) -> (i32, i32) {
    %c0_i32 = arith.constant 0 : i32
    %c0_i32_0 = arith.constant 0 : i32
    return %arg0, %c0_i32 : i32, i32
  }
  func.func @transform_1(%arg0: i32) -> (i32, i32) {
    %c0_i32 = arith.constant 0 : i32
    %c0_i32_0 = arith.constant 0 : i32
    %c0_i32_1 = arith.constant 0 : i32
    return %c0_i32, %c0_i32_0 : i32, i32
  }
  func.func @transform_2(%arg0: i32) -> (i32, i32) {
    %c0_i32 = arith.constant 0 : i32
    %c0_i32_0 = arith.constant 0 : i32
    %c0_i32_1 = arith.constant 0 : i32
    return %c0_i32, %c0_i32_0 : i32, i32
  }
  func.func @transform_3(%arg0: i32) -> (i32, i32) {
    %c0_i32 = arith.constant 0 : i32
    %c0_i32_0 = arith.constant 0 : i32
    return %arg0, %c0_i32 : i32, i32
  }
  func.func @transform_4(%arg0: i32) -> (i32, i32) {
    %c0_i32 = arith.constant 0 : i32
    %c0_i32_0 = arith.constant 0 : i32
    %c0_i32_1 = arith.constant 0 : i32
    return %c0_i32, %c0_i32_0 : i32, i32
  }
  func.func @transform_5(%arg0: i32) -> (i32, i32) {
    %c0_i32 = arith.constant 0 : i32
    %c0_i32_0 = arith.constant 0 : i32
    %c0_i32_1 = arith.constant 0 : i32
    return %c0_i32, %c0_i32_0 : i32, i32
  }
  func.func @transform_6(%arg0: i32) -> (i32, i32) {
    %c0_i32 = arith.constant 0 : i32
    %c0_i32_0 = arith.constant 0 : i32
    return %arg0, %c0_i32 : i32, i32
  }
}

module attributes {stable_mosaic.version = 11 : i64} {
  func.func @ffn_add_ln_kernel(%arg0: i32, %arg1: memref<16x32xf32, #tpu.memory_space<vmem>>, %arg2: memref<32x64xf32, #tpu.memory_space<vmem>>, %arg3: memref<1x64xf32, #tpu.memory_space<vmem>>, %arg4: memref<64x32xf32, #tpu.memory_space<vmem>>, %arg5: memref<1x32xf32, #tpu.memory_space<vmem>>, %arg6: memref<1x32xf32, #tpu.memory_space<vmem>>, %arg7: memref<1x32xf32, #tpu.memory_space<vmem>>, %arg8: memref<16x32xf32, #tpu.memory_space<vmem>>) attributes {dimension_semantics = [#tpu.dimension_semantics<parallel>], iteration_bounds = array<i64: 1>, scalar_prefetch = 0 : i64, scratch_operands = 0 : i64, tpu.core_type = #tpu.core_type<tc>, window_params = [{transform_indices = @transform_0, window_bounds = array<i64: 16, 32>}, {pipeline_mode = #tpu.pipeline_mode<synchronous>, transform_indices = @transform_1, window_bounds = array<i64: 32, 64>}, {pipeline_mode = #tpu.pipeline_mode<synchronous>, transform_indices = @transform_2, window_bounds = array<i64: 1, 64>}, {pipeline_mode = #tpu.pipeline_mode<synchronous>, transform_indices = @transform_3, window_bounds = array<i64: 64, 32>}, {pipeline_mode = #tpu.pipeline_mode<synchronous>, transform_indices = @transform_4, window_bounds = array<i64: 1, 32>}, {pipeline_mode = #tpu.pipeline_mode<synchronous>, transform_indices = @transform_5, window_bounds = array<i64: 1, 32>}, {pipeline_mode = #tpu.pipeline_mode<synchronous>, transform_indices = @transform_6, window_bounds = array<i64: 1, 32>}, {transform_indices = @transform_7, window_bounds = array<i64: 16, 32>}]} {
    %c0 = arith.constant 0 : index
    %c0_0 = arith.constant 0 : index
    %0 = vector.load %arg1[%c0, %c0_0] : memref<16x32xf32, #tpu.memory_space<vmem>>, vector<16x32xf32>
    %c0_1 = arith.constant 0 : index
    %c0_2 = arith.constant 0 : index
    %1 = vector.load %arg2[%c0_1, %c0_2] : memref<32x64xf32, #tpu.memory_space<vmem>>, vector<32x64xf32>
    %cst = arith.constant dense<0.000000e+00> : vector<16x64xf32>
    %2 = tpu.matmul %0, %1, %cst {dimension_numbers = #tpu.dot_dimension_numbers<[1], [0], [0], [1], [0, 0, 1, 1], [], []>} : vector<16x32xf32>, vector<32x64xf32>, vector<16x64xf32> -> vector<16x64xf32>
    %c0_3 = arith.constant 0 : index
    %c0_4 = arith.constant 0 : index
    %3 = vector.load %arg3[%c0_3, %c0_4] : memref<1x64xf32, #tpu.memory_space<vmem>>, vector<1x64xf32>
    %4 = vector.broadcast %3 : vector<1x64xf32> to vector<16x64xf32>
    %5 = arith.addf %2, %4 : vector<16x64xf32>
    %cst_5 = arith.constant 0.000000e+00 : f32
    %6 = vector.broadcast %cst_5 : f32 to vector<16x64xf32>
    %7 = arith.maximumf %5, %6 : vector<16x64xf32>
    %c0_6 = arith.constant 0 : index
    %c0_7 = arith.constant 0 : index
    %8 = vector.load %arg4[%c0_6, %c0_7] : memref<64x32xf32, #tpu.memory_space<vmem>>, vector<64x32xf32>
    %cst_8 = arith.constant dense<0.000000e+00> : vector<16x32xf32>
    %9 = tpu.matmul %7, %8, %cst_8 {dimension_numbers = #tpu.dot_dimension_numbers<[1], [0], [0], [1], [0, 0, 1, 1], [], []>} : vector<16x64xf32>, vector<64x32xf32>, vector<16x32xf32> -> vector<16x32xf32>
    %c0_9 = arith.constant 0 : index
    %c0_10 = arith.constant 0 : index
    %10 = vector.load %arg5[%c0_9, %c0_10] : memref<1x32xf32, #tpu.memory_space<vmem>>, vector<1x32xf32>
    %11 = vector.broadcast %10 : vector<1x32xf32> to vector<16x32xf32>
    %12 = arith.addf %9, %11 : vector<16x32xf32>
    %13 = arith.addf %0, %12 : vector<16x32xf32>
    %cst_11 = arith.constant dense<0.000000e+00> : vector<16xf32>
    %14 = vector.multi_reduction <add>, %13, %cst_11 [1] : vector<16x32xf32> to vector<16xf32>
    %15 = vector.shape_cast %14 : vector<16xf32> to vector<16x1xf32>
    %cst_12 = arith.constant 3.200000e+01 : f32
    %16 = vector.broadcast %cst_12 : f32 to vector<16x1xf32>
    %17 = arith.divf %15, %16 : vector<16x1xf32>
    %18 = vector.broadcast %17 : vector<16x1xf32> to vector<16x32xf32>
    %19 = arith.subf %13, %18 : vector<16x32xf32>
    %20 = arith.mulf %19, %19 : vector<16x32xf32>
    %cst_13 = arith.constant dense<0.000000e+00> : vector<16xf32>
    %21 = vector.multi_reduction <add>, %20, %cst_13 [1] : vector<16x32xf32> to vector<16xf32>
    %22 = vector.shape_cast %21 : vector<16xf32> to vector<16x1xf32>
    %cst_14 = arith.constant 3.200000e+01 : f32
    %23 = vector.broadcast %cst_14 : f32 to vector<16x1xf32>
    %24 = arith.divf %22, %23 : vector<16x1xf32>
    %25 = vector.broadcast %17 : vector<16x1xf32> to vector<16x32xf32>
    %26 = arith.subf %13, %25 : vector<16x32xf32>
    %cst_15 = arith.constant 9.99999974E-6 : f32
    %27 = vector.broadcast %cst_15 : f32 to vector<16x1xf32>
    %28 = arith.addf %24, %27 : vector<16x1xf32>
    %29 = math.rsqrt %28 : vector<16x1xf32>
    %30 = vector.broadcast %29 : vector<16x1xf32> to vector<16x32xf32>
    %31 = arith.mulf %26, %30 : vector<16x32xf32>
    %c0_16 = arith.constant 0 : index
    %c0_17 = arith.constant 0 : index
    %32 = vector.load %arg6[%c0_16, %c0_17] : memref<1x32xf32, #tpu.memory_space<vmem>>, vector<1x32xf32>
    %33 = vector.broadcast %32 : vector<1x32xf32> to vector<16x32xf32>
    %34 = arith.mulf %31, %33 : vector<16x32xf32>
    %c0_18 = arith.constant 0 : index
    %c0_19 = arith.constant 0 : index
    %35 = vector.load %arg7[%c0_18, %c0_19] : memref<1x32xf32, #tpu.memory_space<vmem>>, vector<1x32xf32>
    %36 = vector.broadcast %35 : vector<1x32xf32> to vector<16x32xf32>
    %37 = arith.addf %34, %36 : vector<16x32xf32>
    %c0_20 = arith.constant 0 : index
    %c0_21 = arith.constant 0 : index
    %38 = vector.load %arg8[%c0_20, %c0_21] : memref<16x32xf32, #tpu.memory_space<vmem>>, vector<16x32xf32>
    tpu.vector_store %arg8[%c0_20, %c0_21], %37 {strides = array<i32>} : memref<16x32xf32, #tpu.memory_space<vmem>>, vector<16x32xf32>,
    return
  }
  func.func @transform_0(%arg0: i32) -> (i32, i32) {
    %c0_i32 = arith.constant 0 : i32
    %c0_i32_0 = arith.constant 0 : i32
    return %arg0, %c0_i32 : i32, i32
  }
  func.func @transform_1(%arg0: i32) -> (i32, i32) {
    %c0_i32 = arith.constant 0 : i32
    %c0_i32_0 = arith.constant 0 : i32
    %c0_i32_1 = arith.constant 0 : i32
    return %c0_i32, %c0_i32_0 : i32, i32
  }
  func.func @transform_2(%arg0: i32) -> (i32, i32) {
    %c0_i32 = arith.constant 0 : i32
    %c0_i32_0 = arith.constant 0 : i32
    %c0_i32_1 = arith.constant 0 : i32
    return %c0_i32, %c0_i32_0 : i32, i32
  }
  func.func @transform_3(%arg0: i32) -> (i32, i32) {
    %c0_i32 = arith.constant 0 : i32
    %c0_i32_0 = arith.constant 0 : i32
    %c0_i32_1 = arith.constant 0 : i32
    return %c0_i32, %c0_i32_0 : i32, i32
  }
  func.func @transform_4(%arg0: i32) -> (i32, i32) {
    %c0_i32 = arith.constant 0 : i32
    %c0_i32_0 = arith.constant 0 : i32
    %c0_i32_1 = arith.constant 0 : i32
    return %c0_i32, %c0_i32_0 : i32, i32
  }
  func.func @transform_5(%arg0: i32) -> (i32, i32) {
    %c0_i32 = arith.constant 0 : i32
    %c0_i32_0 = arith.constant 0 : i32
    %c0_i32_1 = arith.constant 0 : i32
    return %c0_i32, %c0_i32_0 : i32, i32
  }
  func.func @transform_6(%arg0: i32) -> (i32, i32) {
    %c0_i32 = arith.constant 0 : i32
    %c0_i32_0 = arith.constant 0 : i32
    %c0_i32_1 = arith.constant 0 : i32
    return %c0_i32, %c0_i32_0 : i32, i32
  }
  func.func @transform_7(%arg0: i32) -> (i32, i32) {
    %c0_i32 = arith.constant 0 : i32
    %c0_i32_0 = arith.constant 0 : i32
    return %arg0, %c0_i32 : i32, i32
  }
}

module attributes {stable_mosaic.version = 11 : i64} {
  func.func @cross_attn_kernel(%arg0: i32, %arg1: memref<1x8x32xf32, #tpu.memory_space<vmem>>, %arg2: memref<1x8x64xf32, #tpu.memory_space<vmem>>, %arg3: memref<1x1x1x8xf32, #tpu.memory_space<vmem>>, %arg4: memref<1x8x32xf32, #tpu.memory_space<vmem>>, %arg5: memref<1x4x8x8xf32, #tpu.memory_space<vmem>>) attributes {dimension_semantics = [#tpu.dimension_semantics<parallel>], iteration_bounds = array<i64: 2>, scalar_prefetch = 0 : i64, scratch_operands = 0 : i64, tpu.core_type = #tpu.core_type<tc>, window_params = [{transform_indices = @transform_0, window_bounds = array<i64: 1, 8, 32>}, {transform_indices = @transform_1, window_bounds = array<i64: 1, 8, 64>}, {transform_indices = @transform_2, window_bounds = array<i64: 1, 1, 1, 8>}, {transform_indices = @transform_3, window_bounds = array<i64: 1, 8, 32>}, {transform_indices = @transform_4, window_bounds = array<i64: 1, 4, 8, 8>}]} {
    %c0 = arith.constant 0 : index
    %c0_0 = arith.constant 0 : index
    %c0_1 = arith.constant 0 : index
    %0 = vector.load %arg1[%c0, %c0_0, %c0_1] : memref<1x8x32xf32, #tpu.memory_space<vmem>>, vector<1x8x32xf32>
    %1 = vector.shape_cast %0 : vector<1x8x32xf32> to vector<8x32xf32>
    %c0_2 = arith.constant 0 : index
    %c0_3 = arith.constant 0 : index
    %c0_4 = arith.constant 0 : index
    %2 = vector.load %arg2[%c0_2, %c0_3, %c0_4] : memref<1x8x64xf32, #tpu.memory_space<vmem>>, vector<1x8x64xf32>
    %3 = vector.shape_cast %2 : vector<1x8x64xf32> to vector<8x64xf32>
    %4 = vector.extract_strided_slice %3 {offsets = [0, 0], sizes = [8, 32], strides = [1, 1]} : vector<8x64xf32> to vector<8x32xf32>
    %5 = vector.extract_strided_slice %3 {offsets = [0, 32], sizes = [8, 32], strides = [1, 1]} : vector<8x64xf32> to vector<8x32xf32>
    %c0_5 = arith.constant 0 : index
    %c0_6 = arith.constant 0 : index
    %c0_7 = arith.constant 0 : index
    %c0_8 = arith.constant 0 : index
    %6 = vector.load %arg3[%c0_5, %c0_6, %c0_7, %c0_8] : memref<1x1x1x8xf32, #tpu.memory_space<vmem>>, vector<1x1x1x8xf32>
    %7 = vector.shape_cast %6 : vector<1x1x1x8xf32> to vector<1x8xf32>
    %8 = vector.extract_strided_slice %1 {offsets = [0, 0], sizes = [8, 8], strides = [1, 1]} : vector<8x32xf32> to vector<8x8xf32>
    %9 = vector.extract_strided_slice %4 {offsets = [0, 0], sizes = [8, 8], strides = [1, 1]} : vector<8x32xf32> to vector<8x8xf32>
    %10 = vector.extract_strided_slice %5 {offsets = [0, 0], sizes = [8, 8], strides = [1, 1]} : vector<8x32xf32> to vector<8x8xf32>
    %cst = arith.constant dense<0.000000e+00> : vector<8x8xf32>
    %11 = tpu.matmul %8, %9, %cst {dimension_numbers = #tpu.dot_dimension_numbers<[1], [1], [0], [0], [0, 0, 1, 0], [], []>} : vector<8x8xf32>, vector<8x8xf32>, vector<8x8xf32> -> vector<8x8xf32>
    %cst_9 = arith.constant 0.353553385 : f32
    %12 = vector.broadcast %cst_9 : f32 to vector<8x8xf32>
    %13 = arith.mulf %11, %12 : vector<8x8xf32>
    %cst_10 = arith.constant 0.000000e+00 : f32
    %14 = vector.broadcast %cst_10 : f32 to vector<1x8xf32>
    %15 = arith.cmpf oeq, %7, %14 : vector<1x8xf32>
    %cst_11 = arith.constant -1.000000e+10 : f32
    %16 = vector.shape_cast %15 : vector<1x8xi1> to vector<1x8xi1>
    %17 = vector.broadcast %16 : vector<1x8xi1> to vector<8x8xi1>
    %18 = vector.broadcast %cst_11 : f32 to vector<8x8xf32>
    %19 = arith.select %17, %18, %13 : vector<8x8xi1>, vector<8x8xf32>
    %cst_12 = arith.constant dense<0xFF800000> : vector<8xf32>
    %20 = vector.multi_reduction <maximumf>, %19, %cst_12 [1] : vector<8x8xf32> to vector<8xf32>
    %21 = vector.shape_cast %20 : vector<8xf32> to vector<8x1xf32>
    %22 = vector.broadcast %21 : vector<8x1xf32> to vector<8x8xf32>
    %23 = arith.subf %19, %22 : vector<8x8xf32>
    %24 = math.exp %23 : vector<8x8xf32>
    %cst_13 = arith.constant dense<0.000000e+00> : vector<8xf32>
    %25 = vector.multi_reduction <add>, %24, %cst_13 [1] : vector<8x8xf32> to vector<8xf32>
    %26 = vector.shape_cast %25 : vector<8xf32> to vector<8x1xf32>
    %27 = tpu.reciprocal %26 {approx = true} : vector<8x1xf32> -> vector<8x1xf32>
    %28 = vector.broadcast %27 : vector<8x1xf32> to vector<8x8xf32>
    %29 = arith.mulf %24, %28 : vector<8x8xf32>
    %c0_14 = arith.constant 0 : index
    %c0_15 = arith.constant 0 : index
    %c0_16 = arith.constant 0 : index
    %c0_17 = arith.constant 0 : index
    %30 = vector.load %arg5[%c0_14, %c0_15, %c0_16, %c0_17] : memref<1x4x8x8xf32, #tpu.memory_space<vmem>>, vector<1x1x8x8xf32>
    %31 = vector.shape_cast %30 : vector<1x1x8x8xf32> to vector<8x8xf32>
    %32 = vector.shape_cast %29 : vector<8x8xf32> to vector<1x1x8x8xf32>
    tpu.vector_store %arg5[%c0_14, %c0_15, %c0_16, %c0_17], %32 {strides = array<i32>} : memref<1x4x8x8xf32, #tpu.memory_space<vmem>>, vector<1x1x8x8xf32>,
    %cst_18 = arith.constant dense<0.000000e+00> : vector<8x8xf32>
    %33 = tpu.matmul %29, %10, %cst_18 {dimension_numbers = #tpu.dot_dimension_numbers<[1], [0], [0], [1], [0, 0, 1, 1], [], []>} : vector<8x8xf32>, vector<8x8xf32>, vector<8x8xf32> -> vector<8x8xf32>
    %34 = vector.extract_strided_slice %1 {offsets = [0, 8], sizes = [8, 8], strides = [1, 1]} : vector<8x32xf32> to vector<8x8xf32>
    %35 = vector.extract_strided_slice %4 {offsets = [0, 8], sizes = [8, 8], strides = [1, 1]} : vector<8x32xf32> to vector<8x8xf32>
    %36 = vector.extract_strided_slice %5 {offsets = [0, 8], sizes = [8, 8], strides = [1, 1]} : vector<8x32xf32> to vector<8x8xf32>
    %cst_19 = arith.constant dense<0.000000e+00> : vector<8x8xf32>
    %37 = tpu.matmul %34, %35, %cst_19 {dimension_numbers = #tpu.dot_dimension_numbers<[1], [1], [0], [0], [0, 0, 1, 0], [], []>} : vector<8x8xf32>, vector<8x8xf32>, vector<8x8xf32> -> vector<8x8xf32>
    %cst_20 = arith.constant 0.353553385 : f32
    %38 = vector.broadcast %cst_20 : f32 to vector<8x8xf32>
    %39 = arith.mulf %37, %38 : vector<8x8xf32>
    %cst_21 = arith.constant 0.000000e+00 : f32
    %40 = vector.broadcast %cst_21 : f32 to vector<1x8xf32>
    %41 = arith.cmpf oeq, %7, %40 : vector<1x8xf32>
    %cst_22 = arith.constant -1.000000e+10 : f32
    %42 = vector.shape_cast %41 : vector<1x8xi1> to vector<1x8xi1>
    %43 = vector.broadcast %42 : vector<1x8xi1> to vector<8x8xi1>
    %44 = vector.broadcast %cst_22 : f32 to vector<8x8xf32>
    %45 = arith.select %43, %44, %39 : vector<8x8xi1>, vector<8x8xf32>
    %cst_23 = arith.constant dense<0xFF800000> : vector<8xf32>
    %46 = vector.multi_reduction <maximumf>, %45, %cst_23 [1] : vector<8x8xf32> to vector<8xf32>
    %47 = vector.shape_cast %46 : vector<8xf32> to vector<8x1xf32>
    %48 = vector.broadcast %47 : vector<8x1xf32> to vector<8x8xf32>
    %49 = arith.subf %45, %48 : vector<8x8xf32>
    %50 = math.exp %49 : vector<8x8xf32>
    %cst_24 = arith.constant dense<0.000000e+00> : vector<8xf32>
    %51 = vector.multi_reduction <add>, %50, %cst_24 [1] : vector<8x8xf32> to vector<8xf32>
    %52 = vector.shape_cast %51 : vector<8xf32> to vector<8x1xf32>
    %53 = tpu.reciprocal %52 {approx = true} : vector<8x1xf32> -> vector<8x1xf32>
    %54 = vector.broadcast %53 : vector<8x1xf32> to vector<8x8xf32>
    %55 = arith.mulf %50, %54 : vector<8x8xf32>
    %c0_25 = arith.constant 0 : index
    %c1 = arith.constant 1 : index
    %c0_26 = arith.constant 0 : index
    %c0_27 = arith.constant 0 : index
    %56 = vector.load %arg5[%c0_25, %c1, %c0_26, %c0_27] : memref<1x4x8x8xf32, #tpu.memory_space<vmem>>, vector<1x1x8x8xf32>
    %57 = vector.shape_cast %56 : vector<1x1x8x8xf32> to vector<8x8xf32>
    %58 = vector.shape_cast %55 : vector<8x8xf32> to vector<1x1x8x8xf32>
    tpu.vector_store %arg5[%c0_25, %c1, %c0_26, %c0_27], %58 {strides = array<i32>} : memref<1x4x8x8xf32, #tpu.memory_space<vmem>>, vector<1x1x8x8xf32>,
    %cst_28 = arith.constant dense<0.000000e+00> : vector<8x8xf32>
    %59 = tpu.matmul %55, %36, %cst_28 {dimension_numbers = #tpu.dot_dimension_numbers<[1], [0], [0], [1], [0, 0, 1, 1], [], []>} : vector<8x8xf32>, vector<8x8xf32>, vector<8x8xf32> -> vector<8x8xf32>
    %60 = vector.extract_strided_slice %1 {offsets = [0, 16], sizes = [8, 8], strides = [1, 1]} : vector<8x32xf32> to vector<8x8xf32>
    %61 = vector.extract_strided_slice %4 {offsets = [0, 16], sizes = [8, 8], strides = [1, 1]} : vector<8x32xf32> to vector<8x8xf32>
    %62 = vector.extract_strided_slice %5 {offsets = [0, 16], sizes = [8, 8], strides = [1, 1]} : vector<8x32xf32> to vector<8x8xf32>
    %cst_29 = arith.constant dense<0.000000e+00> : vector<8x8xf32>
    %63 = tpu.matmul %60, %61, %cst_29 {dimension_numbers = #tpu.dot_dimension_numbers<[1], [1], [0], [0], [0, 0, 1, 0], [], []>} : vector<8x8xf32>, vector<8x8xf32>, vector<8x8xf32> -> vector<8x8xf32>
    %cst_30 = arith.constant 0.353553385 : f32
    %64 = vector.broadcast %cst_30 : f32 to vector<8x8xf32>
    %65 = arith.mulf %63, %64 : vector<8x8xf32>
    %cst_31 = arith.constant 0.000000e+00 : f32
    %66 = vector.broadcast %cst_31 : f32 to vector<1x8xf32>
    %67 = arith.cmpf oeq, %7, %66 : vector<1x8xf32>
    %cst_32 = arith.constant -1.000000e+10 : f32
    %68 = vector.shape_cast %67 : vector<1x8xi1> to vector<1x8xi1>
    %69 = vector.broadcast %68 : vector<1x8xi1> to vector<8x8xi1>
    %70 = vector.broadcast %cst_32 : f32 to vector<8x8xf32>
    %71 = arith.select %69, %70, %65 : vector<8x8xi1>, vector<8x8xf32>
    %cst_33 = arith.constant dense<0xFF800000> : vector<8xf32>
    %72 = vector.multi_reduction <maximumf>, %71, %cst_33 [1] : vector<8x8xf32> to vector<8xf32>
    %73 = vector.shape_cast %72 : vector<8xf32> to vector<8x1xf32>
    %74 = vector.broadcast %73 : vector<8x1xf32> to vector<8x8xf32>
    %75 = arith.subf %71, %74 : vector<8x8xf32>
    %76 = math.exp %75 : vector<8x8xf32>
    %cst_34 = arith.constant dense<0.000000e+00> : vector<8xf32>
    %77 = vector.multi_reduction <add>, %76, %cst_34 [1] : vector<8x8xf32> to vector<8xf32>
    %78 = vector.shape_cast %77 : vector<8xf32> to vector<8x1xf32>
    %79 = tpu.reciprocal %78 {approx = true} : vector<8x1xf32> -> vector<8x1xf32>
    %80 = vector.broadcast %79 : vector<8x1xf32> to vector<8x8xf32>
    %81 = arith.mulf %76, %80 : vector<8x8xf32>
    %c0_35 = arith.constant 0 : index
    %c2 = arith.constant 2 : index
    %c0_36 = arith.constant 0 : index
    %c0_37 = arith.constant 0 : index
    %82 = vector.load %arg5[%c0_35, %c2, %c0_36, %c0_37] : memref<1x4x8x8xf32, #tpu.memory_space<vmem>>, vector<1x1x8x8xf32>
    %83 = vector.shape_cast %82 : vector<1x1x8x8xf32> to vector<8x8xf32>
    %84 = vector.shape_cast %81 : vector<8x8xf32> to vector<1x1x8x8xf32>
    tpu.vector_store %arg5[%c0_35, %c2, %c0_36, %c0_37], %84 {strides = array<i32>} : memref<1x4x8x8xf32, #tpu.memory_space<vmem>>, vector<1x1x8x8xf32>,
    %cst_38 = arith.constant dense<0.000000e+00> : vector<8x8xf32>
    %85 = tpu.matmul %81, %62, %cst_38 {dimension_numbers = #tpu.dot_dimension_numbers<[1], [0], [0], [1], [0, 0, 1, 1], [], []>} : vector<8x8xf32>, vector<8x8xf32>, vector<8x8xf32> -> vector<8x8xf32>
    %86 = vector.extract_strided_slice %1 {offsets = [0, 24], sizes = [8, 8], strides = [1, 1]} : vector<8x32xf32> to vector<8x8xf32>
    %87 = vector.extract_strided_slice %4 {offsets = [0, 24], sizes = [8, 8], strides = [1, 1]} : vector<8x32xf32> to vector<8x8xf32>
    %88 = vector.extract_strided_slice %5 {offsets = [0, 24], sizes = [8, 8], strides = [1, 1]} : vector<8x32xf32> to vector<8x8xf32>
    %cst_39 = arith.constant dense<0.000000e+00> : vector<8x8xf32>
    %89 = tpu.matmul %86, %87, %cst_39 {dimension_numbers = #tpu.dot_dimension_numbers<[1], [1], [0], [0], [0, 0, 1, 0], [], []>} : vector<8x8xf32>, vector<8x8xf32>, vector<8x8xf32> -> vector<8x8xf32>
    %cst_40 = arith.constant 0.353553385 : f32
    %90 = vector.broadcast %cst_40 : f32 to vector<8x8xf32>
    %91 = arith.mulf %89, %90 : vector<8x8xf32>
    %cst_41 = arith.constant 0.000000e+00 : f32
    %92 = vector.broadcast %cst_41 : f32 to vector<1x8xf32>
    %93 = arith.cmpf oeq, %7, %92 : vector<1x8xf32>
    %cst_42 = arith.constant -1.000000e+10 : f32
    %94 = vector.shape_cast %93 : vector<1x8xi1> to vector<1x8xi1>
    %95 = vector.broadcast %94 : vector<1x8xi1> to vector<8x8xi1>
    %96 = vector.broadcast %cst_42 : f32 to vector<8x8xf32>
    %97 = arith.select %95, %96, %91 : vector<8x8xi1>, vector<8x8xf32>
    %cst_43 = arith.constant dense<0xFF800000> : vector<8xf32>
    %98 = vector.multi_reduction <maximumf>, %97, %cst_43 [1] : vector<8x8xf32> to vector<8xf32>
    %99 = vector.shape_cast %98 : vector<8xf32> to vector<8x1xf32>
    %100 = vector.broadcast %99 : vector<8x1xf32> to vector<8x8xf32>
    %101 = arith.subf %97, %100 : vector<8x8xf32>
    %102 = math.exp %101 : vector<8x8xf32>
    %cst_44 = arith.constant dense<0.000000e+00> : vector<8xf32>
    %103 = vector.multi_reduction <add>, %102, %cst_44 [1] : vector<8x8xf32> to vector<8xf32>
    %104 = vector.shape_cast %103 : vector<8xf32> to vector<8x1xf32>
    %105 = tpu.reciprocal %104 {approx = true} : vector<8x1xf32> -> vector<8x1xf32>
    %106 = vector.broadcast %105 : vector<8x1xf32> to vector<8x8xf32>
    %107 = arith.mulf %102, %106 : vector<8x8xf32>
    %c0_45 = arith.constant 0 : index
    %c3 = arith.constant 3 : index
    %c0_46 = arith.constant 0 : index
    %c0_47 = arith.constant 0 : index
    %108 = vector.load %arg5[%c0_45, %c3, %c0_46, %c0_47] : memref<1x4x8x8xf32, #tpu.memory_space<vmem>>, vector<1x1x8x8xf32>
    %109 = vector.shape_cast %108 : vector<1x1x8x8xf32> to vector<8x8xf32>
    %110 = vector.shape_cast %107 : vector<8x8xf32> to vector<1x1x8x8xf32>
    tpu.vector_store %arg5[%c0_45, %c3, %c0_46, %c0_47], %110 {strides = array<i32>} : memref<1x4x8x8xf32, #tpu.memory_space<vmem>>, vector<1x1x8x8xf32>,
    %cst_48 = arith.constant dense<0.000000e+00> : vector<8x8xf32>
    %111 = tpu.matmul %107, %88, %cst_48 {dimension_numbers = #tpu.dot_dimension_numbers<[1], [0], [0], [1], [0, 0, 1, 1], [], []>} : vector<8x8xf32>, vector<8x8xf32>, vector<8x8xf32> -> vector<8x8xf32>
    %112 = tpu.concatenate %33, %59, %85, %111 in 1 : vector<8x8xf32>, vector<8x8xf32>, vector<8x8xf32>, vector<8x8xf32> -> vector<8x32xf32>
    %c0_49 = arith.constant 0 : index
    %c0_50 = arith.constant 0 : index
    %c0_51 = arith.constant 0 : index
    %113 = vector.load %arg4[%c0_49, %c0_50, %c0_51] : memref<1x8x32xf32, #tpu.memory_space<vmem>>, vector<1x8x32xf32>
    %114 = vector.shape_cast %113 : vector<1x8x32xf32> to vector<8x32xf32>
    %115 = vector.shape_cast %112 : vector<8x32xf32> to vector<1x8x32xf32>
    tpu.vector_store %arg4[%c0_49, %c0_50, %c0_51], %115 {strides = array<i32>} : memref<1x8x32xf32, #tpu.memory_space<vmem>>, vector<1x8x32xf32>,
    return
  }
  func.func @transform_0(%arg0: i32) -> (i32, i32, i32) {
    %c0_i32 = arith.constant 0 : i32
    %c0_i32_0 = arith.constant 0 : i32
    %c0_i32_1 = arith.constant 0 : i32
    return %arg0, %c0_i32, %c0_i32_0 : i32, i32, i32
  }
  func.func @transform_1(%arg0: i32) -> (i32, i32, i32) {
    %c0_i32 = arith.constant 0 : i32
    %c0_i32_0 = arith.constant 0 : i32
    %c0_i32_1 = arith.constant 0 : i32
    return %arg0, %c0_i32, %c0_i32_0 : i32, i32, i32
  }
  func.func @transform_2(%arg0: i32) -> (i32, i32, i32, i32) {
    %c0_i32 = arith.constant 0 : i32
    %c0_i32_0 = arith.constant 0 : i32
    %c0_i32_1 = arith.constant 0 : i32
    %c0_i32_2 = arith.constant 0 : i32
    return %arg0, %c0_i32, %c0_i32_0, %c0_i32_1 : i32, i32, i32, i32
  }
  func.func @transform_3(%arg0: i32) -> (i32, i32, i32) {
    %c0_i32 = arith.constant 0 : i32
    %c0_i32_0 = arith.constant 0 : i32
    %c0_i32_1 = arith.constant 0 : i32
    return %arg0, %c0_i32, %c0_i32_0 : i32, i32, i32
  }
  func.func @transform_4(%arg0: i32) -> (i32, i32, i32, i32) {
    %c0_i32 = arith.constant 0 : i32
    %c0_i32_0 = arith.constant 0 : i32
    %c0_i32_1 = arith.constant 0 : i32
    %c0_i32_2 = arith.constant 0 : i32
    return %arg0, %c0_i32, %c0_i32_0, %c0_i32_1 : i32, i32, i32, i32
  }
}

module attributes {stable_mosaic.version = 11 : i64} {
  func.func @linear_kernel(%arg0: i32, %arg1: memref<16x32xf32, #tpu.memory_space<vmem>>, %arg2: memref<32x64xf32, #tpu.memory_space<vmem>>, %arg3: memref<1x64xf32, #tpu.memory_space<vmem>>, %arg4: memref<16x64xf32, #tpu.memory_space<vmem>>) attributes {dimension_semantics = [#tpu.dimension_semantics<parallel>], iteration_bounds = array<i64: 1>, scalar_prefetch = 0 : i64, scratch_operands = 0 : i64, tpu.core_type = #tpu.core_type<tc>, window_params = [{transform_indices = @transform_0, window_bounds = array<i64: 16, 32>}, {pipeline_mode = #tpu.pipeline_mode<synchronous>, transform_indices = @transform_1, window_bounds = array<i64: 32, 64>}, {pipeline_mode = #tpu.pipeline_mode<synchronous>, transform_indices = @transform_2, window_bounds = array<i64: 1, 64>}, {transform_indices = @transform_3, window_bounds = array<i64: 16, 64>}]} {
    %c0 = arith.constant 0 : index
    %c0_0 = arith.constant 0 : index
    %0 = vector.load %arg1[%c0, %c0_0] : memref<16x32xf32, #tpu.memory_space<vmem>>, vector<16x32xf32>
    %c0_1 = arith.constant 0 : index
    %c0_2 = arith.constant 0 : index
    %1 = vector.load %arg2[%c0_1, %c0_2] : memref<32x64xf32, #tpu.memory_space<vmem>>, vector<32x64xf32>
    %cst = arith.constant dense<0.000000e+00> : vector<16x64xf32>
    %2 = tpu.matmul %0, %1, %cst {dimension_numbers = #tpu.dot_dimension_numbers<[1], [0], [0], [1], [0, 0, 1, 1], [], []>} : vector<16x32xf32>, vector<32x64xf32>, vector<16x64xf32> -> vector<16x64xf32>
    %c0_3 = arith.constant 0 : index
    %c0_4 = arith.constant 0 : index
    %3 = vector.load %arg3[%c0_3, %c0_4] : memref<1x64xf32, #tpu.memory_space<vmem>>, vector<1x64xf32>
    %4 = vector.broadcast %3 : vector<1x64xf32> to vector<16x64xf32>
    %5 = arith.addf %2, %4 : vector<16x64xf32>
    %c0_5 = arith.constant 0 : index
    %c0_6 = arith.constant 0 : index
    %6 = vector.load %arg4[%c0_5, %c0_6] : memref<16x64xf32, #tpu.memory_space<vmem>>, vector<16x64xf32>
    tpu.vector_store %arg4[%c0_5, %c0_6], %5 {strides = array<i32>} : memref<16x64xf32, #tpu.memory_space<vmem>>, vector<16x64xf32>,
    return
  }
  func.func @transform_0(%arg0: i32) -> (i32, i32) {
    %c0_i32 = arith.constant 0 : i32
    %c0_i32_0 = arith.constant 0 : i32
    return %arg0, %c0_i32 : i32, i32
  }
  func.func @transform_1(%arg0: i32) -> (i32, i32) {
    %c0_i32 = arith.constant 0 : i32
    %c0_i32_0 = arith.constant 0 : i32
    %c0_i32_1 = arith.constant 0 : i32
    return %c0_i32, %c0_i32_0 : i32, i32
  }
  func.func @transform_2(%arg0: i32) -> (i32, i32) {
    %c0_i32 = arith.constant 0 : i32
    %c0_i32_0 = arith.constant 0 : i32
    %c0_i32_1 = arith.constant 0 : i32
    return %c0_i32, %c0_i32_0 : i32, i32
  }
  func.func @transform_3(%arg0: i32) -> (i32, i32) {
    %c0_i32 = arith.constant 0 : i32
    %c0_i32_0 = arith.constant 0 : i32
    return %arg0, %c0_i32 : i32, i32
  }
}

</mosaic_0001>

<llo_original>
// kernel: decoder_layer.8
$region0: #{decoder_layer.8}
  #allocation0 [shape = 'u32[]', space=smem, size = 0x4, offset = 0x4, fixed_abs, tag = 'smem constant byte address 0x4 - core index']
  #allocation1 [shape = 'u32[144,128]{1,0:T(1,128)}', space=vmem, size = 0x12000, scoped, tag = 'internal scratch']
  %s0 = inlined_call_operand.hbm [shape: f32[16,32], index: 0, kind: input, shape index: {}]
  %s1 = inlined_call_operand.vmem [shape: f32[32,96], index: 1, kind: input, shape index: {}]
  %s2 = inlined_call_operand.vmem [shape: f32[1,96], index: 2, kind: input, shape index: {}]
  %s3 = inlined_call_operand.vmem [shape: f32[16,96], index: 3, kind: output, shape index: {}]
  %s4 = sld [smem:[#allocation0]]
  $region26: #{decoder_layer.8} parent=0
    _
  %s6 = ssub.s32 1, %s4
  %s7 = scalar_select 0, %s6, %s4
  $region1: #{decoder_layer.8} parent=0
    #allocation2 [shape = 'u8[8192]{0}', space=vmem, size = 0x2000, scoped, tag = 'input window, operand 0, single buffered']
    #allocation3 [shape = 's32[1]{0}', space=sflag, size = 0x4, scoped, tag = 'scoped memory for decoder_layer.8']
    %8 = vsyncpa [#allocation3], 0
    // Predicated region
    $region2: #{decoder_layer.8} parent=1 // pred_check
      _
    $region3: #{decoder_layer.8} parent=1 // pred_check_branch
      %10 = sbr.rel (0) target = $region5
    $region4: #{decoder_layer.8} parent=1 // pred_region
      %s12 = ssub.s32 256, 256
      %13 = vsyncadd [#allocation3], %s12
      %s14 = sshll.u32 [#allocation2], 4
      %s15 = int_to_ptr.vmem [resolvable:$true] %s14
      %20 = dma.hbm_to_vmem [thread:$0]  %s0, 256, %s15, [#allocation3], 128, 128, 8
    $region5: #{decoder_layer.8} parent=1 // pred_fallthru
      _
    // Predicated region
    $region6: #{decoder_layer.8} parent=1 // pred_check
      _
    $region7: #{decoder_layer.8} parent=1 // pred_check_branch
      %22 = sbr.rel (0) target = $region9
    $region8: #{decoder_layer.8} parent=1 // pred_region
      _
    $region9: #{decoder_layer.8} parent=1 // pred_fallthru
      _
    // Predicated region
    $region10: #{decoder_layer.8} parent=1 // pred_check
      _
    $region11: #{decoder_layer.8} parent=1 // pred_check_branch
      %24 = sbr.rel (0) target = $region13
    $region12: #{decoder_layer.8} parent=1 // pred_region
      _
    $region13: #{decoder_layer.8} parent=1 // pred_fallthru
      _
    // Predicated region
    $region14: #{decoder_layer.8} parent=1 // pred_check
      _
    $region15: #{decoder_layer.8} parent=1 // pred_check_branch
      %26 = sbr.rel (0) target = $region17
    $region16: #{decoder_layer.8} parent=1 // pred_region
      %27 = dma.done [#allocation3], 256
    $region17: #{decoder_layer.8} parent=1 // pred_fallthru
      _
    %v28 = vld [vmem:[#allocation2] sm:$0xff]
    %v29 = vld [vmem:[#allocation2 + $0x8] sm:$0xff]
    %v30 = vld [vmem:[%s1] sm:$0xff]
    %v31 = vld [vmem:[%s1 + $0x8] sm:$0xff]
    %v32 = vld [vmem:[%s1 + $0x10] sm:$0xff]
    %v33 = vld [vmem:[%s1 + $0x18] sm:$0xff]
    %v34 = vld [vmem:[%s2] sm:$0x1]
    %v36 = vlaneseq
    %v37 = vshrl.u32 %v36, 7
    %v38 = vsub.s32 0, %v37
    %v39 = vrot.slane %v34, %v38
    %vm41 = vcmask 261120
    %v43 = vsel %vm41, %v28, 0
    %v46 = vsel %vm41, %v29, 0
    %48 = vmatprep.subr.mxu0 0.0
    %49 = vmatpush1.msra.mxu0 %v30
    %50 = vmatprep.subr.mxu0 0.0
    %51 = vmatpush1.msra.mxu0 %v31
    %52 = vmatprep.subr.mxu0 0.0
    %53 = vmatpush1.msra.mxu0 %v32
    %54 = vmatprep.subr.mxu0 0.0
    %55 = vmatpush1.msra.mxu0 %v33
    %56 = vmatprep.subr.mxu0 0.0
    %57 = vmatpush1.msra.mxu0 0.0
    %58 = vmatprep.subr.mxu0 0.0
    %59 = vmatpush1.msra.mxu0 0.0
    %60 = vmatprep.subr.mxu0 0.0
    %61 = vmatpush1.msra.mxu0 0.0
    %62 = vmatprep.subr.mxu0 0.0
    %63 = vmatpush1.msra.mxu0 0.0
    %64 = vmatprep.subr.mxu0 0.0
    %65 = vmatpush1.msra.mxu0 0.0
    %66 = vmatprep.subr.mxu0 0.0
    %67 = vmatpush1.msra.mxu0 0.0
    %68 = vmatprep.subr.mxu0 0.0
    %69 = vmatpush1.msra.mxu0 0.0
    %70 = vmatprep.subr.mxu0 0.0
    %71 = vmatpush1.msra.mxu0 0.0
    %72 = vmatprep.subr.mxu0 0.0
    %73 = vmatpush1.msra.mxu0 0.0
    %74 = vmatprep.subr.mxu0 0.0
    %75 = vmatpush1.msra.mxu0 0.0
    %76 = vmatprep.subr.mxu0 0.0
    %77 = vmatpush1.msra.mxu0 0.0
    %78 = vmatprep.subr.mxu0 0.0
    %79 = vmatpush1.msra.mxu0 0.0
    %80 = vmatprep.subr.mxu0 0.0
    %81 = vmatpush1.msra.mxu0 0.0
    %82 = vmatprep.subr.mxu0 0.0
    %83 = vmatpush1.msra.mxu0 0.0
    %84 = vmatprep.subr.mxu0 0.0
    %85 = vmatpush1.msra.mxu0 0.0
    %86 = vmatprep.subr.mxu0 0.0
    %87 = vmatpush1.msra.mxu0 0.0
    %88 = vmatprep.subr.mxu0 0.0
    %89 = vmatpush1.msra.mxu0 0.0
    %90 = vmatprep.subr.mxu0 0.0
    %91 = vmatpush1.msra.mxu0 0.0
    %92 = vmatprep.subr.mxu0 0.0
    %93 = vmatpush1.msra.mxu0 0.0
    %94 = vmatprep.subr.mxu0 0.0
    %95 = vmatpush1.msra.mxu0 0.0
    %96 = vmatprep.subr.mxu0 0.0
    %97 = vmatpush1.msra.mxu0 0.0
    %98 = vmatprep.subr.mxu0 0.0
    %99 = vmatpush1.msra.mxu0 0.0
    %100 = vmatprep.subr.mxu0 0.0
    %101 = vmatpush1.msra.mxu0 0.0
    %102 = vmatprep.subr.mxu0 0.0
    %103 = vmatpush1.msra.mxu0 0.0
    %104 = vmatprep.subr.mxu0 0.0
    %105 = vmatpush1.msra.mxu0 0.0
    %106 = vmatprep.subr.mxu0 0.0
    %107 = vmatpush1.msra.mxu0 0.0
    %108 = vmatprep.subr.mxu0 0.0
    %109 = vmatpush1.msra.mxu0 0.0
    %110 = vmatprep.subr.mxu0 0.0
    %111 = vmatpush1.msra.mxu0 0.0
    %112 = vmatprep.mubr.f32.mxu0 0.0
    %113 = vmatmul.mubr.f32.gmra.mrb[0].mxu0 %v43
    %v114 = vpop.f32.mrb[0].mxu0
    %v115 = vadd.f32 %v39, %v114
    %v116 = vpop.f32.mrb[0].mxu0
    %117 = vmatprep.mubr.f32.mxu0 0.0
    %118 = vmatmul.mubr.f32.gmra.mrb[0].mxu0 %v46
    %v119 = vpop.f32.mrb[0].mxu0
    %v120 = vadd.f32 %v39, %v119
    %v121 = vpop.f32.mrb[0].mxu0
    %122 = vdwg.mxu0
    %vm123 = vcmask 785408
    %124 = vst.msk [vmem:[%s3] sm:$0xff] %vm123, %v115
    %125 = vst.msk [vmem:[%s3 + $0x8] sm:$0xff] %vm123, %v120
    // Predicated region
    $region18: #{decoder_layer.8} parent=1 // pred_check
      _
    $region19: #{decoder_layer.8} parent=1 // pred_check_branch
      %127 = sbr.rel (0) target = $region21
    $region20: #{decoder_layer.8} parent=1 // pred_region
      _
    $region21: #{decoder_layer.8} parent=1 // pred_fallthru
      _
    // Predicated region
    $region22: #{decoder_layer.8} parent=1 // pred_check
      _
    $region23: #{decoder_layer.8} parent=1 // pred_check_branch
      %129 = sbr.rel (0) target = $region25
    $region24: #{decoder_layer.8} parent=1 // pred_region
      _
    $region25: #{decoder_layer.8} parent=1 // pred_fallthru
      _
    %130 = vsyncpa [#allocation3], 1

// kernel: decoder_layer.11
$region0: #{decoder_layer.11}
  #allocation0 [shape = 'u32[]', space=smem, size = 0x4, offset = 0x4, fixed_abs, tag = 'smem constant byte address 0x4 - core index']
  #allocation1 [shape = 'u32[144,128]{1,0:T(1,128)}', space=vmem, size = 0x12000, scoped, tag = 'internal scratch']
  %s0 = inlined_call_operand.vmem [shape: f32[16,32], index: 0, kind: input, shape index: {}]
  %s1 = inlined_call_operand.vmem [shape: f32[32,32], index: 1, kind: input, shape index: {}]
  %s2 = inlined_call_operand.vmem [shape: f32[1,32], index: 2, kind: input, shape index: {}]
  %s3 = inlined_call_operand.vmem [shape: f32[16,32], index: 3, kind: output, shape index: {}]
  %s4 = sld [smem:[#allocation0]]
  $region22: #{decoder_layer.11} parent=0
    _
  %s6 = ssub.s32 1, %s4
  %s7 = scalar_select 0, %s6, %s4
  // Predicated region
  $region2: #{decoder_layer.11} parent=0 // pred_check
    _
  $region3: #{decoder_layer.11} parent=0 // pred_check_branch
    %9 = sbr.rel (0) target = $region5
  $region4: #{decoder_layer.11} parent=0 // pred_region
    _
  $region5: #{decoder_layer.11} parent=0 // pred_fallthru
    _
  // Predicated region
  $region6: #{decoder_layer.11} parent=0 // pred_check
    _
  $region7: #{decoder_layer.11} parent=0 // pred_check_branch
    %11 = sbr.rel (0) target = $region9
  $region8: #{decoder_layer.11} parent=0 // pred_region
    _
  $region9: #{decoder_layer.11} parent=0 // pred_fallthru
    _
  // Predicated region
  $region10: #{decoder_layer.11} parent=0 // pred_check
    _
  $region11: #{decoder_layer.11} parent=0 // pred_check_branch
    %13 = sbr.rel (0) target = $region13
  $region12: #{decoder_layer.11} parent=0 // pred_region
    _
  $region13: #{decoder_layer.11} parent=0 // pred_fallthru
    _
  %v14 = vld [vmem:[%s0] sm:$0xff]
  %v15 = vld [vmem:[%s0 + $0x8] sm:$0xff]
  %v16 = vld [vmem:[%s1] sm:$0xff]
  %v17 = vld [vmem:[%s1 + $0x8] sm:$0xff]
  %v18 = vld [vmem:[%s1 + $0x10] sm:$0xff]
  %v19 = vld [vmem:[%s1 + $0x18] sm:$0xff]
  %v20 = vld [vmem:[%s2] sm:$0x1]
  %v22 = vlaneseq
  %v23 = vshrl.u32 %v22, 7
  %v24 = vsub.s32 0, %v23
  %v25 = vrot.slane %v20, %v24
  %vm27 = vcmask 261120
  %v29 = vsel %vm27, %v14, 0
  %v32 = vsel %vm27, %v15, 0
  %34 = vmatprep.subr.mxu0 0.0
  %35 = vmatpush1.msra.mxu0 %v16
  %36 = vmatprep.subr.mxu0 0.0
  %37 = vmatpush1.msra.mxu0 %v17
  %38 = vmatprep.subr.mxu0 0.0
  %39 = vmatpush1.msra.mxu0 %v18
  %40 = vmatprep.subr.mxu0 0.0
  %41 = vmatpush1.msra.mxu0 %v19
  %42 = vmatprep.subr.mxu0 0.0
  %43 = vmatpush1.msra.mxu0 0.0
  %44 = vmatprep.subr.mxu0 0.0
  %45 = vmatpush1.msra.mxu0 0.0
  %46 = vmatprep.subr.mxu0 0.0
  %47 = vmatpush1.msra.mxu0 0.0
  %48 = vmatprep.subr.mxu0 0.0
  %49 = vmatpush1.msra.mxu0 0.0
  %50 = vmatprep.subr.mxu0 0.0
  %51 = vmatpush1.msra.mxu0 0.0
  %52 = vmatprep.subr.mxu0 0.0
  %53 = vmatpush1.msra.mxu0 0.0
  %54 = vmatprep.subr.mxu0 0.0
  %55 = vmatpush1.msra.mxu0 0.0
  %56 = vmatprep.subr.mxu0 0.0
  %57 = vmatpush1.msra.mxu0 0.0
  %58 = vmatprep.subr.mxu0 0.0
  %59 = vmatpush1.msra.mxu0 0.0
  %60 = vmatprep.subr.mxu0 0.0
  %61 = vmatpush1.msra.mxu0 0.0
  %62 = vmatprep.subr.mxu0 0.0
  %63 = vmatpush1.msra.mxu0 0.0
  %64 = vmatprep.subr.mxu0 0.0
  %65 = vmatpush1.msra.mxu0 0.0
  %66 = vmatprep.subr.mxu0 0.0
  %67 = vmatpush1.msra.mxu0 0.0
  %68 = vmatprep.subr.mxu0 0.0
  %69 = vmatpush1.msra.mxu0 0.0
  %70 = vmatprep.subr.mxu0 0.0
  %71 = vmatpush1.msra.mxu0 0.0
  %72 = vmatprep.subr.mxu0 0.0
  %73 = vmatpush1.msra.mxu0 0.0
  %74 = vmatprep.subr.mxu0 0.0
  %75 = vmatpush1.msra.mxu0 0.0
  %76 = vmatprep.subr.mxu0 0.0
  %77 = vmatpush1.msra.mxu0 0.0
  %78 = vmatprep.subr.mxu0 0.0
  %79 = vmatpush1.msra.mxu0 0.0
  %80 = vmatprep.subr.mxu0 0.0
  %81 = vmatpush1.msra.mxu0 0.0
  %82 = vmatprep.subr.mxu0 0.0
  %83 = vmatpush1.msra.mxu0 0.0
  %84 = vmatprep.subr.mxu0 0.0
  %85 = vmatpush1.msra.mxu0 0.0
  %86 = vmatprep.subr.mxu0 0.0
  %87 = vmatpush1.msra.mxu0 0.0
  %88 = vmatprep.subr.mxu0 0.0
  %89 = vmatpush1.msra.mxu0 0.0
  %90 = vmatprep.subr.mxu0 0.0
  %91 = vmatpush1.msra.mxu0 0.0
  %92 = vmatprep.subr.mxu0 0.0
  %93 = vmatpush1.msra.mxu0 0.0
  %94 = vmatprep.subr.mxu0 0.0
  %95 = vmatpush1.msra.mxu0 0.0
  %96 = vmatprep.subr.mxu0 0.0
  %97 = vmatpush1.msra.mxu0 0.0
  %98 = vmatprep.mubr.f32.mxu0 0.0
  %99 = vmatmul.mubr.f32.gmra.mrb[0].mxu0 %v29
  %v100 = vpop.f32.mrb[0].mxu0
  %v101 = vadd.f32 %v25, %v100
  %v102 = vpop.f32.mrb[0].mxu0
  %103 = vmatprep.mubr.f32.mxu0 0.0
  %104 = vmatmul.mubr.f32.gmra.mrb[0].mxu0 %v32
  %v105 = vpop.f32.mrb[0].mxu0
  %v106 = vadd.f32 %v25, %v105
  %v107 = vpop.f32.mrb[0].mxu0
  %108 = vdwg.mxu0
  %109 = vst.msk [vmem:[%s3] sm:$0xff] %vm27, %v101
  %110 = vst.msk [vmem:[%s3 + $0x8] sm:$0xff] %vm27, %v106
  // Predicated region
  $region14: #{decoder_layer.11} parent=0 // pred_check
    _
  $region15: #{decoder_layer.11} parent=0 // pred_check_branch
    %112 = sbr.rel (0) target = $region17
  $region16: #{decoder_layer.11} parent=0 // pred_region
    _
  $region17: #{decoder_layer.11} parent=0 // pred_fallthru
    _
  // Predicated region
  $region18: #{decoder_layer.11} parent=0 // pred_check
    _
  $region19: #{decoder_layer.11} parent=0 // pred_check_branch
    %114 = sbr.rel (0) target = $region21
  $region20: #{decoder_layer.11} parent=0 // pred_region
    _
  $region21: #{decoder_layer.11} parent=0 // pred_fallthru
    _

// kernel: decoder_layer.10
$region0: #{decoder_layer.10}
  #allocation0 [shape = 'u32[]', space=smem, size = 0x4, offset = 0x4, fixed_abs, tag = 'smem constant byte address 0x4 - core index']
  #allocation1 [shape = 'u32[144,128]{1,0:T(1,128)}', space=vmem, size = 0x12000, scoped, tag = 'internal scratch']
  %s0 = inlined_call_operand.vmem [shape: f32[16,32], index: 0, kind: input, shape index: {}]
  %s1 = inlined_call_operand.vmem [shape: f32[32,32], index: 1, kind: input, shape index: {}]
  %s2 = inlined_call_operand.vmem [shape: f32[1,32], index: 2, kind: input, shape index: {}]
  %s3 = inlined_call_operand.vmem [shape: f32[16,32], index: 3, kind: input, shape index: {}]
  %s4 = inlined_call_operand.vmem [shape: f32[1,32], index: 4, kind: input, shape index: {}]
  %s5 = inlined_call_operand.vmem [shape: f32[1,32], index: 5, kind: input, shape index: {}]
  %s6 = inlined_call_operand.vmem [shape: f32[16,32], index: 6, kind: output, shape index: {}]
  %s7 = sld [smem:[#allocation0]]
  $region34: #{decoder_layer.10} parent=0
    _
  %s9 = ssub.s32 1, %s7
  %s10 = scalar_select 0, %s9, %s7
  // Predicated region
  $region2: #{decoder_layer.10} parent=0 // pred_check
    _
  $region3: #{decoder_layer.10} parent=0 // pred_check_branch
    %12 = sbr.rel (0) target = $region5
  $region4: #{decoder_layer.10} parent=0 // pred_region
    _
  $region5: #{decoder_layer.10} parent=0 // pred_fallthru
    _
  // Predicated region
  $region6: #{decoder_layer.10} parent=0 // pred_check
    _
  $region7: #{decoder_layer.10} parent=0 // pred_check_branch
    %14 = sbr.rel (0) target = $region9
  $region8: #{decoder_layer.10} parent=0 // pred_region
    _
  $region9: #{decoder_layer.10} parent=0 // pred_fallthru
    _
  // Predicated region
  $region10: #{decoder_layer.10} parent=0 // pred_check
    _
  $region11: #{decoder_layer.10} parent=0 // pred_check_branch
    %16 = sbr.rel (0) target = $region13
  $region12: #{decoder_layer.10} parent=0 // pred_region
    _
  $region13: #{decoder_layer.10} parent=0 // pred_fallthru
    _
  // Predicated region
  $region14: #{decoder_layer.10} parent=0 // pred_check
    _
  $region15: #{decoder_layer.10} parent=0 // pred_check_branch
    %18 = sbr.rel (0) target = $region17
  $region16: #{decoder_layer.10} parent=0 // pred_region
    _
  $region17: #{decoder_layer.10} parent=0 // pred_fallthru
    _
  // Predicated region
  $region18: #{decoder_layer.10} parent=0 // pred_check
    _
  $region19: #{decoder_layer.10} parent=0 // pred_check_branch
    %20 = sbr.rel (0) target = $region21
  $region20: #{decoder_layer.10} parent=0 // pred_region
    _
  $region21: #{decoder_layer.10} parent=0 // pred_fallthru
    _
  // Predicated region
  $region22: #{decoder_layer.10} parent=0 // pred_check
    _
  $region23: #{decoder_layer.10} parent=0 // pred_check_branch
    %22 = sbr.rel (0) target = $region25
  $region24: #{decoder_layer.10} parent=0 // pred_region
    _
  $region25: #{decoder_layer.10} parent=0 // pred_fallthru
    _
  %v23 = vld [vmem:[%s0] sm:$0xff]
  %v24 = vld [vmem:[%s0 + $0x8] sm:$0xff]
  %v25 = vld [vmem:[%s1] sm:$0xff]
  %v26 = vld [vmem:[%s1 + $0x8] sm:$0xff]
  %v27 = vld [vmem:[%s1 + $0x10] sm:$0xff]
  %v28 = vld [vmem:[%s1 + $0x18] sm:$0xff]
  %v29 = vld [vmem:[%s2] sm:$0x1]
  %v31 = vlaneseq
  %v32 = vshrl.u32 %v31, 7
  %v33 = vsub.s32 0, %v32
  %v34 = vrot.slane %v29, %v33
  %vm36 = vcmask 261120
  %v38 = vsel %vm36, %v23, 0
  %v41 = vsel %vm36, %v24, 0
  %43 = vmatprep.subr.mxu0 0.0
  %44 = vmatpush1.msra.mxu0 %v25
  %45 = vmatprep.subr.mxu0 0.0
  %46 = vmatpush1.msra.mxu0 %v26
  %47 = vmatprep.subr.mxu0 0.0
  %48 = vmatpush1.msra.mxu0 %v27
  %49 = vmatprep.subr.mxu0 0.0
  %50 = vmatpush1.msra.mxu0 %v28
  %51 = vmatprep.subr.mxu0 0.0
  %52 = vmatpush1.msra.mxu0 0.0
  %53 = vmatprep.subr.mxu0 0.0
  %54 = vmatpush1.msra.mxu0 0.0
  %55 = vmatprep.subr.mxu0 0.0
  %56 = vmatpush1.msra.mxu0 0.0
  %57 = vmatprep.subr.mxu0 0.0
  %58 = vmatpush1.msra.mxu0 0.0
  %59 = vmatprep.subr.mxu0 0.0
  %60 = vmatpush1.msra.mxu0 0.0
  %61 = vmatprep.subr.mxu0 0.0
  %62 = vmatpush1.msra.mxu0 0.0
  %63 = vmatprep.subr.mxu0 0.0
  %64 = vmatpush1.msra.mxu0 0.0
  %65 = vmatprep.subr.mxu0 0.0
  %66 = vmatpush1.msra.mxu0 0.0
  %67 = vmatprep.subr.mxu0 0.0
  %68 = vmatpush1.msra.mxu0 0.0
  %69 = vmatprep.subr.mxu0 0.0
  %70 = vmatpush1.msra.mxu0 0.0
  %71 = vmatprep.subr.mxu0 0.0
  %72 = vmatpush1.msra.mxu0 0.0
  %73 = vmatprep.subr.mxu0 0.0
  %74 = vmatpush1.msra.mxu0 0.0
  %75 = vmatprep.subr.mxu0 0.0
  %76 = vmatpush1.msra.mxu0 0.0
  %77 = vmatprep.subr.mxu0 0.0
  %78 = vmatpush1.msra.mxu0 0.0
  %79 = vmatprep.subr.mxu0 0.0
  %80 = vmatpush1.msra.mxu0 0.0
  %81 = vmatprep.subr.mxu0 0.0
  %82 = vmatpush1.msra.mxu0 0.0
  %83 = vmatprep.subr.mxu0 0.0
  %84 = vmatpush1.msra.mxu0 0.0
  %85 = vmatprep.subr.mxu0 0.0
  %86 = vmatpush1.msra.mxu0 0.0
  %87 = vmatprep.subr.mxu0 0.0
  %88 = vmatpush1.msra.mxu0 0.0
  %89 = vmatprep.subr.mxu0 0.0
  %90 = vmatpush1.msra.mxu0 0.0
  %91 = vmatprep.subr.mxu0 0.0
  %92 = vmatpush1.msra.mxu0 0.0
  %93 = vmatprep.subr.mxu0 0.0
  %94 = vmatpush1.msra.mxu0 0.0
  %95 = vmatprep.subr.mxu0 0.0
  %96 = vmatpush1.msra.mxu0 0.0
  %97 = vmatprep.subr.mxu0 0.0
  %98 = vmatpush1.msra.mxu0 0.0
  %99 = vmatprep.subr.mxu0 0.0
  %100 = vmatpush1.msra.mxu0 0.0
  %101 = vmatprep.subr.mxu0 0.0
  %102 = vmatpush1.msra.mxu0 0.0
  %103 = vmatprep.subr.mxu0 0.0
  %104 = vmatpush1.msra.mxu0 0.0
  %105 = vmatprep.subr.mxu0 0.0
  %106 = vmatpush1.msra.mxu0 0.0
  %107 = vmatprep.mubr.f32.mxu0 0.0
  %108 = vmatmul.mubr.f32.gmra.mrb[0].mxu0 %v38
  %v109 = vpop.f32.mrb[0].mxu0
  %v110 = vadd.f32 %v34, %v109
  %v111 = vpop.f32.mrb[0].mxu0
  %112 = vmatprep.mubr.f32.mxu0 0.0
  %113 = vmatmul.mubr.f32.gmra.mrb[0].mxu0 %v41
  %v114 = vpop.f32.mrb[0].mxu0
  %v115 = vadd.f32 %v34, %v114
  %v116 = vpop.f32.mrb[0].mxu0
  %117 = vdwg.mxu0
  %v118 = vld [vmem:[%s3] sm:$0xff]
  %v119 = vld [vmem:[%s3 + $0x8] sm:$0xff]
  %v120 = vadd.f32 %v118, %v110
  %v121 = vadd.f32 %v119, %v115
  %v122 = vsel %vm36, %v120, 0.0
  %123 = vadd.xlane.f32.xlu0 %v122
  %v124 = vpop.xlane.xlu0 %123
  %v125 = vsel %vm36, %v121, 0.0
  %126 = vadd.xlane.f32.xlu0 %v125
  %v127 = vpop.xlane.xlu0 %126
  %v128 = vrcp.pop 32.0
  %v129 = vmul.f32 %v124, %v128
  %v130 = vmul.f32 %v127, %v128
  %v131 = vsub.f32 %v120, %v129
  %v132 = vsub.f32 %v121, %v130
  %v133 = vmul.f32 %v131, %v131
  %v134 = vmul.f32 %v132, %v132
  %v135 = vsel %vm36, %v133, 0.0
  %136 = vadd.xlane.f32.xlu0 %v135
  %v137 = vpop.xlane.xlu0 %136
  %v138 = vsel %vm36, %v134, 0.0
  %139 = vadd.xlane.f32.xlu0 %v138
  %v140 = vpop.xlane.xlu0 %139
  %v141 = vmul.f32 %v137, %v128
  %v142 = vmul.f32 %v140, %v128
  %v143 = vadd.f32 %v141, 1e-05
  %v144 = vadd.f32 %v142, 1e-05
  %v145 = vrsqrt.pop %v143
  %v146 = vrsqrt.pop %v144
  %v147 = vmul.f32 %v131, %v145
  %v148 = vmul.f32 %v132, %v146
  %v149 = vld [vmem:[%s4] sm:$0x1]
  %v151 = vlaneseq
  %v152 = vshrl.u32 %v151, 7
  %v153 = vsub.s32 0, %v152
  %v154 = vrot.slane %v149, %v153
  %v156 = vmul.f32 %v147, %v154
  %v157 = vmul.f32 %v148, %v154
  %v158 = vld [vmem:[%s5] sm:$0x1]
  %v160 = vlaneseq
  %v161 = vshrl.u32 %v160, 7
  %v162 = vsub.s32 0, %v161
  %v163 = vrot.slane %v158, %v162
  %v165 = vadd.f32 %v156, %v163
  %v166 = vadd.f32 %v157, %v163
  %167 = vst.msk [vmem:[%s6] sm:$0xff] %vm36, %v165
  %168 = vst.msk [vmem:[%s6 + $0x8] sm:$0xff] %vm36, %v166
  // Predicated region
  $region26: #{decoder_layer.10} parent=0 // pred_check
    _
  $region27: #{decoder_layer.10} parent=0 // pred_check_branch
    %170 = sbr.rel (0) target = $region29
  $region28: #{decoder_layer.10} parent=0 // pred_region
    _
  $region29: #{decoder_layer.10} parent=0 // pred_fallthru
    _
  // Predicated region
  $region30: #{decoder_layer.10} parent=0 // pred_check
    _
  $region31: #{decoder_layer.10} parent=0 // pred_check_branch
    %172 = sbr.rel (0) target = $region33
  $region32: #{decoder_layer.10} parent=0 // pred_region
    _
  $region33: #{decoder_layer.10} parent=0 // pred_fallthru
    _

// kernel: decoder_layer.9
$region0: #{decoder_layer.9}
  #allocation0 [shape = 'u32[]', space=smem, size = 0x4, offset = 0x4, fixed_abs, tag = 'smem constant byte address 0x4 - core index']
  #allocation1 [shape = 'u32[144,128]{1,0:T(1,128)}', space=vmem, size = 0x12000, scoped, tag = 'internal scratch']
  %s0 = inlined_call_operand.vmem [shape: f32[2,8,96], index: 0, kind: input, shape index: {}]
  %s1 = inlined_call_operand.vmem [shape: f32[2,1,8,8], index: 1, kind: input, shape index: {}]
  %s2 = inlined_call_operand.vmem [shape: f32[2,8,32], index: 2, kind: output, shape index: {}]
  %s3 = sld [smem:[#allocation0]]
  $region41: #{decoder_layer.9} parent=0
    _
  %s5 = ssub.s32 1, %s3
  %s6 = scalar_select 0, %s5, %s3
  loop: start=0, step=1, limit=4
  $region2: #{decoder_layer.9} parent=0 // loop_pre_header
    _
  $region3: #{decoder_layer.9} parent=0 // loop_header
    %s8 = sphi 0, %s12
    %p9 = scmp.ge.s32.totalorder %s8, 4
    %s18 = sphi 0, %s20
    %s21 = sphi 0, %s18
    %s22 = sphi 0, %s21
    %s38 = sphi 0, %s22
    %s44 = sphi 0, %s46
    %s47 = sphi 0, %s44
    %s48 = sphi 0, %s47
    %s64 = sphi 0, %s48
    %s70 = sphi 0, %s72
    %s73 = sphi 0, %s70
    %s74 = sphi 0, %s73
    %s90 = sphi 0, %s74
  $region4: #{decoder_layer.9} parent=0 // loop_header_branch
    %11 = sbr.rel (%p9) target = $region8
  $region5: #{decoder_layer.9} parent=0 // loop_body
    %s13 = ssub.s32 %s8, 1
    %s14 = ssub.s32 %s8, 2
    %s15 = sadd.s32 %s8, 1
    %s16 = ssub.s32 %s8, %s15
    %p17 = scmp.eq.s32.totalorder %s16, 0
    %s19 = sadd.s32 %s18, 1
    %s20 = scalar_select %p17, %s18, %s19
    %p23 = pneg %p17
    %p24 = scmp.eq.s32.totalorder %s8, 1
    %p25 = por %p23, %p24
    %p26 = scmp.ne.s32.totalorder %s18, %s21
    %p27 = scmp.eq.s32.totalorder %s8, 0
    %p28 = por %p26, %p27
    %p29 = scmp.ne.s32.totalorder %s18, %s21
    %p30 = scmp.eq.s32.totalorder %s13, 1
    %p31 = por %p29, %p30
    %p32 = scmp.ne.s32.totalorder %s21, %s22
    %p33 = scmp.eq.s32.totalorder %s13, 0
    %p34 = por %p32, %p33
    %p35 = scmp.ne.s32.totalorder %s21, %s22
    %p36 = scmp.eq.s32.totalorder %s14, 1
    %p37 = por %p35, %p36
    %p39 = scmp.ne.s32.totalorder %s22, %s38
    %p40 = scmp.eq.s32.totalorder %s14, 0
    %p41 = por %p39, %p40
    %s42 = ssub.s32 %s8, %s15
    %p43 = scmp.eq.s32.totalorder %s42, 0
    %s45 = sadd.s32 %s44, 1
    %s46 = scalar_select %p43, %s44, %s45
    %p49 = pneg %p43
    %p50 = scmp.eq.s32.totalorder %s8, 1
    %p51 = por %p49, %p50
    %p52 = scmp.ne.s32.totalorder %s44, %s47
    %p53 = scmp.eq.s32.totalorder %s8, 0
    %p54 = por %p52, %p53
    %p55 = scmp.ne.s32.totalorder %s44, %s47
    %p56 = scmp.eq.s32.totalorder %s13, 1
    %p57 = por %p55, %p56
    %p58 = scmp.ne.s32.totalorder %s47, %s48
    %p59 = scmp.eq.s32.totalorder %s13, 0
    %p60 = por %p58, %p59
    %p61 = scmp.ne.s32.totalorder %s47, %s48
    %p62 = scmp.eq.s32.totalorder %s14, 1
    %p63 = por %p61, %p62
    %p65 = scmp.ne.s32.totalorder %s48, %s64
    %p66 = scmp.eq.s32.totalorder %s14, 0
    %p67 = por %p65, %p66
    %s68 = ssub.s32 %s8, %s15
    %p69 = scmp.eq.s32.totalorder %s68, 0
    %s71 = sadd.s32 %s70, 1
    %s72 = scalar_select %p69, %s70, %s71
    %p75 = pneg %p69
    %p76 = scmp.eq.s32.totalorder %s8, 1
    %p77 = por %p75, %p76
    %p78 = scmp.ne.s32.totalorder %s70, %s73
    %p79 = scmp.eq.s32.totalorder %s8, 0
    %p80 = por %p78, %p79
    %p81 = scmp.ne.s32.totalorder %s70, %s73
    %p82 = scmp.eq.s32.totalorder %s13, 1
    %p83 = por %p81, %p82
    %p84 = scmp.ne.s32.totalorder %s73, %s74
    %p85 = scmp.eq.s32.totalorder %s13, 0
    %p86 = por %p84, %p85
    %p87 = scmp.ne.s32.totalorder %s73, %s74
    %p88 = scmp.eq.s32.totalorder %s14, 1
    %p89 = por %p87, %p88
    %p91 = scmp.ne.s32.totalorder %s74, %s90
    %p92 = scmp.eq.s32.totalorder %s14, 0
    %p93 = por %p91, %p92
    %p94 = scmp.le.s32.totalorder 1, %s8
    %p95 = scmp.lt.s32.totalorder %s8, 3
    %p96 = pnand %p94, %p95
    %p97 = pneg %p96
    // Predicated region
    $region9: #{decoder_layer.9} parent=5 // pred_check
      _
    $region10: #{decoder_layer.9} parent=5 // pred_check_branch
      %99 = sbr.rel (%p96) target = $region12
    $region11: #{decoder_layer.9} parent=5 // pred_region
      %s100 = ssub.s32 %s8, 1
    $region12: #{decoder_layer.9} parent=5 // pred_fallthru
      _
    %p101 = scmp.lt.s32.totalorder %s8, 2
    // Predicated region
    $region13: #{decoder_layer.9} parent=5 // pred_check
      %p102 = pneg %p101
    $region14: #{decoder_layer.9} parent=5 // pred_check_branch
      %104 = sbr.rel (%p102) target = $region16
    $region15: #{decoder_layer.9} parent=5 // pred_region
      // Predicated region
      $region17: #{decoder_layer.9} parent=15 // pred_check
        %p105 = pneg %p28
      $region18: #{decoder_layer.9} parent=15 // pred_check_branch
        %107 = sbr.rel (%p105) target = $region20
      $region19: #{decoder_layer.9} parent=15 // pred_region
        %p108 = scmp.lt.s32.totalorder %s8, 1
        %s109 = scalar_select %p108, %s8, 1
        %s110 = smul.addr %s109, 8
        %s111 = scalar_lea.vmem %s0, %s110
      $region20: #{decoder_layer.9} parent=15 // pred_fallthru
        _
      // Predicated region
      $region21: #{decoder_layer.9} parent=15 // pred_check
        %p112 = pneg %p54
      $region22: #{decoder_layer.9} parent=15 // pred_check_branch
        %114 = sbr.rel (%p112) target = $region24
      $region23: #{decoder_layer.9} parent=15 // pred_region
        %p115 = scmp.lt.s32.totalorder %s8, 1
        %s116 = scalar_select %p115, %s8, 1
        %s117 = smul.addr %s116, 8
        %s118 = scalar_lea.vmem %s1, %s117
      $region24: #{decoder_layer.9} parent=15 // pred_fallthru
        _
    $region16: #{decoder_layer.9} parent=5 // pred_fallthru
      _
    %p119 = scmp.le.s32.totalorder 1, %s8
    %p120 = scmp.lt.s32.totalorder %s8, 3
    %p121 = pnand %p119, %p120
    %p122 = pneg %p121
    // Predicated region
    $region25: #{decoder_layer.9} parent=5 // pred_check
      _
    $region26: #{decoder_layer.9} parent=5 // pred_check_branch
      %124 = sbr.rel (%p121) target = $region28
    $region27: #{decoder_layer.9} parent=5 // pred_region
      %s125 = ssub.s32 %s8, 1
      %p126 = scmp.lt.s32.totalorder %s13, 1
      %s127 = scalar_select %p126, %s13, 1
      %s128 = smul.addr %s127, 8
      %s129 = scalar_lea.vmem %s0, %s128
      %p130 = pneg %p34
      %p131 = pneg %p31
      %p132 = scmp.lt.s32.totalorder %s13, 1
      %s133 = scalar_select %p132, %s13, 1
      %s134 = smul.addr %s133, 8
      %s135 = scalar_lea.vmem %s1, %s134
      %p136 = pneg %p60
      %p137 = pneg %p57
      %p138 = pneg %p86
      %p139 = pneg %p83
      %p140 = scmp.lt.s32.totalorder %s13, 1
      %s141 = scalar_select %p140, %s13, 1
      %s142 = smul.addr %s141, 8
      %s143 = scalar_lea.vmem %s2, %s142
      %p144 = scmp.lt.s32.totalorder %s13, 1
      %s145 = scalar_select %p144, %s13, 1
      %s146 = smul.addr %s145, 8
      %s147 = scalar_lea.vmem %s0, %s146
      %p148 = scmp.lt.s32.totalorder %s13, 1
      %s149 = scalar_select %p148, %s13, 1
      %s150 = smul.addr %s149, 8
      %s151 = scalar_lea.vmem %s1, %s150
      %p152 = scmp.lt.s32.totalorder %s13, 1
      %s153 = scalar_select %p152, %s13, 1
      %s154 = smul.addr %s153, 8
      %s155 = scalar_lea.vmem %s2, %s154
      %v156 = vld [vmem:[%s147] sm:$0xff]
      %v157 = vld [vmem:[%s151] sm:$0xff]
      %159 = vrot.lane.b32.xlu0 %v156, 96
      %v160 = vpop.permute.xlu0 %159
      %vm161 = vcmask 64512
      %v162 = vsel %vm161, %v156, 0
      %v164 = vsel %vm161, %v160, 0
      %166 = vmatprep.subr.mxu0 0.0
      %167 = vmatpush1.xpose.msra.mxu0 %v164
      %168 = vmatprep.subr.mxu0 0.0
      %169 = vmatpush1.xpose.msra.mxu0 0.0
      %170 = vmatprep.subr.mxu0 0.0
      %171 = vmatpush1.xpose.msra.mxu0 0.0
      %172 = vmatprep.subr.mxu0 0.0
      %173 = vmatpush1.xpose.msra.mxu0 0.0
      %174 = vmatprep.subr.mxu0 0.0
      %175 = vmatpush1.xpose.msra.mxu0 0.0
      %176 = vmatprep.subr.mxu0 0.0
      %177 = vmatpush1.xpose.msra.mxu0 0.0
      %178 = vmatprep.subr.mxu0 0.0
      %179 = vmatpush1.xpose.msra.mxu0 0.0
      %180 = vmatprep.subr.mxu0 0.0
      %181 = vmatpush1.xpose.msra.mxu0 0.0
      %182 = vmatprep.subr.mxu0 0.0
      %183 = vmatpush1.xpose.msra.mxu0 0.0
      %184 = vmatprep.subr.mxu0 0.0
      %185 = vmatpush1.xpose.msra.mxu0 0.0
      %186 = vmatprep.subr.mxu0 0.0
      %187 = vmatpush1.xpose.msra.mxu0 0.0
      %188 = vmatprep.subr.mxu0 0.0
      %189 = vmatpush1.xpose.msra.mxu0 0.0
      %190 = vmatprep.subr.mxu0 0.0
      %191 = vmatpush1.xpose.msra.mxu0 0.0
      %192 = vmatprep.subr.mxu0 0.0
      %193 = vmatpush1.xpose.msra.mxu0 0.0
      %194 = vmatprep.subr.mxu0 0.0
      %195 = vmatpush1.xpose.msra.mxu0 0.0
      %196 = vmatprep.subr.mxu0 0.0
      %197 = vmatpush1.xpose.msra.mxu0 0.0
      %198 = vmatprep.subr.mxu0 0.0
      %199 = vmatpush1.xpose.msra.mxu0 0.0
      %200 = vmatprep.subr.mxu0 0.0
      %201 = vmatpush1.xpose.msra.mxu0 0.0
      %202 = vmatprep.subr.mxu0 0.0
      %203 = vmatpush1.xpose.msra.mxu0 0.0
      %204 = vmatprep.subr.mxu0 0.0
      %205 = vmatpush1.xpose.msra.mxu0 0.0
      %206 = vmatprep.subr.mxu0 0.0
      %207 = vmatpush1.xpose.msra.mxu0 0.0
      %208 = vmatprep.subr.mxu0 0.0
      %209 = vmatpush1.xpose.msra.mxu0 0.0
      %210 = vmatprep.subr.mxu0 0.0
      %211 = vmatpush1.xpose.msra.mxu0 0.0
      %212 = vmatprep.subr.mxu0 0.0
      %213 = vmatpush1.xpose.msra.mxu0 0.0
      %214 = vmatprep.subr.mxu0 0.0
      %215 = vmatpush1.xpose.msra.mxu0 0.0
      %216 = vmatprep.subr.mxu0 0.0
      %217 = vmatpush1.xpose.msra.mxu0 0.0
      %218 = vmatprep.subr.mxu0 0.0
      %219 = vmatpush1.xpose.msra.mxu0 0.0
      %220 = vmatprep.subr.mxu0 0.0
      %221 = vmatpush1.xpose.msra.mxu0 0.0
      %222 = vmatprep.subr.mxu0 0.0
      %223 = vmatpush1.xpose.msra.mxu0 0.0
      %224 = vmatprep.subr.mxu0 0.0
      %225 = vmatpush1.xpose.msra.mxu0 0.0
      %226 = vmatprep.subr.mxu0 0.0
      %227 = vmatpush1.xpose.msra.mxu0 0.0
      %228 = vmatprep.subr.mxu0 0.0
      %229 = vmatpush1.xpose.msra.mxu0 0.0
      %230 = vmatprep.mubr.f32.mxu0 0.0
      %231 = vmatmul.mubr.f32.gmra.mrb[0].mxu0 %v162
      %v232 = vpop.f32.mrb[0].mxu0
      %v233 = vadd.f32 0.0, %v232
      %v234 = vpop.f32.mrb[0].mxu0
      %235 = vdwg.mxu0
      %v236 = vmul.f32 %v233, 0.35355338
      %vm237 = vcmp.eq.f32.partialorder %v157, 0.0
      %v238 = vsel %vm237, -1e+10, %v236
      %v239 = vsel %vm161, %v238, -inf
      %240 = vmax.xlane.f32.xlu0 %v239
      %v241 = vpop.xlane.xlu0 %240
      %v242 = vsub.f32 %v238, %v241
      %v243 = vmul.f32 %v242, 1.442695
      %v244 = vpow.pop %v243
      %v245 = vsel %vm161, %v244, 0.0
      %246 = vadd.xlane.f32.xlu0 %v245
      %v247 = vpop.xlane.xlu0 %246
      %v248 = vrcp.pop %v247
      %v249 = vmul.f32 %v244, %v248
      %250 = vrot.lane.b32.xlu0 %v156, 64
      %v251 = vpop.permute.xlu0 %250
      %v254 = vsel %vm161, %v249, 0
      %256 = vmatprep.subr.mxu0 0.0
      %257 = vmatpush1.msra.mxu0 %v251
      %258 = vmatprep.subr.mxu0 0.0
      %259 = vmatpush1.msra.mxu0 0.0
      %260 = vmatprep.subr.mxu0 0.0
      %261 = vmatpush1.msra.mxu0 0.0
      %262 = vmatprep.subr.mxu0 0.0
      %263 = vmatpush1.msra.mxu0 0.0
      %264 = vmatprep.subr.mxu0 0.0
      %265 = vmatpush1.msra.mxu0 0.0
      %266 = vmatprep.subr.mxu0 0.0
      %267 = vmatpush1.msra.mxu0 0.0
      %268 = vmatprep.subr.mxu0 0.0
      %269 = vmatpush1.msra.mxu0 0.0
      %270 = vmatprep.subr.mxu0 0.0
      %271 = vmatpush1.msra.mxu0 0.0
      %272 = vmatprep.subr.mxu0 0.0
      %273 = vmatpush1.msra.mxu0 0.0
      %274 = vmatprep.subr.mxu0 0.0
      %275 = vmatpush1.msra.mxu0 0.0
      %276 = vmatprep.subr.mxu0 0.0
      %277 = vmatpush1.msra.mxu0 0.0
      %278 = vmatprep.subr.mxu0 0.0
      %279 = vmatpush1.msra.mxu0 0.0
      %280 = vmatprep.subr.mxu0 0.0
      %281 = vmatpush1.msra.mxu0 0.0
      %282 = vmatprep.subr.mxu0 0.0
      %283 = vmatpush1.msra.mxu0 0.0
      %284 = vmatprep.subr.mxu0 0.0
      %285 = vmatpush1.msra.mxu0 0.0
      %286 = vmatprep.subr.mxu0 0.0
      %287 = vmatpush1.msra.mxu0 0.0
      %288 = vmatprep.subr.mxu0 0.0
      %289 = vmatpush1.msra.mxu0 0.0
      %290 = vmatprep.subr.mxu0 0.0
      %291 = vmatpush1.msra.mxu0 0.0
      %292 = vmatprep.subr.mxu0 0.0
      %293 = vmatpush1.msra.mxu0 0.0
      %294 = vmatprep.subr.mxu0 0.0
      %295 = vmatpush1.msra.mxu0 0.0
      %296 = vmatprep.subr.mxu0 0.0
      %297 = vmatpush1.msra.mxu0 0.0
      %298 = vmatprep.subr.mxu0 0.0
      %299 = vmatpush1.msra.mxu0 0.0
      %300 = vmatprep.subr.mxu0 0.0
      %301 = vmatpush1.msra.mxu0 0.0
      %302 = vmatprep.subr.mxu0 0.0
      %303 = vmatpush1.msra.mxu0 0.0
      %304 = vmatprep.subr.mxu0 0.0
      %305 = vmatpush1.msra.mxu0 0.0
      %306 = vmatprep.subr.mxu0 0.0
      %307 = vmatpush1.msra.mxu0 0.0
      %308 = vmatprep.subr.mxu0 0.0
      %309 = vmatpush1.msra.mxu0 0.0
      %310 = vmatprep.subr.mxu0 0.0
      %311 = vmatpush1.msra.mxu0 0.0
      %312 = vmatprep.subr.mxu0 0.0
      %313 = vmatpush1.msra.mxu0 0.0
      %314 = vmatprep.subr.mxu0 0.0
      %315 = vmatpush1.msra.mxu0 0.0
      %316 = vmatprep.subr.mxu0 0.0
      %317 = vmatpush1.msra.mxu0 0.0
      %318 = vmatprep.subr.mxu0 0.0
      %319 = vmatpush1.msra.mxu0 0.0
      %320 = vmatprep.mubr.f32.mxu0 0.0
      %321 = vmatmul.mubr.f32.gmra.mrb[0].mxu0 %v254
      %v322 = vpop.f32.mrb[0].mxu0
      %v323 = vadd.f32 0.0, %v322
      %v324 = vpop.f32.mrb[0].mxu0
      %325 = vdwg.mxu0
      %326 = vrot.lane.b32.xlu0 %v156, 120
      %v327 = vpop.permute.xlu0 %326
      %328 = vrot.lane.b32.xlu0 %v156, 88
      %v329 = vpop.permute.xlu0 %328
      %v330 = vsel %vm161, %v327, 0
      %v332 = vsel %vm161, %v329, 0
      %334 = vmatprep.subr.mxu0 0.0
      %335 = vmatpush1.xpose.msra.mxu0 %v332
      %336 = vmatprep.subr.mxu0 0.0
      %337 = vmatpush1.xpose.msra.mxu0 0.0
      %338 = vmatprep.subr.mxu0 0.0
      %339 = vmatpush1.xpose.msra.mxu0 0.0
      %340 = vmatprep.subr.mxu0 0.0
      %341 = vmatpush1.xpose.msra.mxu0 0.0
      %342 = vmatprep.subr.mxu0 0.0
      %343 = vmatpush1.xpose.msra.mxu0 0.0
      %344 = vmatprep.subr.mxu0 0.0
      %345 = vmatpush1.xpose.msra.mxu0 0.0
      %346 = vmatprep.subr.mxu0 0.0
      %347 = vmatpush1.xpose.msra.mxu0 0.0
      %348 = vmatprep.subr.mxu0 0.0
      %349 = vmatpush1.xpose.msra.mxu0 0.0
      %350 = vmatprep.subr.mxu0 0.0
      %351 = vmatpush1.xpose.msra.mxu0 0.0
      %352 = vmatprep.subr.mxu0 0.0
      %353 = vmatpush1.xpose.msra.mxu0 0.0
      %354 = vmatprep.subr.mxu0 0.0
      %355 = vmatpush1.xpose.msra.mxu0 0.0
      %356 = vmatprep.subr.mxu0 0.0
      %357 = vmatpush1.xpose.msra.mxu0 0.0
      %358 = vmatprep.subr.mxu0 0.0
      %359 = vmatpush1.xpose.msra.mxu0 0.0
      %360 = vmatprep.subr.mxu0 0.0
      %361 = vmatpush1.xpose.msra.mxu0 0.0
      %362 = vmatprep.subr.mxu0 0.0
      %363 = vmatpush1.xpose.msra.mxu0 0.0
      %364 = vmatprep.subr.mxu0 0.0
      %365 = vmatpush1.xpose.msra.mxu0 0.0
      %366 = vmatprep.subr.mxu0 0.0
      %367 = vmatpush1.xpose.msra.mxu0 0.0
      %368 = vmatprep.subr.mxu0 0.0
      %369 = vmatpush1.xpose.msra.mxu0 0.0
      %370 = vmatprep.subr.mxu0 0.0
      %371 = vmatpush1.xpose.msra.mxu0 0.0
      %372 = vmatprep.subr.mxu0 0.0
      %373 = vmatpush1.xpose.msra.mxu0 0.0
      %374 = vmatprep.subr.mxu0 0.0
      %375 = vmatpush1.xpose.msra.mxu0 0.0
      %376 = vmatprep.subr.mxu0 0.0
      %377 = vmatpush1.xpose.msra.mxu0 0.0
      %378 = vmatprep.subr.mxu0 0.0
      %379 = vmatpush1.xpose.msra.mxu0 0.0
      %380 = vmatprep.subr.mxu0 0.0
      %381 = vmatpush1.xpose.msra.mxu0 0.0
      %382 = vmatprep.subr.mxu0 0.0
      %383 = vmatpush1.xpose.msra.mxu0 0.0
      %384 = vmatprep.subr.mxu0 0.0
      %385 = vmatpush1.xpose.msra.mxu0 0.0
      %386 = vmatprep.subr.mxu0 0.0
      %387 = vmatpush1.xpose.msra.mxu0 0.0
      %388 = vmatprep.subr.mxu0 0.0
      %389 = vmatpush1.xpose.msra.mxu0 0.0
      %390 = vmatprep.subr.mxu0 0.0
      %391 = vmatpush1.xpose.msra.mxu0 0.0
      %392 = vmatprep.subr.mxu0 0.0
      %393 = vmatpush1.xpose.msra.mxu0 0.0
      %394 = vmatprep.subr.mxu0 0.0
      %395 = vmatpush1.xpose.msra.mxu0 0.0
      %396 = vmatprep.subr.mxu0 0.0
      %397 = vmatpush1.xpose.msra.mxu0 0.0
      %398 = vmatprep.mubr.f32.mxu0 0.0
      %399 = vmatmul.mubr.f32.gmra.mrb[0].mxu0 %v330
      %v400 = vpop.f32.mrb[0].mxu0
      %v401 = vadd.f32 0.0, %v400
      %v402 = vpop.f32.mrb[0].mxu0
      %403 = vdwg.mxu0
      %v404 = vmul.f32 %v401, 0.35355338
      %v405 = vsel %vm237, -1e+10, %v404
      %v406 = vsel %vm161, %v405, -inf
      %407 = vmax.xlane.f32.xlu0 %v406
      %v408 = vpop.xlane.xlu0 %407
      %v409 = vsub.f32 %v405, %v408
      %v410 = vmul.f32 %v409, 1.442695
      %v411 = vpow.pop %v410
      %v412 = vsel %vm161, %v411, 0.0
      %413 = vadd.xlane.f32.xlu0 %v412
      %v414 = vpop.xlane.xlu0 %413
      %v415 = vrcp.pop %v414
      %v416 = vmul.f32 %v411, %v415
      %417 = vrot.lane.b32.xlu0 %v156, 56
      %v418 = vpop.permute.xlu0 %417
      %v421 = vsel %vm161, %v416, 0
      %423 = vmatprep.subr.mxu0 0.0
      %424 = vmatpush1.msra.mxu0 %v418
      %425 = vmatprep.subr.mxu0 0.0
      %426 = vmatpush1.msra.mxu0 0.0
      %427 = vmatprep.subr.mxu0 0.0
      %428 = vmatpush1.msra.mxu0 0.0
      %429 = vmatprep.subr.mxu0 0.0
      %430 = vmatpush1.msra.mxu0 0.0
      %431 = vmatprep.subr.mxu0 0.0
      %432 = vmatpush1.msra.mxu0 0.0
      %433 = vmatprep.subr.mxu0 0.0
      %434 = vmatpush1.msra.mxu0 0.0
      %435 = vmatprep.subr.mxu0 0.0
      %436 = vmatpush1.msra.mxu0 0.0
      %437 = vmatprep.subr.mxu0 0.0
      %438 = vmatpush1.msra.mxu0 0.0
      %439 = vmatprep.subr.mxu0 0.0
      %440 = vmatpush1.msra.mxu0 0.0
      %441 = vmatprep.subr.mxu0 0.0
      %442 = vmatpush1.msra.mxu0 0.0
      %443 = vmatprep.subr.mxu0 0.0
      %444 = vmatpush1.msra.mxu0 0.0
      %445 = vmatprep.subr.mxu0 0.0
      %446 = vmatpush1.msra.mxu0 0.0
      %447 = vmatprep.subr.mxu0 0.0
      %448 = vmatpush1.msra.mxu0 0.0
      %449 = vmatprep.subr.mxu0 0.0
      %450 = vmatpush1.msra.mxu0 0.0
      %451 = vmatprep.subr.mxu0 0.0
      %452 = vmatpush1.msra.mxu0 0.0
      %453 = vmatprep.subr.mxu0 0.0
      %454 = vmatpush1.msra.mxu0 0.0
      %455 = vmatprep.subr.mxu0 0.0
      %456 = vmatpush1.msra.mxu0 0.0
      %457 = vmatprep.subr.mxu0 0.0
      %458 = vmatpush1.msra.mxu0 0.0
      %459 = vmatprep.subr.mxu0 0.0
      %460 = vmatpush1.msra.mxu0 0.0
      %461 = vmatprep.subr.mxu0 0.0
      %462 = vmatpush1.msra.mxu0 0.0
      %463 = vmatprep.subr.mxu0 0.0
      %464 = vmatpush1.msra.mxu0 0.0
      %465 = vmatprep.subr.mxu0 0.0
      %466 = vmatpush1.msra.mxu0 0.0
      %467 = vmatprep.subr.mxu0 0.0
      %468 = vmatpush1.msra.mxu0 0.0
      %469 = vmatprep.subr.mxu0 0.0
      %470 = vmatpush1.msra.mxu0 0.0
      %471 = vmatprep.subr.mxu0 0.0
      %472 = vmatpush1.msra.mxu0 0.0
      %473 = vmatprep.subr.mxu0 0.0
      %474 = vmatpush1.msra.mxu0 0.0
      %475 = vmatprep.subr.mxu0 0.0
      %476 = vmatpush1.msra.mxu0 0.0
      %477 = vmatprep.subr.mxu0 0.0
      %478 = vmatpush1.msra.mxu0 0.0
      %479 = vmatprep.subr.mxu0 0.0
      %480 = vmatpush1.msra.mxu0 0.0
      %481 = vmatprep.subr.mxu0 0.0
      %482 = vmatpush1.msra.mxu0 0.0
      %483 = vmatprep.subr.mxu0 0.0
      %484 = vmatpush1.msra.mxu0 0.0
      %485 = vmatprep.subr.mxu0 0.0
      %486 = vmatpush1.msra.mxu0 0.0
      %487 = vmatprep.mubr.f32.mxu0 0.0
      %488 = vmatmul.mubr.f32.gmra.mrb[0].mxu0 %v421
      %v489 = vpop.f32.mrb[0].mxu0
      %v490 = vadd.f32 0.0, %v489
      %v491 = vpop.f32.mrb[0].mxu0
      %492 = vdwg.mxu0
      %493 = vrot.lane.b32.xlu0 %v156, 112
      %v494 = vpop.permute.xlu0 %493
      %495 = vrot.lane.b32.xlu0 %v156, 80
      %v496 = vpop.permute.xlu0 %495
      %v497 = vsel %vm161, %v494, 0
      %v499 = vsel %vm161, %v496, 0
      %501 = vmatprep.subr.mxu0 0.0
      %502 = vmatpush1.xpose.msra.mxu0 %v499
      %503 = vmatprep.subr.mxu0 0.0
      %504 = vmatpush1.xpose.msra.mxu0 0.0
      %505 = vmatprep.subr.mxu0 0.0
      %506 = vmatpush1.xpose.msra.mxu0 0.0
      %507 = vmatprep.subr.mxu0 0.0
      %508 = vmatpush1.xpose.msra.mxu0 0.0
      %509 = vmatprep.subr.mxu0 0.0
      %510 = vmatpush1.xpose.msra.mxu0 0.0
      %511 = vmatprep.subr.mxu0 0.0
      %512 = vmatpush1.xpose.msra.mxu0 0.0
      %513 = vmatprep.subr.mxu0 0.0
      %514 = vmatpush1.xpose.msra.mxu0 0.0
      %515 = vmatprep.subr.mxu0 0.0
      %516 = vmatpush1.xpose.msra.mxu0 0.0
      %517 = vmatprep.subr.mxu0 0.0
      %518 = vmatpush1.xpose.msra.mxu0 0.0
      %519 = vmatprep.subr.mxu0 0.0
      %520 = vmatpush1.xpose.msra.mxu0 0.0
      %521 = vmatprep.subr.mxu0 0.0
      %522 = vmatpush1.xpose.msra.mxu0 0.0
      %523 = vmatprep.subr.mxu0 0.0
      %524 = vmatpush1.xpose.msra.mxu0 0.0
      %525 = vmatprep.subr.mxu0 0.0
      %526 = vmatpush1.xpose.msra.mxu0 0.0
      %527 = vmatprep.subr.mxu0 0.0
      %528 = vmatpush1.xpose.msra.mxu0 0.0
      %529 = vmatprep.subr.mxu0 0.0
      %530 = vmatpush1.xpose.msra.mxu0 0.0
      %531 = vmatprep.subr.mxu0 0.0
      %532 = vmatpush1.xpose.msra.mxu0 0.0
      %533 = vmatprep.subr.mxu0 0.0
      %534 = vmatpush1.xpose.msra.mxu0 0.0
      %535 = vmatprep.subr.mxu0 0.0
      %536 = vmatpush1.xpose.msra.mxu0 0.0
      %537 = vmatprep.subr.mxu0 0.0
      %538 = vmatpush1.xpose.msra.mxu0 0.0
      %539 = vmatprep.subr.mxu0 0.0
      %540 = vmatpush1.xpose.msra.mxu0 0.0
      %541 = vmatprep.subr.mxu0 0.0
      %542 = vmatpush1.xpose.msra.mxu0 0.0
      %543 = vmatprep.subr.mxu0 0.0
      %544 = vmatpush1.xpose.msra.mxu0 0.0
      %545 = vmatprep.subr.mxu0 0.0
      %546 = vmatpush1.xpose.msra.mxu0 0.0
      %547 = vmatprep.subr.mxu0 0.0
      %548 = vmatpush1.xpose.msra.mxu0 0.0
      %549 = vmatprep.subr.mxu0 0.0
      %550 = vmatpush1.xpose.msra.mxu0 0.0
      %551 = vmatprep.subr.mxu0 0.0
      %552 = vmatpush1.xpose.msra.mxu0 0.0
      %553 = vmatprep.subr.mxu0 0.0
      %554 = vmatpush1.xpose.msra.mxu0 0.0
      %555 = vmatprep.subr.mxu0 0.0
      %556 = vmatpush1.xpose.msra.mxu0 0.0
      %557 = vmatprep.subr.mxu0 0.0
      %558 = vmatpush1.xpose.msra.mxu0 0.0
      %559 = vmatprep.subr.mxu0 0.0
      %560 = vmatpush1.xpose.msra.mxu0 0.0
      %561 = vmatprep.subr.mxu0 0.0
      %562 = vmatpush1.xpose.msra.mxu0 0.0
      %563 = vmatprep.subr.mxu0 0.0
      %564 = vmatpush1.xpose.msra.mxu0 0.0
      %565 = vmatprep.mubr.f32.mxu0 0.0
      %566 = vmatmul.mubr.f32.gmra.mrb[0].mxu0 %v497
      %v567 = vpop.f32.mrb[0].mxu0
      %v568 = vadd.f32 0.0, %v567
      %v569 = vpop.f32.mrb[0].mxu0
      %570 = vdwg.mxu0
      %v571 = vmul.f32 %v568, 0.35355338
      %v572 = vsel %vm237, -1e+10, %v571
      %v573 = vsel %vm161, %v572, -inf
      %574 = vmax.xlane.f32.xlu0 %v573
      %v575 = vpop.xlane.xlu0 %574
      %v576 = vsub.f32 %v572, %v575
      %v577 = vmul.f32 %v576, 1.442695
      %v578 = vpow.pop %v577
      %v579 = vsel %vm161, %v578, 0.0
      %580 = vadd.xlane.f32.xlu0 %v579
      %v581 = vpop.xlane.xlu0 %580
      %v582 = vrcp.pop %v581
      %v583 = vmul.f32 %v578, %v582
      %584 = vrot.lane.b32.xlu0 %v156, 48
      %v585 = vpop.permute.xlu0 %584
      %v588 = vsel %vm161, %v583, 0
      %590 = vmatprep.subr.mxu0 0.0
      %591 = vmatpush1.msra.mxu0 %v585
      %592 = vmatprep.subr.mxu0 0.0
      %593 = vmatpush1.msra.mxu0 0.0
      %594 = vmatprep.subr.mxu0 0.0
      %595 = vmatpush1.msra.mxu0 0.0
      %596 = vmatprep.subr.mxu0 0.0
      %597 = vmatpush1.msra.mxu0 0.0
      %598 = vmatprep.subr.mxu0 0.0
      %599 = vmatpush1.msra.mxu0 0.0
      %600 = vmatprep.subr.mxu0 0.0
      %601 = vmatpush1.msra.mxu0 0.0
      %602 = vmatprep.subr.mxu0 0.0
      %603 = vmatpush1.msra.mxu0 0.0
      %604 = vmatprep.subr.mxu0 0.0
      %605 = vmatpush1.msra.mxu0 0.0
      %606 = vmatprep.subr.mxu0 0.0
      %607 = vmatpush1.msra.mxu0 0.0
      %608 = vmatprep.subr.mxu0 0.0
      %609 = vmatpush1.msra.mxu0 0.0
      %610 = vmatprep.subr.mxu0 0.0
      %611 = vmatpush1.msra.mxu0 0.0
      %612 = vmatprep.subr.mxu0 0.0
      %613 = vmatpush1.msra.mxu0 0.0
      %614 = vmatprep.subr.mxu0 0.0
      %615 = vmatpush1.msra.mxu0 0.0
      %616 = vmatprep.subr.mxu0 0.0
      %617 = vmatpush1.msra.mxu0 0.0
      %618 = vmatprep.subr.mxu0 0.0
      %619 = vmatpush1.msra.mxu0 0.0
      %620 = vmatprep.subr.mxu0 0.0
      %621 = vmatpush1.msra.mxu0 0.0
      %622 = vmatprep.subr.mxu0 0.0
      %623 = vmatpush1.msra.mxu0 0.0
      %624 = vmatprep.subr.mxu0 0.0
      %625 = vmatpush1.msra.mxu0 0.0
      %626 = vmatprep.subr.mxu0 0.0
      %627 = vmatpush1.msra.mxu0 0.0
      %628 = vmatprep.subr.mxu0 0.0
      %629 = vmatpush1.msra.mxu0 0.0
      %630 = vmatprep.subr.mxu0 0.0
      %631 = vmatpush1.msra.mxu0 0.0
      %632 = vmatprep.subr.mxu0 0.0
      %633 = vmatpush1.msra.mxu0 0.0
      %634 = vmatprep.subr.mxu0 0.0
      %635 = vmatpush1.msra.mxu0 0.0
      %636 = vmatprep.subr.mxu0 0.0
      %637 = vmatpush1.msra.mxu0 0.0
      %638 = vmatprep.subr.mxu0 0.0
      %639 = vmatpush1.msra.mxu0 0.0
      %640 = vmatprep.subr.mxu0 0.0
      %641 = vmatpush1.msra.mxu0 0.0
      %642 = vmatprep.subr.mxu0 0.0
      %643 = vmatpush1.msra.mxu0 0.0
      %644 = vmatprep.subr.mxu0 0.0
      %645 = vmatpush1.msra.mxu0 0.0
      %646 = vmatprep.subr.mxu0 0.0
      %647 = vmatpush1.msra.mxu0 0.0
      %648 = vmatprep.subr.mxu0 0.0
      %649 = vmatpush1.msra.mxu0 0.0
      %650 = vmatprep.subr.mxu0 0.0
      %651 = vmatpush1.msra.mxu0 0.0
      %652 = vmatprep.subr.mxu0 0.0
      %653 = vmatpush1.msra.mxu0 0.0
      %654 = vmatprep.mubr.f32.mxu0 0.0
      %655 = vmatmul.mubr.f32.gmra.mrb[0].mxu0 %v588
      %v656 = vpop.f32.mrb[0].mxu0
      %v657 = vadd.f32 0.0, %v656
      %v658 = vpop.f32.mrb[0].mxu0
      %659 = vdwg.mxu0
      %660 = vrot.lane.b32.xlu0 %v156, 104
      %v661 = vpop.permute.xlu0 %660
      %662 = vrot.lane.b32.xlu0 %v156, 72
      %v663 = vpop.permute.xlu0 %662
      %v664 = vsel %vm161, %v661, 0
      %v666 = vsel %vm161, %v663, 0
      %668 = vmatprep.subr.mxu0 0.0
      %669 = vmatpush1.xpose.msra.mxu0 %v666
      %670 = vmatprep.subr.mxu0 0.0
      %671 = vmatpush1.xpose.msra.mxu0 0.0
      %672 = vmatprep.subr.mxu0 0.0
      %673 = vmatpush1.xpose.msra.mxu0 0.0
      %674 = vmatprep.subr.mxu0 0.0
      %675 = vmatpush1.xpose.msra.mxu0 0.0
      %676 = vmatprep.subr.mxu0 0.0
      %677 = vmatpush1.xpose.msra.mxu0 0.0
      %678 = vmatprep.subr.mxu0 0.0
      %679 = vmatpush1.xpose.msra.mxu0 0.0
      %680 = vmatprep.subr.mxu0 0.0
      %681 = vmatpush1.xpose.msra.mxu0 0.0
      %682 = vmatprep.subr.mxu0 0.0
      %683 = vmatpush1.xpose.msra.mxu0 0.0
      %684 = vmatprep.subr.mxu0 0.0
      %685 = vmatpush1.xpose.msra.mxu0 0.0
      %686 = vmatprep.subr.mxu0 0.0
      %687 = vmatpush1.xpose.msra.mxu0 0.0
      %688 = vmatprep.subr.mxu0 0.0
      %689 = vmatpush1.xpose.msra.mxu0 0.0
      %690 = vmatprep.subr.mxu0 0.0
      %691 = vmatpush1.xpose.msra.mxu0 0.0
      %692 = vmatprep.subr.mxu0 0.0
      %693 = vmatpush1.xpose.msra.mxu0 0.0
      %694 = vmatprep.subr.mxu0 0.0
      %695 = vmatpush1.xpose.msra.mxu0 0.0
      %696 = vmatprep.subr.mxu0 0.0
      %697 = vmatpush1.xpose.msra.mxu0 0.0
      %698 = vmatprep.subr.mxu0 0.0
      %699 = vmatpush1.xpose.msra.mxu0 0.0
      %700 = vmatprep.subr.mxu0 0.0
      %701 = vmatpush1.xpose.msra.mxu0 0.0
      %702 = vmatprep.subr.mxu0 0.0
      %703 = vmatpush1.xpose.msra.mxu0 0.0
      %704 = vmatprep.subr.mxu0 0.0
      %705 = vmatpush1.xpose.msra.mxu0 0.0
      %706 = vmatprep.subr.mxu0 0.0
      %707 = vmatpush1.xpose.msra.mxu0 0.0
      %708 = vmatprep.subr.mxu0 0.0
      %709 = vmatpush1.xpose.msra.mxu0 0.0
      %710 = vmatprep.subr.mxu0 0.0
      %711 = vmatpush1.xpose.msra.mxu0 0.0
      %712 = vmatprep.subr.mxu0 0.0
      %713 = vmatpush1.xpose.msra.mxu0 0.0
      %714 = vmatprep.subr.mxu0 0.0
      %715 = vmatpush1.xpose.msra.mxu0 0.0
      %716 = vmatprep.subr.mxu0 0.0
      %717 = vmatpush1.xpose.msra.mxu0 0.0
      %718 = vmatprep.subr.mxu0 0.0
      %719 = vmatpush1.xpose.msra.mxu0 0.0
      %720 = vmatprep.subr.mxu0 0.0
      %721 = vmatpush1.xpose.msra.mxu0 0.0
      %722 = vmatprep.subr.mxu0 0.0
      %723 = vmatpush1.xpose.msra.mxu0 0.0
      %724 = vmatprep.subr.mxu0 0.0
      %725 = vmatpush1.xpose.msra.mxu0 0.0
      %726 = vmatprep.subr.mxu0 0.0
      %727 = vmatpush1.xpose.msra.mxu0 0.0
      %728 = vmatprep.subr.mxu0 0.0
      %729 = vmatpush1.xpose.msra.mxu0 0.0
      %730 = vmatprep.subr.mxu0 0.0
      %731 = vmatpush1.xpose.msra.mxu0 0.0
      %732 = vmatprep.mubr.f32.mxu0 0.0
      %733 = vmatmul.mubr.f32.gmra.mrb[0].mxu0 %v664
      %v734 = vpop.f32.mrb[0].mxu0
      %v735 = vadd.f32 0.0, %v734
      %v736 = vpop.f32.mrb[0].mxu0
      %737 = vdwg.mxu0
      %v738 = vmul.f32 %v735, 0.35355338
      %v739 = vsel %vm237, -1e+10, %v738
      %v740 = vsel %vm161, %v739, -inf
      %741 = vmax.xlane.f32.xlu0 %v740
      %v742 = vpop.xlane.xlu0 %741
      %v743 = vsub.f32 %v739, %v742
      %v744 = vmul.f32 %v743, 1.442695
      %v745 = vpow.pop %v744
      %v746 = vsel %vm161, %v745, 0.0
      %747 = vadd.xlane.f32.xlu0 %v746
      %v748 = vpop.xlane.xlu0 %747
      %v749 = vrcp.pop %v748
      %v750 = vmul.f32 %v745, %v749
      %751 = vrot.lane.b32.xlu0 %v156, 40
      %v752 = vpop.permute.xlu0 %751
      %v755 = vsel %vm161, %v750, 0
      %757 = vmatprep.subr.mxu0 0.0
      %758 = vmatpush1.msra.mxu0 %v752
      %759 = vmatprep.subr.mxu0 0.0
      %760 = vmatpush1.msra.mxu0 0.0
      %761 = vmatprep.subr.mxu0 0.0
      %762 = vmatpush1.msra.mxu0 0.0
      %763 = vmatprep.subr.mxu0 0.0
      %764 = vmatpush1.msra.mxu0 0.0
      %765 = vmatprep.subr.mxu0 0.0
      %766 = vmatpush1.msra.mxu0 0.0
      %767 = vmatprep.subr.mxu0 0.0
      %768 = vmatpush1.msra.mxu0 0.0
      %769 = vmatprep.subr.mxu0 0.0
      %770 = vmatpush1.msra.mxu0 0.0
      %771 = vmatprep.subr.mxu0 0.0
      %772 = vmatpush1.msra.mxu0 0.0
      %773 = vmatprep.subr.mxu0 0.0
      %774 = vmatpush1.msra.mxu0 0.0
      %775 = vmatprep.subr.mxu0 0.0
      %776 = vmatpush1.msra.mxu0 0.0
      %777 = vmatprep.subr.mxu0 0.0
      %778 = vmatpush1.msra.mxu0 0.0
      %779 = vmatprep.subr.mxu0 0.0
      %780 = vmatpush1.msra.mxu0 0.0
      %781 = vmatprep.subr.mxu0 0.0
      %782 = vmatpush1.msra.mxu0 0.0
      %783 = vmatprep.subr.mxu0 0.0
      %784 = vmatpush1.msra.mxu0 0.0
      %785 = vmatprep.subr.mxu0 0.0
      %786 = vmatpush1.msra.mxu0 0.0
      %787 = vmatprep.subr.mxu0 0.0
      %788 = vmatpush1.msra.mxu0 0.0
      %789 = vmatprep.subr.mxu0 0.0
      %790 = vmatpush1.msra.mxu0 0.0
      %791 = vmatprep.subr.mxu0 0.0
      %792 = vmatpush1.msra.mxu0 0.0
      %793 = vmatprep.subr.mxu0 0.0
      %794 = vmatpush1.msra.mxu0 0.0
      %795 = vmatprep.subr.mxu0 0.0
      %796 = vmatpush1.msra.mxu0 0.0
      %797 = vmatprep.subr.mxu0 0.0
      %798 = vmatpush1.msra.mxu0 0.0
      %799 = vmatprep.subr.mxu0 0.0
      %800 = vmatpush1.msra.mxu0 0.0
      %801 = vmatprep.subr.mxu0 0.0
      %802 = vmatpush1.msra.mxu0 0.0
      %803 = vmatprep.subr.mxu0 0.0
      %804 = vmatpush1.msra.mxu0 0.0
      %805 = vmatprep.subr.mxu0 0.0
      %806 = vmatpush1.msra.mxu0 0.0
      %807 = vmatprep.subr.mxu0 0.0
      %808 = vmatpush1.msra.mxu0 0.0
      %809 = vmatprep.subr.mxu0 0.0
      %810 = vmatpush1.msra.mxu0 0.0
      %811 = vmatprep.subr.mxu0 0.0
      %812 = vmatpush1.msra.mxu0 0.0
      %813 = vmatprep.subr.mxu0 0.0
      %814 = vmatpush1.msra.mxu0 0.0
      %815 = vmatprep.subr.mxu0 0.0
      %816 = vmatpush1.msra.mxu0 0.0
      %817 = vmatprep.subr.mxu0 0.0
      %818 = vmatpush1.msra.mxu0 0.0
      %819 = vmatprep.subr.mxu0 0.0
      %820 = vmatpush1.msra.mxu0 0.0
      %821 = vmatprep.mubr.f32.mxu0 0.0
      %822 = vmatmul.mubr.f32.gmra.mrb[0].mxu0 %v755
      %v823 = vpop.f32.mrb[0].mxu0
      %v824 = vadd.f32 0.0, %v823
      %v825 = vpop.f32.mrb[0].mxu0
      %826 = vdwg.mxu0
      %828 = vrot.lane.b32.xlu0 %v490, 8
      %v829 = vpop.permute.xlu0 %828
      %832 = vrot.lane.b32.xlu0 %v657, 16
      %v833 = vpop.permute.xlu0 %832
      %836 = vrot.lane.b32.xlu0 %v824, 24
      %v837 = vpop.permute.xlu0 %836
      %v839 = vsel %vm161, %v323, %v829
      %vm840 = vcmask 130048
      %v841 = vsel %vm840, %v839, %v833
      %vm842 = vcmask 195584
      %v843 = vsel %vm842, %v841, %v837
      %vm844 = vcmask 261120
      %845 = vst.msk [vmem:[%s155] sm:$0xff] %vm844, %v843
      %p846 = scmp.lt.s32.totalorder %s13, 1
      %s847 = scalar_select %p846, %s13, 1
      %s848 = smul.addr %s847, 8
      %s849 = scalar_lea.vmem %s2, %s848
      // Predicated region
      $region29: #{decoder_layer.9} parent=27 // pred_check
        %p850 = pneg %p83
      $region30: #{decoder_layer.9} parent=27 // pred_check_branch
        %852 = sbr.rel (%p850) target = $region32
      $region31: #{decoder_layer.9} parent=27 // pred_region
        _
      $region32: #{decoder_layer.9} parent=27 // pred_fallthru
        _
    $region28: #{decoder_layer.9} parent=5 // pred_fallthru
      _
    %p853 = scmp.le.s32.totalorder 2, %s8
    // Predicated region
    $region33: #{decoder_layer.9} parent=5 // pred_check
      %p854 = pneg %p853
    $region34: #{decoder_layer.9} parent=5 // pred_check_branch
      %856 = sbr.rel (%p854) target = $region36
    $region35: #{decoder_layer.9} parent=5 // pred_region
      %s857 = ssub.s32 %s8, 2
      // Predicated region
      $region37: #{decoder_layer.9} parent=35 // pred_check
        %p858 = pneg %p89
      $region38: #{decoder_layer.9} parent=35 // pred_check_branch
        %860 = sbr.rel (%p858) target = $region40
      $region39: #{decoder_layer.9} parent=35 // pred_region
        %p861 = scmp.lt.s32.totalorder %s14, 1
        %s862 = scalar_select %p861, %s14, 1
        %s863 = smul.addr %s862, 8
        %s864 = scalar_lea.vmem %s2, %s863
      $region40: #{decoder_layer.9} parent=35 // pred_fallthru
        _
    $region36: #{decoder_layer.9} parent=5 // pred_fallthru
      _
  $region6: #{decoder_layer.9} parent=0 // loop_footer
    %s12 = sadd.s32 1, %s8
  $region7: #{decoder_layer.9} parent=0 // loop_footer_branch
    %7 = sbr.rel target = $region3
  $region8: #{decoder_layer.9} parent=0 // loop_exit
    _

// kernel: decoder_layer.15
$region0: #{decoder_layer.15}
  #allocation0 [shape = 'u32[]', space=smem, size = 0x4, offset = 0x4, fixed_abs, tag = 'smem constant byte address 0x4 - core index']
  #allocation1 [shape = 'u32[144,128]{1,0:T(1,128)}', space=vmem, size = 0x12000, scoped, tag = 'internal scratch']
  %s0 = inlined_call_operand.vmem [shape: f32[16,32], index: 0, kind: input, shape index: {}]
  %s1 = inlined_call_operand.vmem [shape: f32[32,64], index: 1, kind: input, shape index: {}]
  %s2 = inlined_call_operand.vmem [shape: f32[1,64], index: 2, kind: input, shape index: {}]
  %s3 = inlined_call_operand.vmem [shape: f32[64,32], index: 3, kind: input, shape index: {}]
  %s4 = inlined_call_operand.vmem [shape: f32[1,32], index: 4, kind: input, shape index: {}]
  %s5 = inlined_call_operand.vmem [shape: f32[1,32], index: 5, kind: input, shape index: {}]
  %s6 = inlined_call_operand.vmem [shape: f32[1,32], index: 6, kind: input, shape index: {}]
  %s7 = inlined_call_operand.hbm [shape: f32[16,32], index: 7, kind: output, shape index: {}]
  %s8 = sld [smem:[#allocation0]]
  $region38: #{decoder_layer.15} parent=0
    _
  %s10 = ssub.s32 1, %s8
  %s11 = scalar_select 0, %s10, %s8
  $region1: #{decoder_layer.15} parent=0
    #allocation2 [shape = 'u8[8192]{0}', space=vmem, size = 0x2000, scoped, tag = 'output window, operand 0, single buffered']
    #allocation3 [shape = 's32[1]{0}', space=sflag, size = 0x4, scoped, tag = 'scoped memory for decoder_layer.15']
    %12 = vsyncpa [#allocation3], 0
    // Predicated region
    $region2: #{decoder_layer.15} parent=1 // pred_check
      _
    $region3: #{decoder_layer.15} parent=1 // pred_check_branch
      %14 = sbr.rel (0) target = $region5
    $region4: #{decoder_layer.15} parent=1 // pred_region
      _
    $region5: #{decoder_layer.15} parent=1 // pred_fallthru
      _
    // Predicated region
    $region6: #{decoder_layer.15} parent=1 // pred_check
      _
    $region7: #{decoder_layer.15} parent=1 // pred_check_branch
      %16 = sbr.rel (0) target = $region9
    $region8: #{decoder_layer.15} parent=1 // pred_region
      _
    $region9: #{decoder_layer.15} parent=1 // pred_fallthru
      _
    // Predicated region
    $region10: #{decoder_layer.15} parent=1 // pred_check
      _
    $region11: #{decoder_layer.15} parent=1 // pred_check_branch
      %18 = sbr.rel (0) target = $region13
    $region12: #{decoder_layer.15} parent=1 // pred_region
      _
    $region13: #{decoder_layer.15} parent=1 // pred_fallthru
      _
    // Predicated region
    $region14: #{decoder_layer.15} parent=1 // pred_check
      _
    $region15: #{decoder_layer.15} parent=1 // pred_check_branch
      %20 = sbr.rel (0) target = $region17
    $region16: #{decoder_layer.15} parent=1 // pred_region
      _
    $region17: #{decoder_layer.15} parent=1 // pred_fallthru
      _
    // Predicated region
    $region18: #{decoder_layer.15} parent=1 // pred_check
      _
    $region19: #{decoder_layer.15} parent=1 // pred_check_branch
      %22 = sbr.rel (0) target = $region21
    $region20: #{decoder_layer.15} parent=1 // pred_region
      _
    $region21: #{decoder_layer.15} parent=1 // pred_fallthru
      _
    // Predicated region
    $region22: #{decoder_layer.15} parent=1 // pred_check
      _
    $region23: #{decoder_layer.15} parent=1 // pred_check_branch
      %24 = sbr.rel (0) target = $region25
    $region24: #{decoder_layer.15} parent=1 // pred_region
      _
    $region25: #{decoder_layer.15} parent=1 // pred_fallthru
      _
    // Predicated region
    $region26: #{decoder_layer.15} parent=1 // pred_check
      _
    $region27: #{decoder_layer.15} parent=1 // pred_check_branch
      %26 = sbr.rel (0) target = $region29
    $region28: #{decoder_layer.15} parent=1 // pred_region
      _
    $region29: #{decoder_layer.15} parent=1 // pred_fallthru
      _
    %v27 = vld [vmem:[%s0] sm:$0xff]
    %v28 = vld [vmem:[%s0 + $0x8] sm:$0xff]
    %v29 = vld [vmem:[%s1] sm:$0xff]
    %v30 = vld [vmem:[%s1 + $0x8] sm:$0xff]
    %v31 = vld [vmem:[%s1 + $0x10] sm:$0xff]
    %v32 = vld [vmem:[%s1 + $0x18] sm:$0xff]
    %v33 = vld [vmem:[%s2] sm:$0x1]
    %v35 = vlaneseq
    %v36 = vshrl.u32 %v35, 7
    %v37 = vsub.s32 0, %v36
    %v38 = vrot.slane %v33, %v37
    %vm40 = vcmask 261120
    %v42 = vsel %vm40, %v27, 0
    %v45 = vsel %vm40, %v28, 0
    %47 = vmatprep.subr.mxu0 0.0
    %48 = vmatpush1.msra.mxu0 %v29
    %49 = vmatprep.subr.mxu0 0.0
    %50 = vmatpush1.msra.mxu0 %v30
    %51 = vmatprep.subr.mxu0 0.0
    %52 = vmatpush1.msra.mxu0 %v31
    %53 = vmatprep.subr.mxu0 0.0
    %54 = vmatpush1.msra.mxu0 %v32
    %55 = vmatprep.subr.mxu0 0.0
    %56 = vmatpush1.msra.mxu0 0.0
    %57 = vmatprep.subr.mxu0 0.0
    %58 = vmatpush1.msra.mxu0 0.0
    %59 = vmatprep.subr.mxu0 0.0
    %60 = vmatpush1.msra.mxu0 0.0
    %61 = vmatprep.subr.mxu0 0.0
    %62 = vmatpush1.msra.mxu0 0.0
    %63 = vmatprep.subr.mxu0 0.0
    %64 = vmatpush1.msra.mxu0 0.0
    %65 = vmatprep.subr.mxu0 0.0
    %66 = vmatpush1.msra.mxu0 0.0
    %67 = vmatprep.subr.mxu0 0.0
    %68 = vmatpush1.msra.mxu0 0.0
    %69 = vmatprep.subr.mxu0 0.0
    %70 = vmatpush1.msra.mxu0 0.0
    %71 = vmatprep.subr.mxu0 0.0
    %72 = vmatpush1.msra.mxu0 0.0
    %73 = vmatprep.subr.mxu0 0.0
    %74 = vmatpush1.msra.mxu0 0.0
    %75 = vmatprep.subr.mxu0 0.0
    %76 = vmatpush1.msra.mxu0 0.0
    %77 = vmatprep.subr.mxu0 0.0
    %78 = vmatpush1.msra.mxu0 0.0
    %79 = vmatprep.subr.mxu0 0.0
    %80 = vmatpush1.msra.mxu0 0.0
    %81 = vmatprep.subr.mxu0 0.0
    %82 = vmatpush1.msra.mxu0 0.0
    %83 = vmatprep.subr.mxu0 0.0
    %84 = vmatpush1.msra.mxu0 0.0
    %85 = vmatprep.subr.mxu0 0.0
    %86 = vmatpush1.msra.mxu0 0.0
    %87 = vmatprep.subr.mxu0 0.0
    %88 = vmatpush1.msra.mxu0 0.0
    %89 = vmatprep.subr.mxu0 0.0
    %90 = vmatpush1.msra.mxu0 0.0
    %91 = vmatprep.subr.mxu0 0.0
    %92 = vmatpush1.msra.mxu0 0.0
    %93 = vmatprep.subr.mxu0 0.0
    %94 = vmatpush1.msra.mxu0 0.0
    %95 = vmatprep.subr.mxu0 0.0
    %96 = vmatpush1.msra.mxu0 0.0
    %97 = vmatprep.subr.mxu0 0.0
    %98 = vmatpush1.msra.mxu0 0.0
    %99 = vmatprep.subr.mxu0 0.0
    %100 = vmatpush1.msra.mxu0 0.0
    %101 = vmatprep.subr.mxu0 0.0
    %102 = vmatpush1.msra.mxu0 0.0
    %103 = vmatprep.subr.mxu0 0.0
    %104 = vmatpush1.msra.mxu0 0.0
    %105 = vmatprep.subr.mxu0 0.0
    %106 = vmatpush1.msra.mxu0 0.0
    %107 = vmatprep.subr.mxu0 0.0
    %108 = vmatpush1.msra.mxu0 0.0
    %109 = vmatprep.subr.mxu0 0.0
    %110 = vmatpush1.msra.mxu0 0.0
    %111 = vmatprep.mubr.f32.mxu0 0.0
    %112 = vmatmul.mubr.f32.gmra.mrb[0].mxu0 %v42
    %v113 = vpop.f32.mrb[0].mxu0
    %v114 = vadd.f32 %v38, %v113
    %v115 = vpop.f32.mrb[0].mxu0
    %116 = vmatprep.mubr.f32.mxu0 0.0
    %117 = vmatmul.mubr.f32.gmra.mrb[0].mxu0 %v45
    %v118 = vpop.f32.mrb[0].mxu0
    %v119 = vadd.f32 %v38, %v118
    %v120 = vpop.f32.mrb[0].mxu0
    %121 = vdwg.mxu0
    %v122 = vmax.f32 %v114, 0.0
    %v123 = vmax.f32 %v119, 0.0
    %v124 = vld [vmem:[%s3] sm:$0xff]
    %v125 = vld [vmem:[%s3 + $0x8] sm:$0xff]
    %v126 = vld [vmem:[%s3 + $0x10] sm:$0xff]
    %v127 = vld [vmem:[%s3 + $0x18] sm:$0xff]
    %v128 = vld [vmem:[%s3 + $0x20] sm:$0xff]
    %v129 = vld [vmem:[%s3 + $0x28] sm:$0xff]
    %v130 = vld [vmem:[%s3 + $0x30] sm:$0xff]
    %v131 = vld [vmem:[%s3 + $0x38] sm:$0xff]
    %v132 = vld [vmem:[%s4] sm:$0x1]
    %v134 = vlaneseq
    %v135 = vshrl.u32 %v134, 7
    %v136 = vsub.s32 0, %v135
    %v137 = vrot.slane %v132, %v136
    %vm139 = vcmask 523264
    %v141 = vsel %vm139, %v122, 0
    %v144 = vsel %vm139, %v123, 0
    %146 = vmatprep.subr.mxu0 0.0
    %147 = vmatpush1.msra.mxu0 %v124
    %148 = vmatprep.subr.mxu0 0.0
    %149 = vmatpush1.msra.mxu0 %v125
    %150 = vmatprep.subr.mxu0 0.0
    %151 = vmatpush1.msra.mxu0 %v126
    %152 = vmatprep.subr.mxu0 0.0
    %153 = vmatpush1.msra.mxu0 %v127
    %154 = vmatprep.subr.mxu0 0.0
    %155 = vmatpush1.msra.mxu0 %v128
    %156 = vmatprep.subr.mxu0 0.0
    %157 = vmatpush1.msra.mxu0 %v129
    %158 = vmatprep.subr.mxu0 0.0
    %159 = vmatpush1.msra.mxu0 %v130
    %160 = vmatprep.subr.mxu0 0.0
    %161 = vmatpush1.msra.mxu0 %v131
    %162 = vmatprep.subr.mxu0 0.0
    %163 = vmatpush1.msra.mxu0 0.0
    %164 = vmatprep.subr.mxu0 0.0
    %165 = vmatpush1.msra.mxu0 0.0
    %166 = vmatprep.subr.mxu0 0.0
    %167 = vmatpush1.msra.mxu0 0.0
    %168 = vmatprep.subr.mxu0 0.0
    %169 = vmatpush1.msra.mxu0 0.0
    %170 = vmatprep.subr.mxu0 0.0
    %171 = vmatpush1.msra.mxu0 0.0
    %172 = vmatprep.subr.mxu0 0.0
    %173 = vmatpush1.msra.mxu0 0.0
    %174 = vmatprep.subr.mxu0 0.0
    %175 = vmatpush1.msra.mxu0 0.0
    %176 = vmatprep.subr.mxu0 0.0
    %177 = vmatpush1.msra.mxu0 0.0
    %178 = vmatprep.subr.mxu0 0.0
    %179 = vmatpush1.msra.mxu0 0.0
    %180 = vmatprep.subr.mxu0 0.0
    %181 = vmatpush1.msra.mxu0 0.0
    %182 = vmatprep.subr.mxu0 0.0
    %183 = vmatpush1.msra.mxu0 0.0
    %184 = vmatprep.subr.mxu0 0.0
    %185 = vmatpush1.msra.mxu0 0.0
    %186 = vmatprep.subr.mxu0 0.0
    %187 = vmatpush1.msra.mxu0 0.0
    %188 = vmatprep.subr.mxu0 0.0
    %189 = vmatpush1.msra.mxu0 0.0
    %190 = vmatprep.subr.mxu0 0.0
    %191 = vmatpush1.msra.mxu0 0.0
    %192 = vmatprep.subr.mxu0 0.0
    %193 = vmatpush1.msra.mxu0 0.0
    %194 = vmatprep.subr.mxu0 0.0
    %195 = vmatpush1.msra.mxu0 0.0
    %196 = vmatprep.subr.mxu0 0.0
    %197 = vmatpush1.msra.mxu0 0.0
    %198 = vmatprep.subr.mxu0 0.0
    %199 = vmatpush1.msra.mxu0 0.0
    %200 = vmatprep.subr.mxu0 0.0
    %201 = vmatpush1.msra.mxu0 0.0
    %202 = vmatprep.subr.mxu0 0.0
    %203 = vmatpush1.msra.mxu0 0.0
    %204 = vmatprep.subr.mxu0 0.0
    %205 = vmatpush1.msra.mxu0 0.0
    %206 = vmatprep.subr.mxu0 0.0
    %207 = vmatpush1.msra.mxu0 0.0
    %208 = vmatprep.subr.mxu0 0.0
    %209 = vmatpush1.msra.mxu0 0.0
    %210 = vmatprep.mubr.f32.mxu0 0.0
    %211 = vmatmul.mubr.f32.gmra.mrb[0].mxu0 %v141
    %v212 = vpop.f32.mrb[0].mxu0
    %v213 = vadd.f32 %v137, %v212
    %v214 = vpop.f32.mrb[0].mxu0
    %215 = vmatprep.mubr.f32.mxu0 0.0
    %216 = vmatmul.mubr.f32.gmra.mrb[0].mxu0 %v144
    %v217 = vpop.f32.mrb[0].mxu0
    %v218 = vadd.f32 %v137, %v217
    %v219 = vpop.f32.mrb[0].mxu0
    %220 = vdwg.mxu0
    %v221 = vadd.f32 %v27, %v213
    %v222 = vadd.f32 %v28, %v218
    %v223 = vsel %vm40, %v221, 0.0
    %224 = vadd.xlane.f32.xlu0 %v223
    %v225 = vpop.xlane.xlu0 %224
    %v226 = vsel %vm40, %v222, 0.0
    %227 = vadd.xlane.f32.xlu0 %v226
    %v228 = vpop.xlane.xlu0 %227
    %v229 = vrcp.pop 32.0
    %v230 = vmul.f32 %v225, %v229
    %v231 = vmul.f32 %v228, %v229
    %v232 = vsub.f32 %v221, %v230
    %v233 = vsub.f32 %v222, %v231
    %v234 = vmul.f32 %v232, %v232
    %v235 = vmul.f32 %v233, %v233
    %v236 = vsel %vm40, %v234, 0.0
    %237 = vadd.xlane.f32.xlu0 %v236
    %v238 = vpop.xlane.xlu0 %237
    %v239 = vsel %vm40, %v235, 0.0
    %240 = vadd.xlane.f32.xlu0 %v239
    %v241 = vpop.xlane.xlu0 %240
    %v242 = vmul.f32 %v238, %v229
    %v243 = vmul.f32 %v241, %v229
    %v244 = vadd.f32 %v242, 1e-05
    %v245 = vadd.f32 %v243, 1e-05
    %v246 = vrsqrt.pop %v244
    %v247 = vrsqrt.pop %v245
    %v248 = vmul.f32 %v232, %v246
    %v249 = vmul.f32 %v233, %v247
    %v250 = vld [vmem:[%s5] sm:$0x1]
    %v252 = vlaneseq
    %v253 = vshrl.u32 %v252, 7
    %v254 = vsub.s32 0, %v253
    %v255 = vrot.slane %v250, %v254
    %v257 = vmul.f32 %v248, %v255
    %v258 = vmul.f32 %v249, %v255
    %v259 = vld [vmem:[%s6] sm:$0x1]
    %v261 = vlaneseq
    %v262 = vshrl.u32 %v261, 7
    %v263 = vsub.s32 0, %v262
    %v264 = vrot.slane %v259, %v263
    %v266 = vadd.f32 %v257, %v264
    %v267 = vadd.f32 %v258, %v264
    %268 = vst.msk [vmem:[#allocation2] sm:$0xff] %vm40, %v266
    %269 = vst.msk [vmem:[#allocation2 + $0x8] sm:$0xff] %vm40, %v267
    // Predicated region
    $region30: #{decoder_layer.15} parent=1 // pred_check
      _
    $region31: #{decoder_layer.15} parent=1 // pred_check_branch
      %271 = sbr.rel (0) target = $region33
    $region32: #{decoder_layer.15} parent=1 // pred_region
      %s273 = ssub.s32 256, 256
      %274 = vsyncadd [#allocation3], %s273
      %s275 = sshll.u32 [#allocation2], 4
      %s276 = int_to_ptr.vmem [resolvable:$true] %s275
      %281 = dma.vmem_to_hbm [thread:$0]  %s276, 256, %s7, [#allocation3], 128, 128, 8
    $region33: #{decoder_layer.15} parent=1 // pred_fallthru
      _
    // Predicated region
    $region34: #{decoder_layer.15} parent=1 // pred_check
      _
    $region35: #{decoder_layer.15} parent=1 // pred_check_branch
      %283 = sbr.rel (0) target = $region37
    $region36: #{decoder_layer.15} parent=1 // pred_region
      %284 = dma.done [#allocation3], 256
    $region37: #{decoder_layer.15} parent=1 // pred_fallthru
      _
    %285 = vsyncpa [#allocation3], 1

// kernel: decoder_layer.12
$region0: #{decoder_layer.12}
  #allocation0 [shape = 'u32[]', space=smem, size = 0x4, offset = 0x4, fixed_abs, tag = 'smem constant byte address 0x4 - core index']
  #allocation1 [shape = 'u32[144,128]{1,0:T(1,128)}', space=vmem, size = 0x12000, scoped, tag = 'internal scratch']
  %s0 = inlined_call_operand.vmem [shape: f32[16,32], index: 0, kind: input, shape index: {}]
  %s1 = inlined_call_operand.vmem [shape: f32[32,64], index: 1, kind: input, shape index: {}]
  %s2 = inlined_call_operand.vmem [shape: f32[1,64], index: 2, kind: input, shape index: {}]
  %s3 = inlined_call_operand.vmem [shape: f32[16,64], index: 3, kind: output, shape index: {}]
  %s4 = sld [smem:[#allocation0]]
  $region22: #{decoder_layer.12} parent=0
    _
  %s6 = ssub.s32 1, %s4
  %s7 = scalar_select 0, %s6, %s4
  // Predicated region
  $region2: #{decoder_layer.12} parent=0 // pred_check
    _
  $region3: #{decoder_layer.12} parent=0 // pred_check_branch
    %9 = sbr.rel (0) target = $region5
  $region4: #{decoder_layer.12} parent=0 // pred_region
    _
  $region5: #{decoder_layer.12} parent=0 // pred_fallthru
    _
  // Predicated region
  $region6: #{decoder_layer.12} parent=0 // pred_check
    _
  $region7: #{decoder_layer.12} parent=0 // pred_check_branch
    %11 = sbr.rel (0) target = $region9
  $region8: #{decoder_layer.12} parent=0 // pred_region
    _
  $region9: #{decoder_layer.12} parent=0 // pred_fallthru
    _
  // Predicated region
  $region10: #{decoder_layer.12} parent=0 // pred_check
    _
  $region11: #{decoder_layer.12} parent=0 // pred_check_branch
    %13 = sbr.rel (0) target = $region13
  $region12: #{decoder_layer.12} parent=0 // pred_region
    _
  $region13: #{decoder_layer.12} parent=0 // pred_fallthru
    _
  %v14 = vld [vmem:[%s0] sm:$0xff]
  %v15 = vld [vmem:[%s0 + $0x8] sm:$0xff]
  %v16 = vld [vmem:[%s1] sm:$0xff]
  %v17 = vld [vmem:[%s1 + $0x8] sm:$0xff]
  %v18 = vld [vmem:[%s1 + $0x10] sm:$0xff]
  %v19 = vld [vmem:[%s1 + $0x18] sm:$0xff]
  %v20 = vld [vmem:[%s2] sm:$0x1]
  %v22 = vlaneseq
  %v23 = vshrl.u32 %v22, 7
  %v24 = vsub.s32 0, %v23
  %v25 = vrot.slane %v20, %v24
  %vm27 = vcmask 261120
  %v29 = vsel %vm27, %v14, 0
  %v32 = vsel %vm27, %v15, 0
  %34 = vmatprep.subr.mxu0 0.0
  %35 = vmatpush1.msra.mxu0 %v16
  %36 = vmatprep.subr.mxu0 0.0
  %37 = vmatpush1.msra.mxu0 %v17
  %38 = vmatprep.subr.mxu0 0.0
  %39 = vmatpush1.msra.mxu0 %v18
  %40 = vmatprep.subr.mxu0 0.0
  %41 = vmatpush1.msra.mxu0 %v19
  %42 = vmatprep.subr.mxu0 0.0
  %43 = vmatpush1.msra.mxu0 0.0
  %44 = vmatprep.subr.mxu0 0.0
  %45 = vmatpush1.msra.mxu0 0.0
  %46 = vmatprep.subr.mxu0 0.0
  %47 = vmatpush1.msra.mxu0 0.0
  %48 = vmatprep.subr.mxu0 0.0
  %49 = vmatpush1.msra.mxu0 0.0
  %50 = vmatprep.subr.mxu0 0.0
  %51 = vmatpush1.msra.mxu0 0.0
  %52 = vmatprep.subr.mxu0 0.0
  %53 = vmatpush1.msra.mxu0 0.0
  %54 = vmatprep.subr.mxu0 0.0
  %55 = vmatpush1.msra.mxu0 0.0
  %56 = vmatprep.subr.mxu0 0.0
  %57 = vmatpush1.msra.mxu0 0.0
  %58 = vmatprep.subr.mxu0 0.0
  %59 = vmatpush1.msra.mxu0 0.0
  %60 = vmatprep.subr.mxu0 0.0
  %61 = vmatpush1.msra.mxu0 0.0
  %62 = vmatprep.subr.mxu0 0.0
  %63 = vmatpush1.msra.mxu0 0.0
  %64 = vmatprep.subr.mxu0 0.0
  %65 = vmatpush1.msra.mxu0 0.0
  %66 = vmatprep.subr.mxu0 0.0
  %67 = vmatpush1.msra.mxu0 0.0
  %68 = vmatprep.subr.mxu0 0.0
  %69 = vmatpush1.msra.mxu0 0.0
  %70 = vmatprep.subr.mxu0 0.0
  %71 = vmatpush1.msra.mxu0 0.0
  %72 = vmatprep.subr.mxu0 0.0
  %73 = vmatpush1.msra.mxu0 0.0
  %74 = vmatprep.subr.mxu0 0.0
  %75 = vmatpush1.msra.mxu0 0.0
  %76 = vmatprep.subr.mxu0 0.0
  %77 = vmatpush1.msra.mxu0 0.0
  %78 = vmatprep.subr.mxu0 0.0
  %79 = vmatpush1.msra.mxu0 0.0
  %80 = vmatprep.subr.mxu0 0.0
  %81 = vmatpush1.msra.mxu0 0.0
  %82 = vmatprep.subr.mxu0 0.0
  %83 = vmatpush1.msra.mxu0 0.0
  %84 = vmatprep.subr.mxu0 0.0
  %85 = vmatpush1.msra.mxu0 0.0
  %86 = vmatprep.subr.mxu0 0.0
  %87 = vmatpush1.msra.mxu0 0.0
  %88 = vmatprep.subr.mxu0 0.0
  %89 = vmatpush1.msra.mxu0 0.0
  %90 = vmatprep.subr.mxu0 0.0
  %91 = vmatpush1.msra.mxu0 0.0
  %92 = vmatprep.subr.mxu0 0.0
  %93 = vmatpush1.msra.mxu0 0.0
  %94 = vmatprep.subr.mxu0 0.0
  %95 = vmatpush1.msra.mxu0 0.0
  %96 = vmatprep.subr.mxu0 0.0
  %97 = vmatpush1.msra.mxu0 0.0
  %98 = vmatprep.mubr.f32.mxu0 0.0
  %99 = vmatmul.mubr.f32.gmra.mrb[0].mxu0 %v29
  %v100 = vpop.f32.mrb[0].mxu0
  %v101 = vadd.f32 %v25, %v100
  %v102 = vpop.f32.mrb[0].mxu0
  %103 = vmatprep.mubr.f32.mxu0 0.0
  %104 = vmatmul.mubr.f32.gmra.mrb[0].mxu0 %v32
  %v105 = vpop.f32.mrb[0].mxu0
  %v106 = vadd.f32 %v25, %v105
  %v107 = vpop.f32.mrb[0].mxu0
  %108 = vdwg.mxu0
  %vm109 = vcmask 523264
  %110 = vst.msk [vmem:[%s3] sm:$0xff] %vm109, %v101
  %111 = vst.msk [vmem:[%s3 + $0x8] sm:$0xff] %vm109, %v106
  // Predicated region
  $region14: #{decoder_layer.12} parent=0 // pred_check
    _
  $region15: #{decoder_layer.12} parent=0 // pred_check_branch
    %113 = sbr.rel (0) target = $region17
  $region16: #{decoder_layer.12} parent=0 // pred_region
    _
  $region17: #{decoder_layer.12} parent=0 // pred_fallthru
    _
  // Predicated region
  $region18: #{decoder_layer.12} parent=0 // pred_check
    _
  $region19: #{decoder_layer.12} parent=0 // pred_check_branch
    %115 = sbr.rel (0) target = $region21
  $region20: #{decoder_layer.12} parent=0 // pred_region
    _
  $region21: #{decoder_layer.12} parent=0 // pred_fallthru
    _

// kernel: decoder_layer.13
$region0: #{decoder_layer.13}
  #allocation0 [shape = 'u32[]', space=smem, size = 0x4, offset = 0x4, fixed_abs, tag = 'smem constant byte address 0x4 - core index']
  #allocation1 [shape = 'u32[144,128]{1,0:T(1,128)}', space=vmem, size = 0x12000, scoped, tag = 'internal scratch']
  %s0 = inlined_call_operand.vmem [shape: f32[2,8,32], index: 0, kind: input, shape index: {}]
  %s1 = inlined_call_operand.vmem [shape: f32[2,8,64], index: 1, kind: input, shape index: {}]
  %s2 = inlined_call_operand.vmem [shape: f32[2,1,1,8], index: 2, kind: input, shape index: {}]
  %s3 = inlined_call_operand.vmem [shape: f32[2,8,32], index: 3, kind: output, shape index: {0}]
  %s4 = inlined_call_operand.hbm [shape: f32[2,4,8,8], index: 4, kind: output, shape index: {1}]
  %5 = xla_tuple %s3, %s4
  %s6 = sld [smem:[#allocation0]]
  $region53: #{decoder_layer.13} parent=0
    _
  %s8 = ssub.s32 1, %s6
  %s9 = scalar_select 0, %s8, %s6
  $region1: #{decoder_layer.13} parent=0
    #allocation2 [shape = 'u8[32768]{0}', space=vmem, size = 0x8000, scoped, tag = 'output window, operand 1']
    #allocation3 [shape = 's32[2]{0}', space=sflag, size = 0x8, scoped, tag = 'scoped memory for decoder_layer.13']
    %10 = vsyncpa [#allocation3], 0
    %s11 = scalar_lea.sflag [#allocation3], 1
    %12 = vsyncpa %s11, 0
    loop: start=0, step=1, limit=4
    $region2: #{decoder_layer.13} parent=1 // loop_pre_header
      _
    $region3: #{decoder_layer.13} parent=1 // loop_header
      %s14 = sphi 0, %s18
      %p15 = scmp.ge.s32.totalorder %s14, 4
      %s24 = sphi 0, %s26
      %s27 = sphi 0, %s24
      %s28 = sphi 0, %s27
      %s44 = sphi 0, %s28
      %s50 = sphi 0, %s52
      %s53 = sphi 0, %s50
      %s54 = sphi 0, %s53
      %s70 = sphi 0, %s54
      %s76 = sphi 0, %s78
      %s79 = sphi 0, %s76
      %s80 = sphi 0, %s79
      %s96 = sphi 0, %s80
      %s102 = sphi 0, %s104
      %s105 = sphi 0, %s102
      %s106 = sphi 0, %s105
      %s122 = sphi 0, %s106
      %s128 = sphi 0, %s130
      %s131 = sphi 0, %s128
      %s132 = sphi 0, %s131
      %s148 = sphi 0, %s132
    $region4: #{decoder_layer.13} parent=1 // loop_header_branch
      %17 = sbr.rel (%p15) target = $region8
    $region5: #{decoder_layer.13} parent=1 // loop_body
      %s19 = ssub.s32 %s14, 1
      %s20 = ssub.s32 %s14, 2
      %s21 = sadd.s32 %s14, 1
      %s22 = ssub.s32 %s14, %s21
      %p23 = scmp.eq.s32.totalorder %s22, 0
      %s25 = sadd.s32 %s24, 1
      %s26 = scalar_select %p23, %s24, %s25
      %p29 = pneg %p23
      %p30 = scmp.eq.s32.totalorder %s14, 1
      %p31 = por %p29, %p30
      %p32 = scmp.ne.s32.totalorder %s24, %s27
      %p33 = scmp.eq.s32.totalorder %s14, 0
      %p34 = por %p32, %p33
      %p35 = scmp.ne.s32.totalorder %s24, %s27
      %p36 = scmp.eq.s32.totalorder %s19, 1
      %p37 = por %p35, %p36
      %p38 = scmp.ne.s32.totalorder %s27, %s28
      %p39 = scmp.eq.s32.totalorder %s19, 0
      %p40 = por %p38, %p39
      %p41 = scmp.ne.s32.totalorder %s27, %s28
      %p42 = scmp.eq.s32.totalorder %s20, 1
      %p43 = por %p41, %p42
      %p45 = scmp.ne.s32.totalorder %s28, %s44
      %p46 = scmp.eq.s32.totalorder %s20, 0
      %p47 = por %p45, %p46
      %s48 = ssub.s32 %s14, %s21
      %p49 = scmp.eq.s32.totalorder %s48, 0
      %s51 = sadd.s32 %s50, 1
      %s52 = scalar_select %p49, %s50, %s51
      %p55 = pneg %p49
      %p56 = scmp.eq.s32.totalorder %s14, 1
      %p57 = por %p55, %p56
      %p58 = scmp.ne.s32.totalorder %s50, %s53
      %p59 = scmp.eq.s32.totalorder %s14, 0
      %p60 = por %p58, %p59
      %p61 = scmp.ne.s32.totalorder %s50, %s53
      %p62 = scmp.eq.s32.totalorder %s19, 1
      %p63 = por %p61, %p62
      %p64 = scmp.ne.s32.totalorder %s53, %s54
      %p65 = scmp.eq.s32.totalorder %s19, 0
      %p66 = por %p64, %p65
      %p67 = scmp.ne.s32.totalorder %s53, %s54
      %p68 = scmp.eq.s32.totalorder %s20, 1
      %p69 = por %p67, %p68
      %p71 = scmp.ne.s32.totalorder %s54, %s70
      %p72 = scmp.eq.s32.totalorder %s20, 0
      %p73 = por %p71, %p72
      %s74 = ssub.s32 %s14, %s21
      %p75 = scmp.eq.s32.totalorder %s74, 0
      %s77 = sadd.s32 %s76, 1
      %s78 = scalar_select %p75, %s76, %s77
      %p81 = pneg %p75
      %p82 = scmp.eq.s32.totalorder %s14, 1
      %p83 = por %p81, %p82
      %p84 = scmp.ne.s32.totalorder %s76, %s79
      %p85 = scmp.eq.s32.totalorder %s14, 0
      %p86 = por %p84, %p85
      %p87 = scmp.ne.s32.totalorder %s76, %s79
      %p88 = scmp.eq.s32.totalorder %s19, 1
      %p89 = por %p87, %p88
      %p90 = scmp.ne.s32.totalorder %s79, %s80
      %p91 = scmp.eq.s32.totalorder %s19, 0
      %p92 = por %p90, %p91
      %p93 = scmp.ne.s32.totalorder %s79, %s80
      %p94 = scmp.eq.s32.totalorder %s20, 1
      %p95 = por %p93, %p94
      %p97 = scmp.ne.s32.totalorder %s80, %s96
      %p98 = scmp.eq.s32.totalorder %s20, 0
      %p99 = por %p97, %p98
      %s100 = ssub.s32 %s14, %s21
      %p101 = scmp.eq.s32.totalorder %s100, 0
      %s103 = sadd.s32 %s102, 1
      %s104 = scalar_select %p101, %s102, %s103
      %p107 = pneg %p101
      %p108 = scmp.eq.s32.totalorder %s14, 1
      %p109 = por %p107, %p108
      %p110 = scmp.ne.s32.totalorder %s102, %s105
      %p111 = scmp.eq.s32.totalorder %s14, 0
      %p112 = por %p110, %p111
      %p113 = scmp.ne.s32.totalorder %s102, %s105
      %p114 = scmp.eq.s32.totalorder %s19, 1
      %p115 = por %p113, %p114
      %p116 = scmp.ne.s32.totalorder %s105, %s106
      %p117 = scmp.eq.s32.totalorder %s19, 0
      %p118 = por %p116, %p117
      %p119 = scmp.ne.s32.totalorder %s105, %s106
      %p120 = scmp.eq.s32.totalorder %s20, 1
      %p121 = por %p119, %p120
      %p123 = scmp.ne.s32.totalorder %s106, %s122
      %p124 = scmp.eq.s32.totalorder %s20, 0
      %p125 = por %p123, %p124
      %s126 = ssub.s32 %s14, %s21
      %p127 = scmp.eq.s32.totalorder %s126, 0
      %s129 = sadd.s32 %s128, 1
      %s130 = scalar_select %p127, %s128, %s129
      %p133 = pneg %p127
      %p134 = scmp.eq.s32.totalorder %s14, 1
      %p135 = por %p133, %p134
      %p136 = scmp.ne.s32.totalorder %s128, %s131
      %p137 = scmp.eq.s32.totalorder %s14, 0
      %p138 = por %p136, %p137
      %p139 = scmp.ne.s32.totalorder %s128, %s131
      %p140 = scmp.eq.s32.totalorder %s19, 1
      %p141 = por %p139, %p140
      %p142 = scmp.ne.s32.totalorder %s131, %s132
      %p143 = scmp.eq.s32.totalorder %s19, 0
      %p144 = por %p142, %p143
      %p145 = scmp.ne.s32.totalorder %s131, %s132
      %p146 = scmp.eq.s32.totalorder %s20, 1
      %p147 = por %p145, %p146
      %p149 = scmp.ne.s32.totalorder %s132, %s148
      %p150 = scmp.eq.s32.totalorder %s20, 0
      %p151 = por %p149, %p150
      %p152 = scmp.le.s32.totalorder 1, %s14
      %p153 = scmp.lt.s32.totalorder %s14, 3
      %p154 = pnand %p152, %p153
      %p155 = pneg %p154
      // Predicated region
      $region9: #{decoder_layer.13} parent=5 // pred_check
        _
      $region10: #{decoder_layer.13} parent=5 // pred_check_branch
        %157 = sbr.rel (%p154) target = $region12
      $region11: #{decoder_layer.13} parent=5 // pred_region
        %s158 = ssub.s32 %s14, 1
      $region12: #{decoder_layer.13} parent=5 // pred_fallthru
        _
      %p159 = scmp.lt.s32.totalorder %s14, 2
      // Predicated region
      $region13: #{decoder_layer.13} parent=5 // pred_check
        %p160 = pneg %p159
      $region14: #{decoder_layer.13} parent=5 // pred_check_branch
        %162 = sbr.rel (%p160) target = $region16
      $region15: #{decoder_layer.13} parent=5 // pred_region
        // Predicated region
        $region17: #{decoder_layer.13} parent=15 // pred_check
          %p163 = pneg %p34
        $region18: #{decoder_layer.13} parent=15 // pred_check_branch
          %165 = sbr.rel (%p163) target = $region20
        $region19: #{decoder_layer.13} parent=15 // pred_region
          %p166 = scmp.lt.s32.totalorder %s14, 1
          %s167 = scalar_select %p166, %s14, 1
          %s168 = smul.addr %s167, 8
          %s169 = scalar_lea.vmem %s0, %s168
        $region20: #{decoder_layer.13} parent=15 // pred_fallthru
          _
        // Predicated region
        $region21: #{decoder_layer.13} parent=15 // pred_check
          %p170 = pneg %p60
        $region22: #{decoder_layer.13} parent=15 // pred_check_branch
          %172 = sbr.rel (%p170) target = $region24
        $region23: #{decoder_layer.13} parent=15 // pred_region
          %p173 = scmp.lt.s32.totalorder %s14, 1
          %s174 = scalar_select %p173, %s14, 1
          %s175 = smul.addr %s174, 8
          %s176 = scalar_lea.vmem %s1, %s175
        $region24: #{decoder_layer.13} parent=15 // pred_fallthru
          _
        // Predicated region
        $region25: #{decoder_layer.13} parent=15 // pred_check
          %p177 = pneg %p86
        $region26: #{decoder_layer.13} parent=15 // pred_check_branch
          %179 = sbr.rel (%p177) target = $region28
        $region27: #{decoder_layer.13} parent=15 // pred_region
          %p180 = scmp.lt.s32.totalorder %s14, 1
          %s181 = scalar_select %p180, %s14, 1
          %s182 = scalar_lea.vmem %s2, %s181
        $region28: #{decoder_layer.13} parent=15 // pred_fallthru
          _
      $region16: #{decoder_layer.13} parent=5 // pred_fallthru
        _
      %p183 = scmp.le.s32.totalorder 1, %s14
      %p184 = scmp.lt.s32.totalorder %s14, 3
      %p185 = pnand %p183, %p184
      %p186 = pneg %p185
      // Predicated region
      $region29: #{decoder_layer.13} parent=5 // pred_check
        _
      $region30: #{decoder_layer.13} parent=5 // pred_check_branch
        %188 = sbr.rel (%p185) target = $region32
      $region31: #{decoder_layer.13} parent=5 // pred_region
        %s189 = ssub.s32 %s14, 1
        %p190 = scmp.lt.s32.totalorder %s19, 1
        %s191 = scalar_select %p190, %s19, 1
        %s192 = smul.addr %s191, 8
        %s193 = scalar_lea.vmem %s0, %s192
        %p194 = pneg %p40
        %p195 = pneg %p37
        %p196 = scmp.lt.s32.totalorder %s19, 1
        %s197 = scalar_select %p196, %s19, 1
        %s198 = smul.addr %s197, 8
        %s199 = scalar_lea.vmem %s1, %s198
        %p200 = pneg %p66
        %p201 = pneg %p63
        %p202 = scmp.lt.s32.totalorder %s19, 1
        %s203 = scalar_select %p202, %s19, 1
        %s204 = scalar_lea.vmem %s2, %s203
        %p205 = pneg %p92
        %p206 = pneg %p89
        %p207 = pneg %p118
        %p208 = pneg %p115
        %p209 = scmp.lt.s32.totalorder %s19, 1
        %s210 = scalar_select %p209, %s19, 1
        %s211 = smul.addr %s210, 8
        %s212 = scalar_lea.vmem %s3, %s211
        %p213 = pneg %p144
        %p214 = pneg %p141
        %s215 = sand.u32 %s131, 1
        %s216 = scalar_lea.sflag [#allocation3], %s215
        %s217 = sand.u32 %s131, 1
        %s218 = smul.addr %s217, 32
        %s219 = scalar_lea.vmem [#allocation2], %s218
        %p220 = scmp.lt.s32.totalorder %s19, 1
        %s221 = scalar_select %p220, %s19, 1
        %s222 = smul.addr %s221, 8
        %s223 = scalar_lea.vmem %s0, %s222
        %p224 = scmp.lt.s32.totalorder %s19, 1
        %s225 = scalar_select %p224, %s19, 1
        %s226 = smul.addr %s225, 8
        %s227 = scalar_lea.vmem %s1, %s226
        %p228 = scmp.lt.s32.totalorder %s19, 1
        %s229 = scalar_select %p228, %s19, 1
        %s230 = scalar_lea.vmem %s2, %s229
        %p231 = scmp.lt.s32.totalorder %s19, 1
        %s232 = scalar_select %p231, %s19, 1
        %s233 = smul.addr %s232, 8
        %s234 = scalar_lea.vmem %s3, %s233
        %v235 = vld [vmem:[%s223] sm:$0xff]
        %v236 = vld [vmem:[%s227] sm:$0xff]
        %v237 = vld [vmem:[%s230] sm:$0x1]
        %vm238 = vcmask 64512
        %v240 = vsel %vm238, %v235, 0
        %v243 = vsel %vm238, %v236, 0
        %245 = vmatprep.subr.mxu0 0.0
        %246 = vmatpush1.xpose.msra.mxu0 %v243
        %247 = vmatprep.subr.mxu0 0.0
        %248 = vmatpush1.xpose.msra.mxu0 0.0
        %249 = vmatprep.subr.mxu0 0.0
        %250 = vmatpush1.xpose.msra.mxu0 0.0
        %251 = vmatprep.subr.mxu0 0.0
        %252 = vmatpush1.xpose.msra.mxu0 0.0
        %253 = vmatprep.subr.mxu0 0.0
        %254 = vmatpush1.xpose.msra.mxu0 0.0
        %255 = vmatprep.subr.mxu0 0.0
        %256 = vmatpush1.xpose.msra.mxu0 0.0
        %257 = vmatprep.subr.mxu0 0.0
        %258 = vmatpush1.xpose.msra.mxu0 0.0
        %259 = vmatprep.subr.mxu0 0.0
        %260 = vmatpush1.xpose.msra.mxu0 0.0
        %261 = vmatprep.subr.mxu0 0.0
        %262 = vmatpush1.xpose.msra.mxu0 0.0
        %263 = vmatprep.subr.mxu0 0.0
        %264 = vmatpush1.xpose.msra.mxu0 0.0
        %265 = vmatprep.subr.mxu0 0.0
        %266 = vmatpush1.xpose.msra.mxu0 0.0
        %267 = vmatprep.subr.mxu0 0.0
        %268 = vmatpush1.xpose.msra.mxu0 0.0
        %269 = vmatprep.subr.mxu0 0.0
        %270 = vmatpush1.xpose.msra.mxu0 0.0
        %271 = vmatprep.subr.mxu0 0.0
        %272 = vmatpush1.xpose.msra.mxu0 0.0
        %273 = vmatprep.subr.mxu0 0.0
        %274 = vmatpush1.xpose.msra.mxu0 0.0
        %275 = vmatprep.subr.mxu0 0.0
        %276 = vmatpush1.xpose.msra.mxu0 0.0
        %277 = vmatprep.subr.mxu0 0.0
        %278 = vmatpush1.xpose.msra.mxu0 0.0
        %279 = vmatprep.subr.mxu0 0.0
        %280 = vmatpush1.xpose.msra.mxu0 0.0
        %281 = vmatprep.subr.mxu0 0.0
        %282 = vmatpush1.xpose.msra.mxu0 0.0
        %283 = vmatprep.subr.mxu0 0.0
        %284 = vmatpush1.xpose.msra.mxu0 0.0
        %285 = vmatprep.subr.mxu0 0.0
        %286 = vmatpush1.xpose.msra.mxu0 0.0
        %287 = vmatprep.subr.mxu0 0.0
        %288 = vmatpush1.xpose.msra.mxu0 0.0
        %289 = vmatprep.subr.mxu0 0.0
        %290 = vmatpush1.xpose.msra.mxu0 0.0
        %291 = vmatprep.subr.mxu0 0.0
        %292 = vmatpush1.xpose.msra.mxu0 0.0
        %293 = vmatprep.subr.mxu0 0.0
        %294 = vmatpush1.xpose.msra.mxu0 0.0
        %295 = vmatprep.subr.mxu0 0.0
        %296 = vmatpush1.xpose.msra.mxu0 0.0
        %297 = vmatprep.subr.mxu0 0.0
        %298 = vmatpush1.xpose.msra.mxu0 0.0
        %299 = vmatprep.subr.mxu0 0.0
        %300 = vmatpush1.xpose.msra.mxu0 0.0
        %301 = vmatprep.subr.mxu0 0.0
        %302 = vmatpush1.xpose.msra.mxu0 0.0
        %303 = vmatprep.subr.mxu0 0.0
        %304 = vmatpush1.xpose.msra.mxu0 0.0
        %305 = vmatprep.subr.mxu0 0.0
        %306 = vmatpush1.xpose.msra.mxu0 0.0
        %307 = vmatprep.subr.mxu0 0.0
        %308 = vmatpush1.xpose.msra.mxu0 0.0
        %309 = vmatprep.mubr.f32.mxu0 0.0
        %310 = vmatmul.mubr.f32.gmra.mrb[0].mxu0 %v240
        %v311 = vpop.f32.mrb[0].mxu0
        %v312 = vadd.f32 0.0, %v311
        %v313 = vpop.f32.mrb[0].mxu0
        %314 = vdwg.mxu0
        %v315 = vmul.f32 %v312, 0.35355338
        %vm316 = vcmp.eq.f32.partialorder %v237, 0.0
        %v317 = vsel %vm316, 1, 0
        %v318 = vlaneseq
        %v319 = vshrl.u32 %v318, 7
        %v320 = vsub.s32 0, %v319
        %v321 = vrot.slane %v317, %v320
        %vm322 = vcmp.eq.s32.totalorder %v321, 1
        %v323 = vsel %vm322, -1e+10, %v315
        %v324 = vsel %vm238, %v323, -inf
        %325 = vmax.xlane.f32.xlu0 %v324
        %v326 = vpop.xlane.xlu0 %325
        %v327 = vsub.f32 %v323, %v326
        %v328 = vmul.f32 %v327, 1.442695
        %v329 = vpow.pop %v328
        %v330 = vsel %vm238, %v329, 0.0
        %331 = vadd.xlane.f32.xlu0 %v330
        %v332 = vpop.xlane.xlu0 %331
        %v333 = vrcp.pop %v332
        %v334 = vmul.f32 %v329, %v333
        %335 = vst.msk [vmem:[%s219] sm:$0xff] %vm238, %v334
        %336 = vrot.lane.b32.xlu0 %v236, 96
        %v337 = vpop.permute.xlu0 %336
        %v340 = vsel %vm238, %v334, 0
        %342 = vmatprep.subr.mxu0 0.0
        %343 = vmatpush1.msra.mxu0 %v337
        %344 = vmatprep.subr.mxu0 0.0
        %345 = vmatpush1.msra.mxu0 0.0
        %346 = vmatprep.subr.mxu0 0.0
        %347 = vmatpush1.msra.mxu0 0.0
        %348 = vmatprep.subr.mxu0 0.0
        %349 = vmatpush1.msra.mxu0 0.0
        %350 = vmatprep.subr.mxu0 0.0
        %351 = vmatpush1.msra.mxu0 0.0
        %352 = vmatprep.subr.mxu0 0.0
        %353 = vmatpush1.msra.mxu0 0.0
        %354 = vmatprep.subr.mxu0 0.0
        %355 = vmatpush1.msra.mxu0 0.0
        %356 = vmatprep.subr.mxu0 0.0
        %357 = vmatpush1.msra.mxu0 0.0
        %358 = vmatprep.subr.mxu0 0.0
        %359 = vmatpush1.msra.mxu0 0.0
        %360 = vmatprep.subr.mxu0 0.0
        %361 = vmatpush1.msra.mxu0 0.0
        %362 = vmatprep.subr.mxu0 0.0
        %363 = vmatpush1.msra.mxu0 0.0
        %364 = vmatprep.subr.mxu0 0.0
        %365 = vmatpush1.msra.mxu0 0.0
        %366 = vmatprep.subr.mxu0 0.0
        %367 = vmatpush1.msra.mxu0 0.0
        %368 = vmatprep.subr.mxu0 0.0
        %369 = vmatpush1.msra.mxu0 0.0
        %370 = vmatprep.subr.mxu0 0.0
        %371 = vmatpush1.msra.mxu0 0.0
        %372 = vmatprep.subr.mxu0 0.0
        %373 = vmatpush1.msra.mxu0 0.0
        %374 = vmatprep.subr.mxu0 0.0
        %375 = vmatpush1.msra.mxu0 0.0
        %376 = vmatprep.subr.mxu0 0.0
        %377 = vmatpush1.msra.mxu0 0.0
        %378 = vmatprep.subr.mxu0 0.0
        %379 = vmatpush1.msra.mxu0 0.0
        %380 = vmatprep.subr.mxu0 0.0
        %381 = vmatpush1.msra.mxu0 0.0
        %382 = vmatprep.subr.mxu0 0.0
        %383 = vmatpush1.msra.mxu0 0.0
        %384 = vmatprep.subr.mxu0 0.0
        %385 = vmatpush1.msra.mxu0 0.0
        %386 = vmatprep.subr.mxu0 0.0
        %387 = vmatpush1.msra.mxu0 0.0
        %388 = vmatprep.subr.mxu0 0.0
        %389 = vmatpush1.msra.mxu0 0.0
        %390 = vmatprep.subr.mxu0 0.0
        %391 = vmatpush1.msra.mxu0 0.0
        %392 = vmatprep.subr.mxu0 0.0
        %393 = vmatpush1.msra.mxu0 0.0
        %394 = vmatprep.subr.mxu0 0.0
        %395 = vmatpush1.msra.mxu0 0.0
        %396 = vmatprep.subr.mxu0 0.0
        %397 = vmatpush1.msra.mxu0 0.0
        %398 = vmatprep.subr.mxu0 0.0
        %399 = vmatpush1.msra.mxu0 0.0
        %400 = vmatprep.subr.mxu0 0.0
        %401 = vmatpush1.msra.mxu0 0.0
        %402 = vmatprep.subr.mxu0 0.0
        %403 = vmatpush1.msra.mxu0 0.0
        %404 = vmatprep.subr.mxu0 0.0
        %405 = vmatpush1.msra.mxu0 0.0
        %406 = vmatprep.mubr.f32.mxu0 0.0
        %407 = vmatmul.mubr.f32.gmra.mrb[0].mxu0 %v340
        %v408 = vpop.f32.mrb[0].mxu0
        %v409 = vadd.f32 0.0, %v408
        %v410 = vpop.f32.mrb[0].mxu0
        %411 = vdwg.mxu0
        %412 = vrot.lane.b32.xlu0 %v235, 120
        %v413 = vpop.permute.xlu0 %412
        %414 = vrot.lane.b32.xlu0 %v236, 120
        %v415 = vpop.permute.xlu0 %414
        %v416 = vsel %vm238, %v413, 0
        %v418 = vsel %vm238, %v415, 0
        %420 = vmatprep.subr.mxu0 0.0
        %421 = vmatpush1.xpose.msra.mxu0 %v418
        %422 = vmatprep.subr.mxu0 0.0
        %423 = vmatpush1.xpose.msra.mxu0 0.0
        %424 = vmatprep.subr.mxu0 0.0
        %425 = vmatpush1.xpose.msra.mxu0 0.0
        %426 = vmatprep.subr.mxu0 0.0
        %427 = vmatpush1.xpose.msra.mxu0 0.0
        %428 = vmatprep.subr.mxu0 0.0
        %429 = vmatpush1.xpose.msra.mxu0 0.0
        %430 = vmatprep.subr.mxu0 0.0
        %431 = vmatpush1.xpose.msra.mxu0 0.0
        %432 = vmatprep.subr.mxu0 0.0
        %433 = vmatpush1.xpose.msra.mxu0 0.0
        %434 = vmatprep.subr.mxu0 0.0
        %435 = vmatpush1.xpose.msra.mxu0 0.0
        %436 = vmatprep.subr.mxu0 0.0
        %437 = vmatpush1.xpose.msra.mxu0 0.0
        %438 = vmatprep.subr.mxu0 0.0
        %439 = vmatpush1.xpose.msra.mxu0 0.0
        %440 = vmatprep.subr.mxu0 0.0
        %441 = vmatpush1.xpose.msra.mxu0 0.0
        %442 = vmatprep.subr.mxu0 0.0
        %443 = vmatpush1.xpose.msra.mxu0 0.0
        %444 = vmatprep.subr.mxu0 0.0
        %445 = vmatpush1.xpose.msra.mxu0 0.0
        %446 = vmatprep.subr.mxu0 0.0
        %447 = vmatpush1.xpose.msra.mxu0 0.0
        %448 = vmatprep.subr.mxu0 0.0
        %449 = vmatpush1.xpose.msra.mxu0 0.0
        %450 = vmatprep.subr.mxu0 0.0
        %451 = vmatpush1.xpose.msra.mxu0 0.0
        %452 = vmatprep.subr.mxu0 0.0
        %453 = vmatpush1.xpose.msra.mxu0 0.0
        %454 = vmatprep.subr.mxu0 0.0
        %455 = vmatpush1.xpose.msra.mxu0 0.0
        %456 = vmatprep.subr.mxu0 0.0
        %457 = vmatpush1.xpose.msra.mxu0 0.0
        %458 = vmatprep.subr.mxu0 0.0
        %459 = vmatpush1.xpose.msra.mxu0 0.0
        %460 = vmatprep.subr.mxu0 0.0
        %461 = vmatpush1.xpose.msra.mxu0 0.0
        %462 = vmatprep.subr.mxu0 0.0
        %463 = vmatpush1.xpose.msra.mxu0 0.0
        %464 = vmatprep.subr.mxu0 0.0
        %465 = vmatpush1.xpose.msra.mxu0 0.0
        %466 = vmatprep.subr.mxu0 0.0
        %467 = vmatpush1.xpose.msra.mxu0 0.0
        %468 = vmatprep.subr.mxu0 0.0
        %469 = vmatpush1.xpose.msra.mxu0 0.0
        %470 = vmatprep.subr.mxu0 0.0
        %471 = vmatpush1.xpose.msra.mxu0 0.0
        %472 = vmatprep.subr.mxu0 0.0
        %473 = vmatpush1.xpose.msra.mxu0 0.0
        %474 = vmatprep.subr.mxu0 0.0
        %475 = vmatpush1.xpose.msra.mxu0 0.0
        %476 = vmatprep.subr.mxu0 0.0
        %477 = vmatpush1.xpose.msra.mxu0 0.0
        %478 = vmatprep.subr.mxu0 0.0
        %479 = vmatpush1.xpose.msra.mxu0 0.0
        %480 = vmatprep.subr.mxu0 0.0
        %481 = vmatpush1.xpose.msra.mxu0 0.0
        %482 = vmatprep.subr.mxu0 0.0
        %483 = vmatpush1.xpose.msra.mxu0 0.0
        %484 = vmatprep.mubr.f32.mxu0 0.0
        %485 = vmatmul.mubr.f32.gmra.mrb[0].mxu0 %v416
        %v486 = vpop.f32.mrb[0].mxu0
        %v487 = vadd.f32 0.0, %v486
        %v488 = vpop.f32.mrb[0].mxu0
        %489 = vdwg.mxu0
        %v490 = vmul.f32 %v487, 0.35355338
        %v491 = vsel %vm322, -1e+10, %v490
        %v492 = vsel %vm238, %v491, -inf
        %493 = vmax.xlane.f32.xlu0 %v492
        %v494 = vpop.xlane.xlu0 %493
        %v495 = vsub.f32 %v491, %v494
        %v496 = vmul.f32 %v495, 1.442695
        %v497 = vpow.pop %v496
        %v498 = vsel %vm238, %v497, 0.0
        %499 = vadd.xlane.f32.xlu0 %v498
        %v500 = vpop.xlane.xlu0 %499
        %v501 = vrcp.pop %v500
        %v502 = vmul.f32 %v497, %v501
        %s503 = scalar_lea.vmem %s219, 8 [#allocation2]
        %504 = vst.msk [vmem:[%s503] sm:$0xff] %vm238, %v502
        %505 = vrot.lane.b32.xlu0 %v236, 88
        %v506 = vpop.permute.xlu0 %505
        %v509 = vsel %vm238, %v502, 0
        %511 = vmatprep.subr.mxu0 0.0
        %512 = vmatpush1.msra.mxu0 %v506
        %513 = vmatprep.subr.mxu0 0.0
        %514 = vmatpush1.msra.mxu0 0.0
        %515 = vmatprep.subr.mxu0 0.0
        %516 = vmatpush1.msra.mxu0 0.0
        %517 = vmatprep.subr.mxu0 0.0
        %518 = vmatpush1.msra.mxu0 0.0
        %519 = vmatprep.subr.mxu0 0.0
        %520 = vmatpush1.msra.mxu0 0.0
        %521 = vmatprep.subr.mxu0 0.0
        %522 = vmatpush1.msra.mxu0 0.0
        %523 = vmatprep.subr.mxu0 0.0
        %524 = vmatpush1.msra.mxu0 0.0
        %525 = vmatprep.subr.mxu0 0.0
        %526 = vmatpush1.msra.mxu0 0.0
        %527 = vmatprep.subr.mxu0 0.0
        %528 = vmatpush1.msra.mxu0 0.0
        %529 = vmatprep.subr.mxu0 0.0
        %530 = vmatpush1.msra.mxu0 0.0
        %531 = vmatprep.subr.mxu0 0.0
        %532 = vmatpush1.msra.mxu0 0.0
        %533 = vmatprep.subr.mxu0 0.0
        %534 = vmatpush1.msra.mxu0 0.0
        %535 = vmatprep.subr.mxu0 0.0
        %536 = vmatpush1.msra.mxu0 0.0
        %537 = vmatprep.subr.mxu0 0.0
        %538 = vmatpush1.msra.mxu0 0.0
        %539 = vmatprep.subr.mxu0 0.0
        %540 = vmatpush1.msra.mxu0 0.0
        %541 = vmatprep.subr.mxu0 0.0
        %542 = vmatpush1.msra.mxu0 0.0
        %543 = vmatprep.subr.mxu0 0.0
        %544 = vmatpush1.msra.mxu0 0.0
        %545 = vmatprep.subr.mxu0 0.0
        %546 = vmatpush1.msra.mxu0 0.0
        %547 = vmatprep.subr.mxu0 0.0
        %548 = vmatpush1.msra.mxu0 0.0
        %549 = vmatprep.subr.mxu0 0.0
        %550 = vmatpush1.msra.mxu0 0.0
        %551 = vmatprep.subr.mxu0 0.0
        %552 = vmatpush1.msra.mxu0 0.0
        %553 = vmatprep.subr.mxu0 0.0
        %554 = vmatpush1.msra.mxu0 0.0
        %555 = vmatprep.subr.mxu0 0.0
        %556 = vmatpush1.msra.mxu0 0.0
        %557 = vmatprep.subr.mxu0 0.0
        %558 = vmatpush1.msra.mxu0 0.0
        %559 = vmatprep.subr.mxu0 0.0
        %560 = vmatpush1.msra.mxu0 0.0
        %561 = vmatprep.subr.mxu0 0.0
        %562 = vmatpush1.msra.mxu0 0.0
        %563 = vmatprep.subr.mxu0 0.0
        %564 = vmatpush1.msra.mxu0 0.0
        %565 = vmatprep.subr.mxu0 0.0
        %566 = vmatpush1.msra.mxu0 0.0
        %567 = vmatprep.subr.mxu0 0.0
        %568 = vmatpush1.msra.mxu0 0.0
        %569 = vmatprep.subr.mxu0 0.0
        %570 = vmatpush1.msra.mxu0 0.0
        %571 = vmatprep.subr.mxu0 0.0
        %572 = vmatpush1.msra.mxu0 0.0
        %573 = vmatprep.subr.mxu0 0.0
        %574 = vmatpush1.msra.mxu0 0.0
        %575 = vmatprep.mubr.f32.mxu0 0.0
        %576 = vmatmul.mubr.f32.gmra.mrb[0].mxu0 %v509
        %v577 = vpop.f32.mrb[0].mxu0
        %v578 = vadd.f32 0.0, %v577
        %v579 = vpop.f32.mrb[0].mxu0
        %580 = vdwg.mxu0
        %581 = vrot.lane.b32.xlu0 %v235, 112
        %v582 = vpop.permute.xlu0 %581
        %583 = vrot.lane.b32.xlu0 %v236, 112
        %v584 = vpop.permute.xlu0 %583
        %v585 = vsel %vm238, %v582, 0
        %v587 = vsel %vm238, %v584, 0
        %589 = vmatprep.subr.mxu0 0.0
        %590 = vmatpush1.xpose.msra.mxu0 %v587
        %591 = vmatprep.subr.mxu0 0.0
        %592 = vmatpush1.xpose.msra.mxu0 0.0
        %593 = vmatprep.subr.mxu0 0.0
        %594 = vmatpush1.xpose.msra.mxu0 0.0
        %595 = vmatprep.subr.mxu0 0.0
        %596 = vmatpush1.xpose.msra.mxu0 0.0
        %597 = vmatprep.subr.mxu0 0.0
        %598 = vmatpush1.xpose.msra.mxu0 0.0
        %599 = vmatprep.subr.mxu0 0.0
        %600 = vmatpush1.xpose.msra.mxu0 0.0
        %601 = vmatprep.subr.mxu0 0.0
        %602 = vmatpush1.xpose.msra.mxu0 0.0
        %603 = vmatprep.subr.mxu0 0.0
        %604 = vmatpush1.xpose.msra.mxu0 0.0
        %605 = vmatprep.subr.mxu0 0.0
        %606 = vmatpush1.xpose.msra.mxu0 0.0
        %607 = vmatprep.subr.mxu0 0.0
        %608 = vmatpush1.xpose.msra.mxu0 0.0
        %609 = vmatprep.subr.mxu0 0.0
        %610 = vmatpush1.xpose.msra.mxu0 0.0
        %611 = vmatprep.subr.mxu0 0.0
        %612 = vmatpush1.xpose.msra.mxu0 0.0
        %613 = vmatprep.subr.mxu0 0.0
        %614 = vmatpush1.xpose.msra.mxu0 0.0
        %615 = vmatprep.subr.mxu0 0.0
        %616 = vmatpush1.xpose.msra.mxu0 0.0
        %617 = vmatprep.subr.mxu0 0.0
        %618 = vmatpush1.xpose.msra.mxu0 0.0
        %619 = vmatprep.subr.mxu0 0.0
        %620 = vmatpush1.xpose.msra.mxu0 0.0
        %621 = vmatprep.subr.mxu0 0.0
        %622 = vmatpush1.xpose.msra.mxu0 0.0
        %623 = vmatprep.subr.mxu0 0.0
        %624 = vmatpush1.xpose.msra.mxu0 0.0
        %625 = vmatprep.subr.mxu0 0.0
        %626 = vmatpush1.xpose.msra.mxu0 0.0
        %627 = vmatprep.subr.mxu0 0.0
        %628 = vmatpush1.xpose.msra.mxu0 0.0
        %629 = vmatprep.subr.mxu0 0.0
        %630 = vmatpush1.xpose.msra.mxu0 0.0
        %631 = vmatprep.subr.mxu0 0.0
        %632 = vmatpush1.xpose.msra.mxu0 0.0
        %633 = vmatprep.subr.mxu0 0.0
        %634 = vmatpush1.xpose.msra.mxu0 0.0
        %635 = vmatprep.subr.mxu0 0.0
        %636 = vmatpush1.xpose.msra.mxu0 0.0
        %637 = vmatprep.subr.mxu0 0.0
        %638 = vmatpush1.xpose.msra.mxu0 0.0
        %639 = vmatprep.subr.mxu0 0.0
        %640 = vmatpush1.xpose.msra.mxu0 0.0
        %641 = vmatprep.subr.mxu0 0.0
        %642 = vmatpush1.xpose.msra.mxu0 0.0
        %643 = vmatprep.subr.mxu0 0.0
        %644 = vmatpush1.xpose.msra.mxu0 0.0
        %645 = vmatprep.subr.mxu0 0.0
        %646 = vmatpush1.xpose.msra.mxu0 0.0
        %647 = vmatprep.subr.mxu0 0.0
        %648 = vmatpush1.xpose.msra.mxu0 0.0
        %649 = vmatprep.subr.mxu0 0.0
        %650 = vmatpush1.xpose.msra.mxu0 0.0
        %651 = vmatprep.subr.mxu0 0.0
        %652 = vmatpush1.xpose.msra.mxu0 0.0
        %653 = vmatprep.mubr.f32.mxu0 0.0
        %654 = vmatmul.mubr.f32.gmra.mrb[0].mxu0 %v585
        %v655 = vpop.f32.mrb[0].mxu0
        %v656 = vadd.f32 0.0, %v655
        %v657 = vpop.f32.mrb[0].mxu0
        %658 = vdwg.mxu0
        %v659 = vmul.f32 %v656, 0.35355338
        %v660 = vsel %vm322, -1e+10, %v659
        %v661 = vsel %vm238, %v660, -inf
        %662 = vmax.xlane.f32.xlu0 %v661
        %v663 = vpop.xlane.xlu0 %662
        %v664 = vsub.f32 %v660, %v663
        %v665 = vmul.f32 %v664, 1.442695
        %v666 = vpow.pop %v665
        %v667 = vsel %vm238, %v666, 0.0
        %668 = vadd.xlane.f32.xlu0 %v667
        %v669 = vpop.xlane.xlu0 %668
        %v670 = vrcp.pop %v669
        %v671 = vmul.f32 %v666, %v670
        %s672 = scalar_lea.vmem %s219, 16 [#allocation2]
        %673 = vst.msk [vmem:[%s672] sm:$0xff] %vm238, %v671
        %674 = vrot.lane.b32.xlu0 %v236, 80
        %v675 = vpop.permute.xlu0 %674
        %v678 = vsel %vm238, %v671, 0
        %680 = vmatprep.subr.mxu0 0.0
        %681 = vmatpush1.msra.mxu0 %v675
        %682 = vmatprep.subr.mxu0 0.0
        %683 = vmatpush1.msra.mxu0 0.0
        %684 = vmatprep.subr.mxu0 0.0
        %685 = vmatpush1.msra.mxu0 0.0
        %686 = vmatprep.subr.mxu0 0.0
        %687 = vmatpush1.msra.mxu0 0.0
        %688 = vmatprep.subr.mxu0 0.0
        %689 = vmatpush1.msra.mxu0 0.0
        %690 = vmatprep.subr.mxu0 0.0
        %691 = vmatpush1.msra.mxu0 0.0
        %692 = vmatprep.subr.mxu0 0.0
        %693 = vmatpush1.msra.mxu0 0.0
        %694 = vmatprep.subr.mxu0 0.0
        %695 = vmatpush1.msra.mxu0 0.0
        %696 = vmatprep.subr.mxu0 0.0
        %697 = vmatpush1.msra.mxu0 0.0
        %698 = vmatprep.subr.mxu0 0.0
        %699 = vmatpush1.msra.mxu0 0.0
        %700 = vmatprep.subr.mxu0 0.0
        %701 = vmatpush1.msra.mxu0 0.0
        %702 = vmatprep.subr.mxu0 0.0
        %703 = vmatpush1.msra.mxu0 0.0
        %704 = vmatprep.subr.mxu0 0.0
        %705 = vmatpush1.msra.mxu0 0.0
        %706 = vmatprep.subr.mxu0 0.0
        %707 = vmatpush1.msra.mxu0 0.0
        %708 = vmatprep.subr.mxu0 0.0
        %709 = vmatpush1.msra.mxu0 0.0
        %710 = vmatprep.subr.mxu0 0.0
        %711 = vmatpush1.msra.mxu0 0.0
        %712 = vmatprep.subr.mxu0 0.0
        %713 = vmatpush1.msra.mxu0 0.0
        %714 = vmatprep.subr.mxu0 0.0
        %715 = vmatpush1.msra.mxu0 0.0
        %716 = vmatprep.subr.mxu0 0.0
        %717 = vmatpush1.msra.mxu0 0.0
        %718 = vmatprep.subr.mxu0 0.0
        %719 = vmatpush1.msra.mxu0 0.0
        %720 = vmatprep.subr.mxu0 0.0
        %721 = vmatpush1.msra.mxu0 0.0
        %722 = vmatprep.subr.mxu0 0.0
        %723 = vmatpush1.msra.mxu0 0.0
        %724 = vmatprep.subr.mxu0 0.0
        %725 = vmatpush1.msra.mxu0 0.0
        %726 = vmatprep.subr.mxu0 0.0
        %727 = vmatpush1.msra.mxu0 0.0
        %728 = vmatprep.subr.mxu0 0.0
        %729 = vmatpush1.msra.mxu0 0.0
        %730 = vmatprep.subr.mxu0 0.0
        %731 = vmatpush1.msra.mxu0 0.0
        %732 = vmatprep.subr.mxu0 0.0
        %733 = vmatpush1.msra.mxu0 0.0
        %734 = vmatprep.subr.mxu0 0.0
        %735 = vmatpush1.msra.mxu0 0.0
        %736 = vmatprep.subr.mxu0 0.0
        %737 = vmatpush1.msra.mxu0 0.0
        %738 = vmatprep.subr.mxu0 0.0
        %739 = vmatpush1.msra.mxu0 0.0
        %740 = vmatprep.subr.mxu0 0.0
        %741 = vmatpush1.msra.mxu0 0.0
        %742 = vmatprep.subr.mxu0 0.0
        %743 = vmatpush1.msra.mxu0 0.0
        %744 = vmatprep.mubr.f32.mxu0 0.0
        %745 = vmatmul.mubr.f32.gmra.mrb[0].mxu0 %v678
        %v746 = vpop.f32.mrb[0].mxu0
        %v747 = vadd.f32 0.0, %v746
        %v748 = vpop.f32.mrb[0].mxu0
        %749 = vdwg.mxu0
        %750 = vrot.lane.b32.xlu0 %v235, 104
        %v751 = vpop.permute.xlu0 %750
        %752 = vrot.lane.b32.xlu0 %v236, 104
        %v753 = vpop.permute.xlu0 %752
        %v754 = vsel %vm238, %v751, 0
        %v756 = vsel %vm238, %v753, 0
        %758 = vmatprep.subr.mxu0 0.0
        %759 = vmatpush1.xpose.msra.mxu0 %v756
        %760 = vmatprep.subr.mxu0 0.0
        %761 = vmatpush1.xpose.msra.mxu0 0.0
        %762 = vmatprep.subr.mxu0 0.0
        %763 = vmatpush1.xpose.msra.mxu0 0.0
        %764 = vmatprep.subr.mxu0 0.0
        %765 = vmatpush1.xpose.msra.mxu0 0.0
        %766 = vmatprep.subr.mxu0 0.0
        %767 = vmatpush1.xpose.msra.mxu0 0.0
        %768 = vmatprep.subr.mxu0 0.0
        %769 = vmatpush1.xpose.msra.mxu0 0.0
        %770 = vmatprep.subr.mxu0 0.0
        %771 = vmatpush1.xpose.msra.mxu0 0.0
        %772 = vmatprep.subr.mxu0 0.0
        %773 = vmatpush1.xpose.msra.mxu0 0.0
        %774 = vmatprep.subr.mxu0 0.0
        %775 = vmatpush1.xpose.msra.mxu0 0.0
        %776 = vmatprep.subr.mxu0 0.0
        %777 = vmatpush1.xpose.msra.mxu0 0.0
        %778 = vmatprep.subr.mxu0 0.0
        %779 = vmatpush1.xpose.msra.mxu0 0.0
        %780 = vmatprep.subr.mxu0 0.0
        %781 = vmatpush1.xpose.msra.mxu0 0.0
        %782 = vmatprep.subr.mxu0 0.0
        %783 = vmatpush1.xpose.msra.mxu0 0.0
        %784 = vmatprep.subr.mxu0 0.0
        %785 = vmatpush1.xpose.msra.mxu0 0.0
        %786 = vmatprep.subr.mxu0 0.0
        %787 = vmatpush1.xpose.msra.mxu0 0.0
        %788 = vmatprep.subr.mxu0 0.0
        %789 = vmatpush1.xpose.msra.mxu0 0.0
        %790 = vmatprep.subr.mxu0 0.0
        %791 = vmatpush1.xpose.msra.mxu0 0.0
        %792 = vmatprep.subr.mxu0 0.0
        %793 = vmatpush1.xpose.msra.mxu0 0.0
        %794 = vmatprep.subr.mxu0 0.0
        %795 = vmatpush1.xpose.msra.mxu0 0.0
        %796 = vmatprep.subr.mxu0 0.0
        %797 = vmatpush1.xpose.msra.mxu0 0.0
        %798 = vmatprep.subr.mxu0 0.0
        %799 = vmatpush1.xpose.msra.mxu0 0.0
        %800 = vmatprep.subr.mxu0 0.0
        %801 = vmatpush1.xpose.msra.mxu0 0.0
        %802 = vmatprep.subr.mxu0 0.0
        %803 = vmatpush1.xpose.msra.mxu0 0.0
        %804 = vmatprep.subr.mxu0 0.0
        %805 = vmatpush1.xpose.msra.mxu0 0.0
        %806 = vmatprep.subr.mxu0 0.0
        %807 = vmatpush1.xpose.msra.mxu0 0.0
        %808 = vmatprep.subr.mxu0 0.0
        %809 = vmatpush1.xpose.msra.mxu0 0.0
        %810 = vmatprep.subr.mxu0 0.0
        %811 = vmatpush1.xpose.msra.mxu0 0.0
        %812 = vmatprep.subr.mxu0 0.0
        %813 = vmatpush1.xpose.msra.mxu0 0.0
        %814 = vmatprep.subr.mxu0 0.0
        %815 = vmatpush1.xpose.msra.mxu0 0.0
        %816 = vmatprep.subr.mxu0 0.0
        %817 = vmatpush1.xpose.msra.mxu0 0.0
        %818 = vmatprep.subr.mxu0 0.0
        %819 = vmatpush1.xpose.msra.mxu0 0.0
        %820 = vmatprep.subr.mxu0 0.0
        %821 = vmatpush1.xpose.msra.mxu0 0.0
        %822 = vmatprep.mubr.f32.mxu0 0.0
        %823 = vmatmul.mubr.f32.gmra.mrb[0].mxu0 %v754
        %v824 = vpop.f32.mrb[0].mxu0
        %v825 = vadd.f32 0.0, %v824
        %v826 = vpop.f32.mrb[0].mxu0
        %827 = vdwg.mxu0
        %v828 = vmul.f32 %v825, 0.35355338
        %v829 = vsel %vm322, -1e+10, %v828
        %v830 = vsel %vm238, %v829, -inf
        %831 = vmax.xlane.f32.xlu0 %v830
        %v832 = vpop.xlane.xlu0 %831
        %v833 = vsub.f32 %v829, %v832
        %v834 = vmul.f32 %v833, 1.442695
        %v835 = vpow.pop %v834
        %v836 = vsel %vm238, %v835, 0.0
        %837 = vadd.xlane.f32.xlu0 %v836
        %v838 = vpop.xlane.xlu0 %837
        %v839 = vrcp.pop %v838
        %v840 = vmul.f32 %v835, %v839
        %s841 = scalar_lea.vmem %s219, 24 [#allocation2]
        %842 = vst.msk [vmem:[%s841] sm:$0xff] %vm238, %v840
        %843 = vrot.lane.b32.xlu0 %v236, 72
        %v844 = vpop.permute.xlu0 %843
        %v847 = vsel %vm238, %v840, 0
        %849 = vmatprep.subr.mxu0 0.0
        %850 = vmatpush1.msra.mxu0 %v844
        %851 = vmatprep.subr.mxu0 0.0
        %852 = vmatpush1.msra.mxu0 0.0
        %853 = vmatprep.subr.mxu0 0.0
        %854 = vmatpush1.msra.mxu0 0.0
        %855 = vmatprep.subr.mxu0 0.0
        %856 = vmatpush1.msra.mxu0 0.0
        %857 = vmatprep.subr.mxu0 0.0
        %858 = vmatpush1.msra.mxu0 0.0
        %859 = vmatprep.subr.mxu0 0.0
        %860 = vmatpush1.msra.mxu0 0.0
        %861 = vmatprep.subr.mxu0 0.0
        %862 = vmatpush1.msra.mxu0 0.0
        %863 = vmatprep.subr.mxu0 0.0
        %864 = vmatpush1.msra.mxu0 0.0
        %865 = vmatprep.subr.mxu0 0.0
        %866 = vmatpush1.msra.mxu0 0.0
        %867 = vmatprep.subr.mxu0 0.0
        %868 = vmatpush1.msra.mxu0 0.0
        %869 = vmatprep.subr.mxu0 0.0
        %870 = vmatpush1.msra.mxu0 0.0
        %871 = vmatprep.subr.mxu0 0.0
        %872 = vmatpush1.msra.mxu0 0.0
        %873 = vmatprep.subr.mxu0 0.0
        %874 = vmatpush1.msra.mxu0 0.0
        %875 = vmatprep.subr.mxu0 0.0
        %876 = vmatpush1.msra.mxu0 0.0
        %877 = vmatprep.subr.mxu0 0.0
        %878 = vmatpush1.msra.mxu0 0.0
        %879 = vmatprep.subr.mxu0 0.0
        %880 = vmatpush1.msra.mxu0 0.0
        %881 = vmatprep.subr.mxu0 0.0
        %882 = vmatpush1.msra.mxu0 0.0
        %883 = vmatprep.subr.mxu0 0.0
        %884 = vmatpush1.msra.mxu0 0.0
        %885 = vmatprep.subr.mxu0 0.0
        %886 = vmatpush1.msra.mxu0 0.0
        %887 = vmatprep.subr.mxu0 0.0
        %888 = vmatpush1.msra.mxu0 0.0
        %889 = vmatprep.subr.mxu0 0.0
        %890 = vmatpush1.msra.mxu0 0.0
        %891 = vmatprep.subr.mxu0 0.0
        %892 = vmatpush1.msra.mxu0 0.0
        %893 = vmatprep.subr.mxu0 0.0
        %894 = vmatpush1.msra.mxu0 0.0
        %895 = vmatprep.subr.mxu0 0.0
        %896 = vmatpush1.msra.mxu0 0.0
        %897 = vmatprep.subr.mxu0 0.0
        %898 = vmatpush1.msra.mxu0 0.0
        %899 = vmatprep.subr.mxu0 0.0
        %900 = vmatpush1.msra.mxu0 0.0
        %901 = vmatprep.subr.mxu0 0.0
        %902 = vmatpush1.msra.mxu0 0.0
        %903 = vmatprep.subr.mxu0 0.0
        %904 = vmatpush1.msra.mxu0 0.0
        %905 = vmatprep.subr.mxu0 0.0
        %906 = vmatpush1.msra.mxu0 0.0
        %907 = vmatprep.subr.mxu0 0.0
        %908 = vmatpush1.msra.mxu0 0.0
        %909 = vmatprep.subr.mxu0 0.0
        %910 = vmatpush1.msra.mxu0 0.0
        %911 = vmatprep.subr.mxu0 0.0
        %912 = vmatpush1.msra.mxu0 0.0
        %913 = vmatprep.mubr.f32.mxu0 0.0
        %914 = vmatmul.mubr.f32.gmra.mrb[0].mxu0 %v847
        %v915 = vpop.f32.mrb[0].mxu0
        %v916 = vadd.f32 0.0, %v915
        %v917 = vpop.f32.mrb[0].mxu0
        %918 = vdwg.mxu0
        %920 = vrot.lane.b32.xlu0 %v578, 8
        %v921 = vpop.permute.xlu0 %920
        %924 = vrot.lane.b32.xlu0 %v747, 16
        %v925 = vpop.permute.xlu0 %924
        %928 = vrot.lane.b32.xlu0 %v916, 24
        %v929 = vpop.permute.xlu0 %928
        %v931 = vsel %vm238, %v409, %v921
        %vm932 = vcmask 130048
        %v933 = vsel %vm932, %v931, %v925
        %vm934 = vcmask 195584
        %v935 = vsel %vm934, %v933, %v929
        %vm936 = vcmask 261120
        %937 = vst.msk [vmem:[%s234] sm:$0xff] %vm936, %v935
        %p938 = scmp.lt.s32.totalorder %s19, 1
        %s939 = scalar_select %p938, %s19, 1
        %s940 = smul.addr %s939, 8
        %s941 = scalar_lea.vmem %s3, %s940
        %s942 = sand.u32 %s131, 1
        %s943 = scalar_lea.sflag [#allocation3], %s942
        %s944 = sand.u32 %s131, 1
        %s945 = smul.addr %s944, 32
        %s946 = scalar_lea.vmem [#allocation2], %s945
        // Predicated region
        $region33: #{decoder_layer.13} parent=31 // pred_check
          %p947 = pneg %p115
        $region34: #{decoder_layer.13} parent=31 // pred_check_branch
          %949 = sbr.rel (%p947) target = $region36
        $region35: #{decoder_layer.13} parent=31 // pred_region
          _
        $region36: #{decoder_layer.13} parent=31 // pred_fallthru
          _
        // Predicated region
        $region37: #{decoder_layer.13} parent=31 // pred_check
          %p950 = pneg %p141
        $region38: #{decoder_layer.13} parent=31 // pred_check_branch
          %952 = sbr.rel (%p950) target = $region40
        $region39: #{decoder_layer.13} parent=31 // pred_region
          %s954 = ssub.s32 512, 512
          %955 = vsyncadd %s943, %s954
          %s956 = smul.addr %s19, 4
          %s957 = smul.addr %s956, 128
          %s958 = scalar_lea.hbm %s4, %s957
          %s959 = sshll.u32 %s946, 4
          %s960 = int_to_ptr.vmem [resolvable:$true] %s959
          %965 = dma.vmem_to_hbm [thread:$0]  %s960, 512, %s958, %s943, 128, 128, 8
        $region40: #{decoder_layer.13} parent=31 // pred_fallthru
          _
      $region32: #{decoder_layer.13} parent=5 // pred_fallthru
        _
      %p966 = scmp.le.s32.totalorder 2, %s14
      // Predicated region
      $region41: #{decoder_layer.13} parent=5 // pred_check
        %p967 = pneg %p966
      $region42: #{decoder_layer.13} parent=5 // pred_check_branch
        %969 = sbr.rel (%p967) target = $region44
      $region43: #{decoder_layer.13} parent=5 // pred_region
        %s970 = ssub.s32 %s14, 2
        // Predicated region
        $region45: #{decoder_layer.13} parent=43 // pred_check
          %p971 = pneg %p121
        $region46: #{decoder_layer.13} parent=43 // pred_check_branch
          %973 = sbr.rel (%p971) target = $region48
        $region47: #{decoder_layer.13} parent=43 // pred_region
          %p974 = scmp.lt.s32.totalorder %s20, 1
          %s975 = scalar_select %p974, %s20, 1
          %s976 = smul.addr %s975, 8
          %s977 = scalar_lea.vmem %s3, %s976
        $region48: #{decoder_layer.13} parent=43 // pred_fallthru
          _
        // Predicated region
        $region49: #{decoder_layer.13} parent=43 // pred_check
          %p978 = pneg %p147
        $region50: #{decoder_layer.13} parent=43 // pred_check_branch
          %980 = sbr.rel (%p978) target = $region52
        $region51: #{decoder_layer.13} parent=43 // pred_region
          %s981 = sand.u32 %s132, 1
          %s982 = scalar_lea.sflag [#allocation3], %s981
          %s983 = sand.u32 %s132, 1
          %s984 = smul.addr %s983, 32
          %s985 = scalar_lea.vmem [#allocation2], %s984
          %986 = dma.done %s982, 512
        $region52: #{decoder_layer.13} parent=43 // pred_fallthru
          _
      $region44: #{decoder_layer.13} parent=5 // pred_fallthru
        _
    $region6: #{decoder_layer.13} parent=1 // loop_footer
      %s18 = sadd.s32 1, %s14
    $region7: #{decoder_layer.13} parent=1 // loop_footer_branch
      %13 = sbr.rel target = $region3
    $region8: #{decoder_layer.13} parent=1 // loop_exit
      _
    %987 = vsyncpa [#allocation3], 1
    %s988 = scalar_lea.sflag [#allocation3], 1
    %989 = vsyncpa %s988, 1

</llo_original>
